<compile_context>
chip_gen: v6e
topology: v6e:2x2x1
jax: 0.10.0
libtpu: 0.0.40
codegen_flags: <defaults>
</compile_context>

<pallas_src>
import functools

import jax
import jax.numpy as jnp
from jax import lax
from jax.experimental import pallas as pl
from jax.experimental.pallas import tpu as pltpu

_VMEM_LIMIT = 48 * 1024 * 1024   # below physical VMEM on all of v5e/v6e (128 MiB) and v7x (64 MiB)


def _compiler_params(semantics):
    return pltpu.CompilerParams(dimension_semantics=semantics,
                                vmem_limit_bytes=_VMEM_LIMIT)


# ----------------------------------------------------------------------------
# Row-tiled Linear (+ optional ReLU):  y = x @ w + b     (bf16 MXU, f32 accum)
# ----------------------------------------------------------------------------
def _linear_kernel(x_ref, w_ref, b_ref, o_ref, *, relu):
    y = jnp.dot(x_ref[...].astype(jnp.bfloat16), w_ref[...],
                preferred_element_type=jnp.float32) + b_ref[...]
    if relu:
        y = jnp.maximum(y, 0.0)
    o_ref[...] = y


def linear(x, w, b, *, relu=False, block_rows=512):
    m, cin = x.shape
    n = w.shape[1]
    bm = min(block_rows, m)
    return pl.pallas_call(
        functools.partial(_linear_kernel, relu=relu),
        grid=(pl.cdiv(m, bm),),
        in_specs=[
            pl.BlockSpec((bm, cin), lambda i: (i, 0)),
            pl.BlockSpec((cin, n), lambda i: (0, 0)),
            pl.BlockSpec((1, n), lambda i: (0, 0)),
        ],
        out_specs=pl.BlockSpec((bm, n), lambda i: (i, 0)),
        out_shape=jax.ShapeDtypeStruct((m, n), jnp.float32),
        compiler_params=_compiler_params(("parallel",)),
    )(x, w, b)


# ----------------------------------------------------------------------------
# Head kernel: BN3 affine (no ReLU) -> fc1 -> ReLU -> fc2, row-tiled.
# ----------------------------------------------------------------------------
def _head_kernel(y_ref, scale_ref, shift_ref, w1_ref, b1_ref, w2_ref, b2_ref, o_ref):
    v = y_ref[...] * scale_ref[...] + shift_ref[...]              # BN3 affine (training stats)
    h = jnp.dot(v.astype(jnp.bfloat16), w1_ref[...],
                preferred_element_type=jnp.float32) + b1_ref[...]
    h = jnp.maximum(h, 0.0)                                       # fc1 + ReLU (stays in VMEM)
    o_ref[...] = jnp.dot(h.astype(jnp.bfloat16), w2_ref[...],
                         preferred_element_type=jnp.float32) + b2_ref[...]


def head(y, scale, shift, w1, b1, w2, b2, *, block_rows=512):
    m, c = y.shape
    hdim = w1.shape[1]
    n = w2.shape[1]
    bm = min(block_rows, m)
    return pl.pallas_call(
        _head_kernel,
        grid=(pl.cdiv(m, bm),),
        in_specs=[
            pl.BlockSpec((bm, c), lambda i: (i, 0)),
            pl.BlockSpec((1, c), lambda i: (0, 0)),
            pl.BlockSpec((1, c), lambda i: (0, 0)),
            pl.BlockSpec((c, hdim), lambda i: (0, 0)),
            pl.BlockSpec((1, hdim), lambda i: (0, 0)),
            pl.BlockSpec((hdim, n), lambda i: (0, 0)),
            pl.BlockSpec((1, n), lambda i: (0, 0)),
        ],
        out_specs=pl.BlockSpec((bm, n), lambda i: (i, 0)),
        out_shape=jax.ShapeDtypeStruct((m, n), jnp.float32),
        compiler_params=_compiler_params(("parallel",)),
    )(y, scale, shift, w1, b1, w2, b2)


# ----------------------------------------------------------------------------
# Fused low-rank block kernel (one grid step per batch element):
#   prologue BN affine (+ReLU)  ->  phi/psi DenseNets  ->  low-rank contraction
#   ->  pointwise w-linear  ->  residual add  ->  partial BN stats.
# ----------------------------------------------------------------------------
def _block_kernel(v_ref, scale_ref, shift_ref,
                  phi1w_ref, phi1b_ref, phi2w_ref, phi2b_ref,
                  psi1w_ref, psi1b_ref, psi2w_ref, psi2b_ref,
                  ww_ref, wb_ref, mask_ref, sel_ref,
                  y_ref, stats_ref, *, prologue_relu):
    # --- fused BatchNorm affine (+ReLU) from the previous block (identity for block 0)
    v = v_ref[...] * scale_ref[...] + shift_ref[...]               # (N, W) f32
    if prologue_relu:
        v = jnp.maximum(v, 0.0)
    v16 = v.astype(jnp.bfloat16)

    # --- phi / psi DenseNets (Linear -> ReLU -> Linear); bf16 operands, f32 accumulation
    ph = jnp.maximum(
        jnp.dot(v16, phi1w_ref[...], preferred_element_type=jnp.float32)
        + phi1b_ref[...], 0.0)
    phi_e = jnp.dot(ph.astype(jnp.bfloat16), phi2w_ref[...],
                    preferred_element_type=jnp.float32) + phi2b_ref[...]   # (N, OIR)
    ps = jnp.maximum(
        jnp.dot(v16, psi1w_ref[...], preferred_element_type=jnp.float32)
        + psi1b_ref[...], 0.0)
    psi_e = jnp.dot(ps.astype(jnp.bfloat16), psi2w_ref[...],
                    preferred_element_type=jnp.float32) + psi2b_ref[...]   # (N, OIR)

    # --- low-rank contraction: out[m,o] = sum_{n,i,r} psi[n,o,i,r] v[n,i] phi[m,o,i,r]
    # A_full[i', oir] = sum_n v[n,i'] psi_e[n,oir]; keep i' == i(oir) via a constant 0/1 mask.
    a_full = lax.dot_general(v16, psi_e.astype(jnp.bfloat16),
                             dimension_numbers=(((0,), (0,)), ((), ())),
                             preferred_element_type=jnp.float32)           # (W, OIR)
    a = jnp.sum(a_full * mask_ref[...], axis=0, keepdims=True)             # (1, OIR)

    # group the I*R columns per output channel with a constant 0/1 selector matrix
    p = (phi_e * a).astype(jnp.bfloat16)                                   # (N, OIR)
    x1 = jnp.dot(p, sel_ref[...], preferred_element_type=jnp.float32)      # (N, W)

    # --- pointwise path + residual add
    x2 = jnp.dot(v16, ww_ref[...], preferred_element_type=jnp.float32) + wb_ref[...]
    y = x1 + x2
    y_ref[...] = y

    # --- per-batch partial BatchNorm statistics (sum, sum of squares)
    stats_ref[0:1, :] = jnp.sum(y, axis=0, keepdims=True)
    stats_ref[1:2, :] = jnp.sum(y * y, axis=0, keepdims=True)


def lowrank_block(v, scale, shift, blk, mask, sel, *, prologue_relu):
    B, N, W = v.shape
    KW = blk["phi1_w"].shape[1]
    OIR = blk["phi2_w"].shape[1]

    flops = 2 * B * N * (2 * W * KW + 2 * KW * OIR + 2 * W * OIR + W * W)
    bytes_accessed = (4 * B * N * W * 2                                    # v in, y out (f32)
                      + 2 * (2 * (W * KW + KW * OIR) + W * W + OIR * W)    # bf16 weights + selector
                      + 4 * (2 * KW + 2 * OIR + 2 * W + W * OIR + 2 * W * B))
    cost = pl.CostEstimate(flops=int(flops), transcendentals=0,
                           bytes_accessed=int(bytes_accessed))

    def full(shape):
        return pl.BlockSpec(shape, lambda b: (0,) * len(shape))

    y, stats = pl.pallas_call(
        functools.partial(_block_kernel, prologue_relu=prologue_relu),
        grid=(B,),
        in_specs=[
            pl.BlockSpec((None, N, W), lambda b: (b, 0, 0)),   # v (one batch element)
            full((1, W)), full((1, W)),                        # BN scale / shift
            full((W, KW)), full((1, KW)),                      # phi layer 1
            full((KW, OIR)), full((1, OIR)),                   # phi layer 2
            full((W, KW)), full((1, KW)),                      # psi layer 1
            full((KW, OIR)), full((1, OIR)),                   # psi layer 2
            full((W, W)), full((1, W)),                        # pointwise w
            full((W, OIR)),                                    # diagonal mask (f32, constant)
            full((OIR, W)),                                    # output-channel selector (bf16, constant)
        ],
        out_specs=[
            pl.BlockSpec((None, N, W), lambda b: (b, 0, 0)),
            pl.BlockSpec((None, 2, W), lambda b: (b, 0, 0)),
        ],
        out_shape=[
            jax.ShapeDtypeStruct((B, N, W), jnp.float32),
            jax.ShapeDtypeStruct((B, 2, W), jnp.float32),
        ],
        compiler_params=_compiler_params(("parallel",)),
        cost_estimate=cost,
    )(v, scale, shift,
      blk["phi1_w"], blk["phi1_b"], blk["phi2_w"], blk["phi2_b"],
      blk["psi1_w"], blk["psi1_b"], blk["psi2_w"], blk["psi2_b"],
      blk["w_w"], blk["w_b"], mask, sel)
    return y, stats


# ----------------------------------------------------------------------------
# BatchNorm finalize (tiny cross-batch reduction done in plain JAX):
# fold batch-stat normalization + gamma/beta into a per-feature affine.
# ----------------------------------------------------------------------------
def bn_scale_shift(stats, gamma, beta, count, eps=1e-5):
    total = jnp.sum(stats, axis=0)              # (2, W): [sum, sum_sq] over all B*N rows
    mean = total[0] / count
    var = total[1] / count - mean * mean        # biased variance (PyTorch BN training mode)
    scale = gamma * lax.rsqrt(var + eps)
    shift = beta - mean * scale
    return scale.reshape(1, -1), shift.reshape(1, -1)


# ----------------------------------------------------------------------------
# Constant 0/1 matrices for the low-rank contraction (hoisted out of the kernel).
# Flat column index of phi/psi outputs is oir = o*I*R + i*R + r.
# ----------------------------------------------------------------------------
def lowrank_constants(width, rank):
    oir = width * width * rank
    col = jnp.arange(oir)
    i_of_col = (col // rank) % width
    o_of_col = col // (width * rank)
    mask = (jnp.arange(width)[:, None] == i_of_col[None, :]).astype(jnp.float32)   # (W, OIR)
    sel = (o_of_col[:, None] == jnp.arange(width)[None, :]).astype(jnp.bfloat16)   # (OIR, W)
    return mask, sel


# ----------------------------------------------------------------------------
# Parameter init (deterministic, PyTorch nn.Linear default: U(+-1/sqrt(fan_in)))
# Weights are stored in bf16 (MXU operands); biases stay f32.
# ----------------------------------------------------------------------------
def init_linear_params(key, fan_in, fan_out):
    kw, kb = jax.random.split(key)
    bound = 1.0 / float(fan_in) ** 0.5
    w = jax.random.uniform(kw, (fan_in, fan_out), jnp.float32, -bound, bound)
    b = jax.random.uniform(kb, (1, fan_out), jnp.float32, -bound, bound)
    return w.astype(jnp.bfloat16), b


def init_mynet(key, width, ker_width, rank):
    oir = width * width * rank
    keys = iter(jax.random.split(key, 64))
    params = {"fc0": init_linear_params(next(keys), 12, width),
              "fc1": init_linear_params(next(keys), width, 128),
              "fc2": init_linear_params(next(keys), 128, 1)}
    for l in range(4):
        p1w, p1b = init_linear_params(next(keys), width, ker_width)
        p2w, p2b = init_linear_params(next(keys), ker_width, oir)
        s1w, s1b = init_linear_params(next(keys), width, ker_width)
        s2w, s2b = init_linear_params(next(keys), ker_width, oir)
        ww, wb = init_linear_params(next(keys), width, width)
        params[f"block{l}"] = {
            "phi1_w": p1w, "phi1_b": p1b, "phi2_w": p2w, "phi2_b": p2b,
            "psi1_w": s1w, "psi1_b": s1b, "psi2_w": s2w, "psi2_b": s2b,
            "w_w": ww, "w_b": wb,
            "bn_g": jnp.ones((width,), jnp.float32),
            "bn_b": jnp.zeros((width,), jnp.float32),
        }
    mask, sel = lowrank_constants(width, rank)
    params["lowrank_mask"] = mask
    params["lowrank_sel"] = sel
    return params


# ----------------------------------------------------------------------------
# MyNet forward
# ----------------------------------------------------------------------------
def mynet_forward(params, x, *, s, width, rank):
    del rank  # encoded in the precomputed mask/sel constants
    B = x.shape[0]
    N = s * s
    W = width
    mask = params["lowrank_mask"]
    sel = params["lowrank_sel"]

    # fc0 (row-tiled linear)
    h = linear(x.reshape(B * N, x.shape[-1]), *params["fc0"])      # (B*N, W)
    h = h.reshape(B, N, W)

    # four fused low-rank blocks; BN of block l is fused into the prologue of block l+1
    # TODO(synk): for realistic FNO sizes (s=64, width=32) add an N-tile axis inside
    #             the block kernel so per-batch (N, OIR) intermediates fit v7x's 64 MiB VMEM.
    scale = jnp.ones((1, W), jnp.float32)
    shift = jnp.zeros((1, W), jnp.float32)
    prologue_relu = False
    count = float(B * N)
    for l in range(4):
        blk = params[f"block{l}"]
        h, stats = lowrank_block(h, scale, shift, blk, mask, sel,
                                 prologue_relu=prologue_relu)
        scale, shift = bn_scale_shift(stats, blk["bn_g"], blk["bn_b"], count)
        prologue_relu = True

    # head: BN3 affine (no ReLU) -> fc1 -> ReLU -> fc2, fused
    out = head(h.reshape(B * N, W), scale, shift,
               *params["fc1"], *params["fc2"])                     # (B*N, 1)
    return out.reshape(B, s, s, 1)


if __name__ == "__main__":
    # Small, module-consistent shapes: batch=2, grid s=8 (N=64), width=4,
    # ker_width=32, rank=2, 12 input features.
    S, WIDTH, KER_WIDTH, RANK, BATCH = 8, 4, 32, 2, 2

    key = jax.random.PRNGKey(0)
    k_params, k_x = jax.random.split(key)
    params = init_mynet(k_params, WIDTH, KER_WIDTH, RANK)
    x = jax.random.normal(k_x, (BATCH, S, S, 12), jnp.float32)

    fwd = jax.jit(functools.partial(mynet_forward, s=S, width=WIDTH, rank=RANK))
    out = jax.block_until_ready(fwd(params, x))
    assert out.shape == (BATCH, S, S, 1), out.shape
    print("KERNEL_OK")
</pallas_src>

<mosaic_0001>
module attributes {stable_mosaic.version = 11 : i64} {
  func.func @_linear_kernel(%arg0: i32, %arg1: memref<128x12xf32, #tpu.memory_space<vmem>>, %arg2: memref<12x4xbf16, #tpu.memory_space<vmem>>, %arg3: memref<1x4xf32, #tpu.memory_space<vmem>>, %arg4: memref<128x4xf32, #tpu.memory_space<vmem>>) attributes {dimension_semantics = [#tpu.dimension_semantics<parallel>], iteration_bounds = array<i64: 1>, scalar_prefetch = 0 : i64, scratch_operands = 0 : i64, tpu.core_type = #tpu.core_type<tc>, window_params = [{transform_indices = @transform_0, window_bounds = array<i64: 128, 12>}, {pipeline_mode = #tpu.pipeline_mode<synchronous>, transform_indices = @transform_1, window_bounds = array<i64: 12, 4>}, {pipeline_mode = #tpu.pipeline_mode<synchronous>, transform_indices = @transform_2, window_bounds = array<i64: 1, 4>}, {transform_indices = @transform_3, window_bounds = array<i64: 128, 4>}]} {
    %c0 = arith.constant 0 : index
    %c0_0 = arith.constant 0 : index
    %0 = vector.load %arg1[%c0, %c0_0] : memref<128x12xf32, #tpu.memory_space<vmem>>, vector<128x12xf32>
    %1 = arith.truncf %0 : vector<128x12xf32> to vector<128x12xbf16>
    %c0_1 = arith.constant 0 : index
    %c0_2 = arith.constant 0 : index
    %2 = vector.load %arg2[%c0_1, %c0_2] : memref<12x4xbf16, #tpu.memory_space<vmem>>, vector<12x4xbf16>
    %cst = arith.constant dense<0.000000e+00> : vector<128x4xf32>
    %3 = tpu.matmul %1, %2, %cst {dimension_numbers = #tpu.dot_dimension_numbers<[1], [0], [0], [1], [0, 0, 1, 1], [], []>} : vector<128x12xbf16>, vector<12x4xbf16>, vector<128x4xf32> -> vector<128x4xf32>
    %c0_3 = arith.constant 0 : index
    %c0_4 = arith.constant 0 : index
    %4 = vector.load %arg3[%c0_3, %c0_4] : memref<1x4xf32, #tpu.memory_space<vmem>>, vector<1x4xf32>
    %5 = vector.broadcast %4 : vector<1x4xf32> to vector<128x4xf32>
    %6 = arith.addf %3, %5 : vector<128x4xf32>
    %c0_5 = arith.constant 0 : index
    %c0_6 = arith.constant 0 : index
    %7 = vector.load %arg4[%c0_5, %c0_6] : memref<128x4xf32, #tpu.memory_space<vmem>>, vector<128x4xf32>
    tpu.vector_store %arg4[%c0_5, %c0_6], %6 {strides = array<i32>} : memref<128x4xf32, #tpu.memory_space<vmem>>, vector<128x4xf32>,
    return
  }
  func.func @transform_0(%arg0: i32) -> (i32, i32) {
    %c0_i32 = arith.constant 0 : i32
    %c0_i32_0 = arith.constant 0 : i32
    return %arg0, %c0_i32 : i32, i32
  }
  func.func @transform_1(%arg0: i32) -> (i32, i32) {
    %c0_i32 = arith.constant 0 : i32
    %c0_i32_0 = arith.constant 0 : i32
    %c0_i32_1 = arith.constant 0 : i32
    return %c0_i32, %c0_i32_0 : i32, i32
  }
  func.func @transform_2(%arg0: i32) -> (i32, i32) {
    %c0_i32 = arith.constant 0 : i32
    %c0_i32_0 = arith.constant 0 : i32
    %c0_i32_1 = arith.constant 0 : i32
    return %c0_i32, %c0_i32_0 : i32, i32
  }
  func.func @transform_3(%arg0: i32) -> (i32, i32) {
    %c0_i32 = arith.constant 0 : i32
    %c0_i32_0 = arith.constant 0 : i32
    return %arg0, %c0_i32 : i32, i32
  }
}

module attributes {stable_mosaic.version = 11 : i64} {
  func.func @_block_kernel(%arg0: i32, %arg1: memref<1x64x4xf32, #tpu.memory_space<vmem>>, %arg2: memref<1x4xf32, #tpu.memory_space<vmem>>, %arg3: memref<1x4xf32, #tpu.memory_space<vmem>>, %arg4: memref<4x32xbf16, #tpu.memory_space<vmem>>, %arg5: memref<1x32xf32, #tpu.memory_space<vmem>>, %arg6: memref<32x32xbf16, #tpu.memory_space<vmem>>, %arg7: memref<1x32xf32, #tpu.memory_space<vmem>>, %arg8: memref<4x32xbf16, #tpu.memory_space<vmem>>, %arg9: memref<1x32xf32, #tpu.memory_space<vmem>>, %arg10: memref<32x32xbf16, #tpu.memory_space<vmem>>, %arg11: memref<1x32xf32, #tpu.memory_space<vmem>>, %arg12: memref<4x4xbf16, #tpu.memory_space<vmem>>, %arg13: memref<1x4xf32, #tpu.memory_space<vmem>>, %arg14: memref<4x32xf32, #tpu.memory_space<vmem>>, %arg15: memref<32x4xbf16, #tpu.memory_space<vmem>>, %arg16: memref<1x64x4xf32, #tpu.memory_space<vmem>>, %arg17: memref<1x2x4xf32, #tpu.memory_space<vmem>>) attributes {dimension_semantics = [#tpu.dimension_semantics<parallel>], iteration_bounds = array<i64: 2>, scalar_prefetch = 0 : i64, scratch_operands = 0 : i64, tpu.core_type = #tpu.core_type<tc>, window_params = [{transform_indices = @transform_0, window_bounds = array<i64: 1, 64, 4>}, {pipeline_mode = #tpu.pipeline_mode<synchronous>, transform_indices = @transform_1, window_bounds = array<i64: 1, 4>}, {pipeline_mode = #tpu.pipeline_mode<synchronous>, transform_indices = @transform_2, window_bounds = array<i64: 1, 4>}, {pipeline_mode = #tpu.pipeline_mode<synchronous>, transform_indices = @transform_3, window_bounds = array<i64: 4, 32>}, {pipeline_mode = #tpu.pipeline_mode<synchronous>, transform_indices = @transform_4, window_bounds = array<i64: 1, 32>}, {pipeline_mode = #tpu.pipeline_mode<synchronous>, transform_indices = @transform_5, window_bounds = array<i64: 32, 32>}, {pipeline_mode = #tpu.pipeline_mode<synchronous>, transform_indices = @transform_6, window_bounds = array<i64: 1, 32>}, {pipeline_mode = #tpu.pipeline_mode<synchronous>, transform_indices = @transform_7, window_bounds = array<i64: 4, 32>}, {pipeline_mode = #tpu.pipeline_mode<synchronous>, transform_indices = @transform_8, window_bounds = array<i64: 1, 32>}, {pipeline_mode = #tpu.pipeline_mode<synchronous>, transform_indices = @transform_9, window_bounds = array<i64: 32, 32>}, {pipeline_mode = #tpu.pipeline_mode<synchronous>, transform_indices = @transform_10, window_bounds = array<i64: 1, 32>}, {pipeline_mode = #tpu.pipeline_mode<synchronous>, transform_indices = @transform_11, window_bounds = array<i64: 4, 4>}, {pipeline_mode = #tpu.pipeline_mode<synchronous>, transform_indices = @transform_12, window_bounds = array<i64: 1, 4>}, {pipeline_mode = #tpu.pipeline_mode<synchronous>, transform_indices = @transform_13, window_bounds = array<i64: 4, 32>}, {pipeline_mode = #tpu.pipeline_mode<synchronous>, transform_indices = @transform_14, window_bounds = array<i64: 32, 4>}, {transform_indices = @transform_15, window_bounds = array<i64: 1, 64, 4>}, {transform_indices = @transform_16, window_bounds = array<i64: 1, 2, 4>}]} {
    %c0 = arith.constant 0 : index
    %c0_0 = arith.constant 0 : index
    %c0_1 = arith.constant 0 : index
    %0 = vector.load %arg1[%c0, %c0_0, %c0_1] : memref<1x64x4xf32, #tpu.memory_space<vmem>>, vector<1x64x4xf32>
    %1 = vector.shape_cast %0 : vector<1x64x4xf32> to vector<64x4xf32>
    %c0_2 = arith.constant 0 : index
    %c0_3 = arith.constant 0 : index
    %2 = vector.load %arg2[%c0_2, %c0_3] : memref<1x4xf32, #tpu.memory_space<vmem>>, vector<1x4xf32>
    %3 = vector.broadcast %2 : vector<1x4xf32> to vector<64x4xf32>
    %4 = arith.mulf %1, %3 : vector<64x4xf32>
    %c0_4 = arith.constant 0 : index
    %c0_5 = arith.constant 0 : index
    %5 = vector.load %arg3[%c0_4, %c0_5] : memref<1x4xf32, #tpu.memory_space<vmem>>, vector<1x4xf32>
    %6 = vector.broadcast %5 : vector<1x4xf32> to vector<64x4xf32>
    %7 = arith.addf %4, %6 : vector<64x4xf32>
    %8 = arith.truncf %7 : vector<64x4xf32> to vector<64x4xbf16>
    %c0_6 = arith.constant 0 : index
    %c0_7 = arith.constant 0 : index
    %9 = vector.load %arg4[%c0_6, %c0_7] : memref<4x32xbf16, #tpu.memory_space<vmem>>, vector<4x32xbf16>
    %cst = arith.constant dense<0.000000e+00> : vector<64x32xf32>
    %10 = tpu.matmul %8, %9, %cst {dimension_numbers = #tpu.dot_dimension_numbers<[1], [0], [0], [1], [0, 0, 1, 1], [], []>} : vector<64x4xbf16>, vector<4x32xbf16>, vector<64x32xf32> -> vector<64x32xf32>
    %c0_8 = arith.constant 0 : index
    %c0_9 = arith.constant 0 : index
    %11 = vector.load %arg5[%c0_8, %c0_9] : memref<1x32xf32, #tpu.memory_space<vmem>>, vector<1x32xf32>
    %12 = vector.broadcast %11 : vector<1x32xf32> to vector<64x32xf32>
    %13 = arith.addf %10, %12 : vector<64x32xf32>
    %cst_10 = arith.constant 0.000000e+00 : f32
    %14 = vector.broadcast %cst_10 : f32 to vector<64x32xf32>
    %15 = arith.maximumf %13, %14 : vector<64x32xf32>
    %16 = arith.truncf %15 : vector<64x32xf32> to vector<64x32xbf16>
    %c0_11 = arith.constant 0 : index
    %c0_12 = arith.constant 0 : index
    %17 = vector.load %arg6[%c0_11, %c0_12] : memref<32x32xbf16, #tpu.memory_space<vmem>>, vector<32x32xbf16>
    %cst_13 = arith.constant dense<0.000000e+00> : vector<64x32xf32>
    %18 = tpu.matmul %16, %17, %cst_13 {dimension_numbers = #tpu.dot_dimension_numbers<[1], [0], [0], [1], [0, 0, 1, 1], [], []>} : vector<64x32xbf16>, vector<32x32xbf16>, vector<64x32xf32> -> vector<64x32xf32>
    %c0_14 = arith.constant 0 : index
    %c0_15 = arith.constant 0 : index
    %19 = vector.load %arg7[%c0_14, %c0_15] : memref<1x32xf32, #tpu.memory_space<vmem>>, vector<1x32xf32>
    %20 = vector.broadcast %19 : vector<1x32xf32> to vector<64x32xf32>
    %21 = arith.addf %18, %20 : vector<64x32xf32>
    %c0_16 = arith.constant 0 : index
    %c0_17 = arith.constant 0 : index
    %22 = vector.load %arg8[%c0_16, %c0_17] : memref<4x32xbf16, #tpu.memory_space<vmem>>, vector<4x32xbf16>
    %cst_18 = arith.constant dense<0.000000e+00> : vector<64x32xf32>
    %23 = tpu.matmul %8, %22, %cst_18 {dimension_numbers = #tpu.dot_dimension_numbers<[1], [0], [0], [1], [0, 0, 1, 1], [], []>} : vector<64x4xbf16>, vector<4x32xbf16>, vector<64x32xf32> -> vector<64x32xf32>
    %c0_19 = arith.constant 0 : index
    %c0_20 = arith.constant 0 : index
    %24 = vector.load %arg9[%c0_19, %c0_20] : memref<1x32xf32, #tpu.memory_space<vmem>>, vector<1x32xf32>
    %25 = vector.broadcast %24 : vector<1x32xf32> to vector<64x32xf32>
    %26 = arith.addf %23, %25 : vector<64x32xf32>
    %cst_21 = arith.constant 0.000000e+00 : f32
    %27 = vector.broadcast %cst_21 : f32 to vector<64x32xf32>
    %28 = arith.maximumf %26, %27 : vector<64x32xf32>
    %29 = arith.truncf %28 : vector<64x32xf32> to vector<64x32xbf16>
    %c0_22 = arith.constant 0 : index
    %c0_23 = arith.constant 0 : index
    %30 = vector.load %arg10[%c0_22, %c0_23] : memref<32x32xbf16, #tpu.memory_space<vmem>>, vector<32x32xbf16>
    %cst_24 = arith.constant dense<0.000000e+00> : vector<64x32xf32>
    %31 = tpu.matmul %29, %30, %cst_24 {dimension_numbers = #tpu.dot_dimension_numbers<[1], [0], [0], [1], [0, 0, 1, 1], [], []>} : vector<64x32xbf16>, vector<32x32xbf16>, vector<64x32xf32> -> vector<64x32xf32>
    %c0_25 = arith.constant 0 : index
    %c0_26 = arith.constant 0 : index
    %32 = vector.load %arg11[%c0_25, %c0_26] : memref<1x32xf32, #tpu.memory_space<vmem>>, vector<1x32xf32>
    %33 = vector.broadcast %32 : vector<1x32xf32> to vector<64x32xf32>
    %34 = arith.addf %31, %33 : vector<64x32xf32>
    %35 = arith.truncf %34 : vector<64x32xf32> to vector<64x32xbf16>
    %cst_27 = arith.constant dense<0.000000e+00> : vector<4x32xf32>
    %36 = tpu.matmul %8, %35, %cst_27 {dimension_numbers = #tpu.dot_dimension_numbers<[0], [0], [1], [1], [0, 1, 1, 1], [], []>} : vector<64x4xbf16>, vector<64x32xbf16>, vector<4x32xf32> -> vector<4x32xf32>
    %c0_28 = arith.constant 0 : index
    %c0_29 = arith.constant 0 : index
    %37 = vector.load %arg14[%c0_28, %c0_29] : memref<4x32xf32, #tpu.memory_space<vmem>>, vector<4x32xf32>
    %38 = arith.mulf %36, %37 : vector<4x32xf32>
    %cst_30 = arith.constant dense<0.000000e+00> : vector<32xf32>
    %39 = vector.multi_reduction <add>, %38, %cst_30 [0] : vector<4x32xf32> to vector<32xf32>
    %40 = vector.shape_cast %39 : vector<32xf32> to vector<1x32xf32>
    %41 = vector.broadcast %40 : vector<1x32xf32> to vector<64x32xf32>
    %42 = arith.mulf %21, %41 : vector<64x32xf32>
    %43 = arith.truncf %42 : vector<64x32xf32> to vector<64x32xbf16>
    %c0_31 = arith.constant 0 : index
    %c0_32 = arith.constant 0 : index
    %44 = vector.load %arg15[%c0_31, %c0_32] : memref<32x4xbf16, #tpu.memory_space<vmem>>, vector<32x4xbf16>
    %cst_33 = arith.constant dense<0.000000e+00> : vector<64x4xf32>
    %45 = tpu.matmul %43, %44, %cst_33 {dimension_numbers = #tpu.dot_dimension_numbers<[1], [0], [0], [1], [0, 0, 1, 1], [], []>} : vector<64x32xbf16>, vector<32x4xbf16>, vector<64x4xf32> -> vector<64x4xf32>
    %c0_34 = arith.constant 0 : index
    %c0_35 = arith.constant 0 : index
    %46 = vector.load %arg12[%c0_34, %c0_35] : memref<4x4xbf16, #tpu.memory_space<vmem>>, vector<4x4xbf16>
    %cst_36 = arith.constant dense<0.000000e+00> : vector<64x4xf32>
    %47 = tpu.matmul %8, %46, %cst_36 {dimension_numbers = #tpu.dot_dimension_numbers<[1], [0], [0], [1], [0, 0, 1, 1], [], []>} : vector<64x4xbf16>, vector<4x4xbf16>, vector<64x4xf32> -> vector<64x4xf32>
    %c0_37 = arith.constant 0 : index
    %c0_38 = arith.constant 0 : index
    %48 = vector.load %arg13[%c0_37, %c0_38] : memref<1x4xf32, #tpu.memory_space<vmem>>, vector<1x4xf32>
    %49 = vector.broadcast %48 : vector<1x4xf32> to vector<64x4xf32>
    %50 = arith.addf %47, %49 : vector<64x4xf32>
    %51 = arith.addf %45, %50 : vector<64x4xf32>
    %c0_39 = arith.constant 0 : index
    %c0_40 = arith.constant 0 : index
    %c0_41 = arith.constant 0 : index
    %52 = vector.load %arg16[%c0_39, %c0_40, %c0_41] : memref<1x64x4xf32, #tpu.memory_space<vmem>>, vector<1x64x4xf32>
    %53 = vector.shape_cast %52 : vector<1x64x4xf32> to vector<64x4xf32>
    %54 = vector.shape_cast %51 : vector<64x4xf32> to vector<1x64x4xf32>
    tpu.vector_store %arg16[%c0_39, %c0_40, %c0_41], %54 {strides = array<i32>} : memref<1x64x4xf32, #tpu.memory_space<vmem>>, vector<1x64x4xf32>,
    %cst_42 = arith.constant dense<0.000000e+00> : vector<4xf32>
    %55 = vector.multi_reduction <add>, %51, %cst_42 [0] : vector<64x4xf32> to vector<4xf32>
    %56 = vector.shape_cast %55 : vector<4xf32> to vector<1x4xf32>
    %c0_43 = arith.constant 0 : index
    %c0_44 = arith.constant 0 : index
    %c0_45 = arith.constant 0 : index
    %57 = vector.load %arg17[%c0_43, %c0_44, %c0_45] : memref<1x2x4xf32, #tpu.memory_space<vmem>>, vector<1x1x4xf32>
    %58 = vector.shape_cast %57 : vector<1x1x4xf32> to vector<1x4xf32>
    %59 = vector.shape_cast %56 : vector<1x4xf32> to vector<1x1x4xf32>
    tpu.vector_store %arg17[%c0_43, %c0_44, %c0_45], %59 {strides = array<i32>} : memref<1x2x4xf32, #tpu.memory_space<vmem>>, vector<1x1x4xf32>,
    %60 = arith.mulf %51, %51 : vector<64x4xf32>
    %cst_46 = arith.constant dense<0.000000e+00> : vector<4xf32>
    %61 = vector.multi_reduction <add>, %60, %cst_46 [0] : vector<64x4xf32> to vector<4xf32>
    %62 = vector.shape_cast %61 : vector<4xf32> to vector<1x4xf32>
    %c0_47 = arith.constant 0 : index
    %c1 = arith.constant 1 : index
    %c0_48 = arith.constant 0 : index
    %63 = vector.load %arg17[%c0_47, %c1, %c0_48] : memref<1x2x4xf32, #tpu.memory_space<vmem>>, vector<1x1x4xf32>
    %64 = vector.shape_cast %63 : vector<1x1x4xf32> to vector<1x4xf32>
    %65 = vector.shape_cast %62 : vector<1x4xf32> to vector<1x1x4xf32>
    tpu.vector_store %arg17[%c0_47, %c1, %c0_48], %65 {strides = array<i32>} : memref<1x2x4xf32, #tpu.memory_space<vmem>>, vector<1x1x4xf32>,
    return
  }
  func.func @transform_0(%arg0: i32) -> (i32, i32, i32) {
    %c0_i32 = arith.constant 0 : i32
    %c0_i32_0 = arith.constant 0 : i32
    %c0_i32_1 = arith.constant 0 : i32
    return %arg0, %c0_i32, %c0_i32_0 : i32, i32, i32
  }
  func.func @transform_1(%arg0: i32) -> (i32, i32) {
    %c0_i32 = arith.constant 0 : i32
    %c0_i32_0 = arith.constant 0 : i32
    %c0_i32_1 = arith.constant 0 : i32
    return %c0_i32, %c0_i32_0 : i32, i32
  }
  func.func @transform_2(%arg0: i32) -> (i32, i32) {
    %c0_i32 = arith.constant 0 : i32
    %c0_i32_0 = arith.constant 0 : i32
    %c0_i32_1 = arith.constant 0 : i32
    return %c0_i32, %c0_i32_0 : i32, i32
  }
  func.func @transform_3(%arg0: i32) -> (i32, i32) {
    %c0_i32 = arith.constant 0 : i32
    %c0_i32_0 = arith.constant 0 : i32
    %c0_i32_1 = arith.constant 0 : i32
    return %c0_i32, %c0_i32_0 : i32, i32
  }
  func.func @transform_4(%arg0: i32) -> (i32, i32) {
    %c0_i32 = arith.constant 0 : i32
    %c0_i32_0 = arith.constant 0 : i32
    %c0_i32_1 = arith.constant 0 : i32
    return %c0_i32, %c0_i32_0 : i32, i32
  }
  func.func @transform_5(%arg0: i32) -> (i32, i32) {
    %c0_i32 = arith.constant 0 : i32
    %c0_i32_0 = arith.constant 0 : i32
    %c0_i32_1 = arith.constant 0 : i32
    return %c0_i32, %c0_i32_0 : i32, i32
  }
  func.func @transform_6(%arg0: i32) -> (i32, i32) {
    %c0_i32 = arith.constant 0 : i32
    %c0_i32_0 = arith.constant 0 : i32
    %c0_i32_1 = arith.constant 0 : i32
    return %c0_i32, %c0_i32_0 : i32, i32
  }
  func.func @transform_7(%arg0: i32) -> (i32, i32) {
    %c0_i32 = arith.constant 0 : i32
    %c0_i32_0 = arith.constant 0 : i32
    %c0_i32_1 = arith.constant 0 : i32
    return %c0_i32, %c0_i32_0 : i32, i32
  }
  func.func @transform_8(%arg0: i32) -> (i32, i32) {
    %c0_i32 = arith.constant 0 : i32
    %c0_i32_0 = arith.constant 0 : i32
    %c0_i32_1 = arith.constant 0 : i32
    return %c0_i32, %c0_i32_0 : i32, i32
  }
  func.func @transform_9(%arg0: i32) -> (i32, i32) {
    %c0_i32 = arith.constant 0 : i32
    %c0_i32_0 = arith.constant 0 : i32
    %c0_i32_1 = arith.constant 0 : i32
    return %c0_i32, %c0_i32_0 : i32, i32
  }
  func.func @transform_10(%arg0: i32) -> (i32, i32) {
    %c0_i32 = arith.constant 0 : i32
    %c0_i32_0 = arith.constant 0 : i32
    %c0_i32_1 = arith.constant 0 : i32
    return %c0_i32, %c0_i32_0 : i32, i32
  }
  func.func @transform_11(%arg0: i32) -> (i32, i32) {
    %c0_i32 = arith.constant 0 : i32
    %c0_i32_0 = arith.constant 0 : i32
    %c0_i32_1 = arith.constant 0 : i32
    return %c0_i32, %c0_i32_0 : i32, i32
  }
  func.func @transform_12(%arg0: i32) -> (i32, i32) {
    %c0_i32 = arith.constant 0 : i32
    %c0_i32_0 = arith.constant 0 : i32
    %c0_i32_1 = arith.constant 0 : i32
    return %c0_i32, %c0_i32_0 : i32, i32
  }
  func.func @transform_13(%arg0: i32) -> (i32, i32) {
    %c0_i32 = arith.constant 0 : i32
    %c0_i32_0 = arith.constant 0 : i32
    %c0_i32_1 = arith.constant 0 : i32
    return %c0_i32, %c0_i32_0 : i32, i32
  }
  func.func @transform_14(%arg0: i32) -> (i32, i32) {
    %c0_i32 = arith.constant 0 : i32
    %c0_i32_0 = arith.constant 0 : i32
    %c0_i32_1 = arith.constant 0 : i32
    return %c0_i32, %c0_i32_0 : i32, i32
  }
  func.func @transform_15(%arg0: i32) -> (i32, i32, i32) {
    %c0_i32 = arith.constant 0 : i32
    %c0_i32_0 = arith.constant 0 : i32
    %c0_i32_1 = arith.constant 0 : i32
    return %arg0, %c0_i32, %c0_i32_0 : i32, i32, i32
  }
  func.func @transform_16(%arg0: i32) -> (i32, i32, i32) {
    %c0_i32 = arith.constant 0 : i32
    %c0_i32_0 = arith.constant 0 : i32
    %c0_i32_1 = arith.constant 0 : i32
    return %arg0, %c0_i32, %c0_i32_0 : i32, i32, i32
  }
}

module attributes {stable_mosaic.version = 11 : i64} {
  func.func @_head_kernel(%arg0: i32, %arg1: memref<128x4xf32, #tpu.memory_space<vmem>>, %arg2: memref<1x4xf32, #tpu.memory_space<vmem>>, %arg3: memref<1x4xf32, #tpu.memory_space<vmem>>, %arg4: memref<4x128xbf16, #tpu.memory_space<vmem>>, %arg5: memref<1x128xf32, #tpu.memory_space<vmem>>, %arg6: memref<128x1xbf16, #tpu.memory_space<vmem>>, %arg7: memref<1x1xf32, #tpu.memory_space<vmem>>, %arg8: memref<128x1xf32, #tpu.memory_space<vmem>>) attributes {dimension_semantics = [#tpu.dimension_semantics<parallel>], iteration_bounds = array<i64: 1>, scalar_prefetch = 0 : i64, scratch_operands = 0 : i64, tpu.core_type = #tpu.core_type<tc>, window_params = [{transform_indices = @transform_0, window_bounds = array<i64: 128, 4>}, {pipeline_mode = #tpu.pipeline_mode<synchronous>, transform_indices = @transform_1, window_bounds = array<i64: 1, 4>}, {pipeline_mode = #tpu.pipeline_mode<synchronous>, transform_indices = @transform_2, window_bounds = array<i64: 1, 4>}, {pipeline_mode = #tpu.pipeline_mode<synchronous>, transform_indices = @transform_3, window_bounds = array<i64: 4, 128>}, {pipeline_mode = #tpu.pipeline_mode<synchronous>, transform_indices = @transform_4, window_bounds = array<i64: 1, 128>}, {pipeline_mode = #tpu.pipeline_mode<synchronous>, transform_indices = @transform_5, window_bounds = array<i64: 128, 1>}, {pipeline_mode = #tpu.pipeline_mode<synchronous>, transform_indices = @transform_6, window_bounds = array<i64: 1, 1>}, {transform_indices = @transform_7, window_bounds = array<i64: 128, 1>}]} {
    %c0 = arith.constant 0 : index
    %c0_0 = arith.constant 0 : index
    %0 = vector.load %arg1[%c0, %c0_0] : memref<128x4xf32, #tpu.memory_space<vmem>>, vector<128x4xf32>
    %c0_1 = arith.constant 0 : index
    %c0_2 = arith.constant 0 : index
    %1 = vector.load %arg2[%c0_1, %c0_2] : memref<1x4xf32, #tpu.memory_space<vmem>>, vector<1x4xf32>
    %2 = vector.broadcast %1 : vector<1x4xf32> to vector<128x4xf32>
    %3 = arith.mulf %0, %2 : vector<128x4xf32>
    %c0_3 = arith.constant 0 : index
    %c0_4 = arith.constant 0 : index
    %4 = vector.load %arg3[%c0_3, %c0_4] : memref<1x4xf32, #tpu.memory_space<vmem>>, vector<1x4xf32>
    %5 = vector.broadcast %4 : vector<1x4xf32> to vector<128x4xf32>
    %6 = arith.addf %3, %5 : vector<128x4xf32>
    %7 = arith.truncf %6 : vector<128x4xf32> to vector<128x4xbf16>
    %c0_5 = arith.constant 0 : index
    %c0_6 = arith.constant 0 : index
    %8 = vector.load %arg4[%c0_5, %c0_6] : memref<4x128xbf16, #tpu.memory_space<vmem>>, vector<4x128xbf16>
    %cst = arith.constant dense<0.000000e+00> : vector<128x128xf32>
    %9 = tpu.matmul %7, %8, %cst {dimension_numbers = #tpu.dot_dimension_numbers<[1], [0], [0], [1], [0, 0, 1, 1], [], []>} : vector<128x4xbf16>, vector<4x128xbf16>, vector<128x128xf32> -> vector<128x128xf32>
    %c0_7 = arith.constant 0 : index
    %c0_8 = arith.constant 0 : index
    %10 = vector.load %arg5[%c0_7, %c0_8] : memref<1x128xf32, #tpu.memory_space<vmem>>, vector<1x128xf32>
    %11 = vector.broadcast %10 : vector<1x128xf32> to vector<128x128xf32>
    %12 = arith.addf %9, %11 : vector<128x128xf32>
    %cst_9 = arith.constant 0.000000e+00 : f32
    %13 = vector.broadcast %cst_9 : f32 to vector<128x128xf32>
    %14 = arith.maximumf %12, %13 : vector<128x128xf32>
    %15 = arith.truncf %14 : vector<128x128xf32> to vector<128x128xbf16>
    %c0_10 = arith.constant 0 : index
    %c0_11 = arith.constant 0 : index
    %16 = vector.load %arg6[%c0_10, %c0_11] : memref<128x1xbf16, #tpu.memory_space<vmem>>, vector<128x1xbf16>
    %cst_12 = arith.constant dense<0.000000e+00> : vector<128x1xf32>
    %17 = tpu.matmul %15, %16, %cst_12 {dimension_numbers = #tpu.dot_dimension_numbers<[1], [0], [0], [1], [0, 0, 1, 1], [], []>} : vector<128x128xbf16>, vector<128x1xbf16>, vector<128x1xf32> -> vector<128x1xf32>
    %c0_13 = arith.constant 0 : index
    %c0_14 = arith.constant 0 : index
    %18 = vector.load %arg7[%c0_13, %c0_14] : memref<1x1xf32, #tpu.memory_space<vmem>>, vector<1x1xf32>
    %19 = vector.broadcast %18 : vector<1x1xf32> to vector<128x1xf32>
    %20 = arith.addf %17, %19 : vector<128x1xf32>
    %c0_15 = arith.constant 0 : index
    %c0_16 = arith.constant 0 : index
    %21 = vector.load %arg8[%c0_15, %c0_16] : memref<128x1xf32, #tpu.memory_space<vmem>>, vector<128x1xf32>
    tpu.vector_store %arg8[%c0_15, %c0_16], %20 {strides = array<i32>} : memref<128x1xf32, #tpu.memory_space<vmem>>, vector<128x1xf32>,
    return
  }
  func.func @transform_0(%arg0: i32) -> (i32, i32) {
    %c0_i32 = arith.constant 0 : i32
    %c0_i32_0 = arith.constant 0 : i32
    return %arg0, %c0_i32 : i32, i32
  }
  func.func @transform_1(%arg0: i32) -> (i32, i32) {
    %c0_i32 = arith.constant 0 : i32
    %c0_i32_0 = arith.constant 0 : i32
    %c0_i32_1 = arith.constant 0 : i32
    return %c0_i32, %c0_i32_0 : i32, i32
  }
  func.func @transform_2(%arg0: i32) -> (i32, i32) {
    %c0_i32 = arith.constant 0 : i32
    %c0_i32_0 = arith.constant 0 : i32
    %c0_i32_1 = arith.constant 0 : i32
    return %c0_i32, %c0_i32_0 : i32, i32
  }
  func.func @transform_3(%arg0: i32) -> (i32, i32) {
    %c0_i32 = arith.constant 0 : i32
    %c0_i32_0 = arith.constant 0 : i32
    %c0_i32_1 = arith.constant 0 : i32
    return %c0_i32, %c0_i32_0 : i32, i32
  }
  func.func @transform_4(%arg0: i32) -> (i32, i32) {
    %c0_i32 = arith.constant 0 : i32
    %c0_i32_0 = arith.constant 0 : i32
    %c0_i32_1 = arith.constant 0 : i32
    return %c0_i32, %c0_i32_0 : i32, i32
  }
  func.func @transform_5(%arg0: i32) -> (i32, i32) {
    %c0_i32 = arith.constant 0 : i32
    %c0_i32_0 = arith.constant 0 : i32
    %c0_i32_1 = arith.constant 0 : i32
    return %c0_i32, %c0_i32_0 : i32, i32
  }
  func.func @transform_6(%arg0: i32) -> (i32, i32) {
    %c0_i32 = arith.constant 0 : i32
    %c0_i32_0 = arith.constant 0 : i32
    %c0_i32_1 = arith.constant 0 : i32
    return %c0_i32, %c0_i32_0 : i32, i32
  }
  func.func @transform_7(%arg0: i32) -> (i32, i32) {
    %c0_i32 = arith.constant 0 : i32
    %c0_i32_0 = arith.constant 0 : i32
    return %arg0, %c0_i32 : i32, i32
  }
}

module attributes {stable_mosaic.version = 11 : i64} {
  func.func @_block_kernel(%arg0: i32, %arg1: memref<1x64x4xf32, #tpu.memory_space<vmem>>, %arg2: memref<1x4xf32, #tpu.memory_space<vmem>>, %arg3: memref<1x4xf32, #tpu.memory_space<vmem>>, %arg4: memref<4x32xbf16, #tpu.memory_space<vmem>>, %arg5: memref<1x32xf32, #tpu.memory_space<vmem>>, %arg6: memref<32x32xbf16, #tpu.memory_space<vmem>>, %arg7: memref<1x32xf32, #tpu.memory_space<vmem>>, %arg8: memref<4x32xbf16, #tpu.memory_space<vmem>>, %arg9: memref<1x32xf32, #tpu.memory_space<vmem>>, %arg10: memref<32x32xbf16, #tpu.memory_space<vmem>>, %arg11: memref<1x32xf32, #tpu.memory_space<vmem>>, %arg12: memref<4x4xbf16, #tpu.memory_space<vmem>>, %arg13: memref<1x4xf32, #tpu.memory_space<vmem>>, %arg14: memref<4x32xf32, #tpu.memory_space<vmem>>, %arg15: memref<32x4xbf16, #tpu.memory_space<vmem>>, %arg16: memref<1x64x4xf32, #tpu.memory_space<vmem>>, %arg17: memref<1x2x4xf32, #tpu.memory_space<vmem>>) attributes {dimension_semantics = [#tpu.dimension_semantics<parallel>], iteration_bounds = array<i64: 2>, scalar_prefetch = 0 : i64, scratch_operands = 0 : i64, tpu.core_type = #tpu.core_type<tc>, window_params = [{transform_indices = @transform_0, window_bounds = array<i64: 1, 64, 4>}, {pipeline_mode = #tpu.pipeline_mode<synchronous>, transform_indices = @transform_1, window_bounds = array<i64: 1, 4>}, {pipeline_mode = #tpu.pipeline_mode<synchronous>, transform_indices = @transform_2, window_bounds = array<i64: 1, 4>}, {pipeline_mode = #tpu.pipeline_mode<synchronous>, transform_indices = @transform_3, window_bounds = array<i64: 4, 32>}, {pipeline_mode = #tpu.pipeline_mode<synchronous>, transform_indices = @transform_4, window_bounds = array<i64: 1, 32>}, {pipeline_mode = #tpu.pipeline_mode<synchronous>, transform_indices = @transform_5, window_bounds = array<i64: 32, 32>}, {pipeline_mode = #tpu.pipeline_mode<synchronous>, transform_indices = @transform_6, window_bounds = array<i64: 1, 32>}, {pipeline_mode = #tpu.pipeline_mode<synchronous>, transform_indices = @transform_7, window_bounds = array<i64: 4, 32>}, {pipeline_mode = #tpu.pipeline_mode<synchronous>, transform_indices = @transform_8, window_bounds = array<i64: 1, 32>}, {pipeline_mode = #tpu.pipeline_mode<synchronous>, transform_indices = @transform_9, window_bounds = array<i64: 32, 32>}, {pipeline_mode = #tpu.pipeline_mode<synchronous>, transform_indices = @transform_10, window_bounds = array<i64: 1, 32>}, {pipeline_mode = #tpu.pipeline_mode<synchronous>, transform_indices = @transform_11, window_bounds = array<i64: 4, 4>}, {pipeline_mode = #tpu.pipeline_mode<synchronous>, transform_indices = @transform_12, window_bounds = array<i64: 1, 4>}, {pipeline_mode = #tpu.pipeline_mode<synchronous>, transform_indices = @transform_13, window_bounds = array<i64: 4, 32>}, {pipeline_mode = #tpu.pipeline_mode<synchronous>, transform_indices = @transform_14, window_bounds = array<i64: 32, 4>}, {transform_indices = @transform_15, window_bounds = array<i64: 1, 64, 4>}, {transform_indices = @transform_16, window_bounds = array<i64: 1, 2, 4>}]} {
    %c0 = arith.constant 0 : index
    %c0_0 = arith.constant 0 : index
    %c0_1 = arith.constant 0 : index
    %0 = vector.load %arg1[%c0, %c0_0, %c0_1] : memref<1x64x4xf32, #tpu.memory_space<vmem>>, vector<1x64x4xf32>
    %1 = vector.shape_cast %0 : vector<1x64x4xf32> to vector<64x4xf32>
    %c0_2 = arith.constant 0 : index
    %c0_3 = arith.constant 0 : index
    %2 = vector.load %arg2[%c0_2, %c0_3] : memref<1x4xf32, #tpu.memory_space<vmem>>, vector<1x4xf32>
    %3 = vector.broadcast %2 : vector<1x4xf32> to vector<64x4xf32>
    %4 = arith.mulf %1, %3 : vector<64x4xf32>
    %c0_4 = arith.constant 0 : index
    %c0_5 = arith.constant 0 : index
    %5 = vector.load %arg3[%c0_4, %c0_5] : memref<1x4xf32, #tpu.memory_space<vmem>>, vector<1x4xf32>
    %6 = vector.broadcast %5 : vector<1x4xf32> to vector<64x4xf32>
    %7 = arith.addf %4, %6 : vector<64x4xf32>
    %cst = arith.constant 0.000000e+00 : f32
    %8 = vector.broadcast %cst : f32 to vector<64x4xf32>
    %9 = arith.maximumf %7, %8 : vector<64x4xf32>
    %10 = arith.truncf %9 : vector<64x4xf32> to vector<64x4xbf16>
    %c0_6 = arith.constant 0 : index
    %c0_7 = arith.constant 0 : index
    %11 = vector.load %arg4[%c0_6, %c0_7] : memref<4x32xbf16, #tpu.memory_space<vmem>>, vector<4x32xbf16>
    %cst_8 = arith.constant dense<0.000000e+00> : vector<64x32xf32>
    %12 = tpu.matmul %10, %11, %cst_8 {dimension_numbers = #tpu.dot_dimension_numbers<[1], [0], [0], [1], [0, 0, 1, 1], [], []>} : vector<64x4xbf16>, vector<4x32xbf16>, vector<64x32xf32> -> vector<64x32xf32>
    %c0_9 = arith.constant 0 : index
    %c0_10 = arith.constant 0 : index
    %13 = vector.load %arg5[%c0_9, %c0_10] : memref<1x32xf32, #tpu.memory_space<vmem>>, vector<1x32xf32>
    %14 = vector.broadcast %13 : vector<1x32xf32> to vector<64x32xf32>
    %15 = arith.addf %12, %14 : vector<64x32xf32>
    %cst_11 = arith.constant 0.000000e+00 : f32
    %16 = vector.broadcast %cst_11 : f32 to vector<64x32xf32>
    %17 = arith.maximumf %15, %16 : vector<64x32xf32>
    %18 = arith.truncf %17 : vector<64x32xf32> to vector<64x32xbf16>
    %c0_12 = arith.constant 0 : index
    %c0_13 = arith.constant 0 : index
    %19 = vector.load %arg6[%c0_12, %c0_13] : memref<32x32xbf16, #tpu.memory_space<vmem>>, vector<32x32xbf16>
    %cst_14 = arith.constant dense<0.000000e+00> : vector<64x32xf32>
    %20 = tpu.matmul %18, %19, %cst_14 {dimension_numbers = #tpu.dot_dimension_numbers<[1], [0], [0], [1], [0, 0, 1, 1], [], []>} : vector<64x32xbf16>, vector<32x32xbf16>, vector<64x32xf32> -> vector<64x32xf32>
    %c0_15 = arith.constant 0 : index
    %c0_16 = arith.constant 0 : index
    %21 = vector.load %arg7[%c0_15, %c0_16] : memref<1x32xf32, #tpu.memory_space<vmem>>, vector<1x32xf32>
    %22 = vector.broadcast %21 : vector<1x32xf32> to vector<64x32xf32>
    %23 = arith.addf %20, %22 : vector<64x32xf32>
    %c0_17 = arith.constant 0 : index
    %c0_18 = arith.constant 0 : index
    %24 = vector.load %arg8[%c0_17, %c0_18] : memref<4x32xbf16, #tpu.memory_space<vmem>>, vector<4x32xbf16>
    %cst_19 = arith.constant dense<0.000000e+00> : vector<64x32xf32>
    %25 = tpu.matmul %10, %24, %cst_19 {dimension_numbers = #tpu.dot_dimension_numbers<[1], [0], [0], [1], [0, 0, 1, 1], [], []>} : vector<64x4xbf16>, vector<4x32xbf16>, vector<64x32xf32> -> vector<64x32xf32>
    %c0_20 = arith.constant 0 : index
    %c0_21 = arith.constant 0 : index
    %26 = vector.load %arg9[%c0_20, %c0_21] : memref<1x32xf32, #tpu.memory_space<vmem>>, vector<1x32xf32>
    %27 = vector.broadcast %26 : vector<1x32xf32> to vector<64x32xf32>
    %28 = arith.addf %25, %27 : vector<64x32xf32>
    %cst_22 = arith.constant 0.000000e+00 : f32
    %29 = vector.broadcast %cst_22 : f32 to vector<64x32xf32>
    %30 = arith.maximumf %28, %29 : vector<64x32xf32>
    %31 = arith.truncf %30 : vector<64x32xf32> to vector<64x32xbf16>
    %c0_23 = arith.constant 0 : index
    %c0_24 = arith.constant 0 : index
    %32 = vector.load %arg10[%c0_23, %c0_24] : memref<32x32xbf16, #tpu.memory_space<vmem>>, vector<32x32xbf16>
    %cst_25 = arith.constant dense<0.000000e+00> : vector<64x32xf32>
    %33 = tpu.matmul %31, %32, %cst_25 {dimension_numbers = #tpu.dot_dimension_numbers<[1], [0], [0], [1], [0, 0, 1, 1], [], []>} : vector<64x32xbf16>, vector<32x32xbf16>, vector<64x32xf32> -> vector<64x32xf32>
    %c0_26 = arith.constant 0 : index
    %c0_27 = arith.constant 0 : index
    %34 = vector.load %arg11[%c0_26, %c0_27] : memref<1x32xf32, #tpu.memory_space<vmem>>, vector<1x32xf32>
    %35 = vector.broadcast %34 : vector<1x32xf32> to vector<64x32xf32>
    %36 = arith.addf %33, %35 : vector<64x32xf32>
    %37 = arith.truncf %36 : vector<64x32xf32> to vector<64x32xbf16>
    %cst_28 = arith.constant dense<0.000000e+00> : vector<4x32xf32>
    %38 = tpu.matmul %10, %37, %cst_28 {dimension_numbers = #tpu.dot_dimension_numbers<[0], [0], [1], [1], [0, 1, 1, 1], [], []>} : vector<64x4xbf16>, vector<64x32xbf16>, vector<4x32xf32> -> vector<4x32xf32>
    %c0_29 = arith.constant 0 : index
    %c0_30 = arith.constant 0 : index
    %39 = vector.load %arg14[%c0_29, %c0_30] : memref<4x32xf32, #tpu.memory_space<vmem>>, vector<4x32xf32>
    %40 = arith.mulf %38, %39 : vector<4x32xf32>
    %cst_31 = arith.constant dense<0.000000e+00> : vector<32xf32>
    %41 = vector.multi_reduction <add>, %40, %cst_31 [0] : vector<4x32xf32> to vector<32xf32>
    %42 = vector.shape_cast %41 : vector<32xf32> to vector<1x32xf32>
    %43 = vector.broadcast %42 : vector<1x32xf32> to vector<64x32xf32>
    %44 = arith.mulf %23, %43 : vector<64x32xf32>
    %45 = arith.truncf %44 : vector<64x32xf32> to vector<64x32xbf16>
    %c0_32 = arith.constant 0 : index
    %c0_33 = arith.constant 0 : index
    %46 = vector.load %arg15[%c0_32, %c0_33] : memref<32x4xbf16, #tpu.memory_space<vmem>>, vector<32x4xbf16>
    %cst_34 = arith.constant dense<0.000000e+00> : vector<64x4xf32>
    %47 = tpu.matmul %45, %46, %cst_34 {dimension_numbers = #tpu.dot_dimension_numbers<[1], [0], [0], [1], [0, 0, 1, 1], [], []>} : vector<64x32xbf16>, vector<32x4xbf16>, vector<64x4xf32> -> vector<64x4xf32>
    %c0_35 = arith.constant 0 : index
    %c0_36 = arith.constant 0 : index
    %48 = vector.load %arg12[%c0_35, %c0_36] : memref<4x4xbf16, #tpu.memory_space<vmem>>, vector<4x4xbf16>
    %cst_37 = arith.constant dense<0.000000e+00> : vector<64x4xf32>
    %49 = tpu.matmul %10, %48, %cst_37 {dimension_numbers = #tpu.dot_dimension_numbers<[1], [0], [0], [1], [0, 0, 1, 1], [], []>} : vector<64x4xbf16>, vector<4x4xbf16>, vector<64x4xf32> -> vector<64x4xf32>
    %c0_38 = arith.constant 0 : index
    %c0_39 = arith.constant 0 : index
    %50 = vector.load %arg13[%c0_38, %c0_39] : memref<1x4xf32, #tpu.memory_space<vmem>>, vector<1x4xf32>
    %51 = vector.broadcast %50 : vector<1x4xf32> to vector<64x4xf32>
    %52 = arith.addf %49, %51 : vector<64x4xf32>
    %53 = arith.addf %47, %52 : vector<64x4xf32>
    %c0_40 = arith.constant 0 : index
    %c0_41 = arith.constant 0 : index
    %c0_42 = arith.constant 0 : index
    %54 = vector.load %arg16[%c0_40, %c0_41, %c0_42] : memref<1x64x4xf32, #tpu.memory_space<vmem>>, vector<1x64x4xf32>
    %55 = vector.shape_cast %54 : vector<1x64x4xf32> to vector<64x4xf32>
    %56 = vector.shape_cast %53 : vector<64x4xf32> to vector<1x64x4xf32>
    tpu.vector_store %arg16[%c0_40, %c0_41, %c0_42], %56 {strides = array<i32>} : memref<1x64x4xf32, #tpu.memory_space<vmem>>, vector<1x64x4xf32>,
    %cst_43 = arith.constant dense<0.000000e+00> : vector<4xf32>
    %57 = vector.multi_reduction <add>, %53, %cst_43 [0] : vector<64x4xf32> to vector<4xf32>
    %58 = vector.shape_cast %57 : vector<4xf32> to vector<1x4xf32>
    %c0_44 = arith.constant 0 : index
    %c0_45 = arith.constant 0 : index
    %c0_46 = arith.constant 0 : index
    %59 = vector.load %arg17[%c0_44, %c0_45, %c0_46] : memref<1x2x4xf32, #tpu.memory_space<vmem>>, vector<1x1x4xf32>
    %60 = vector.shape_cast %59 : vector<1x1x4xf32> to vector<1x4xf32>
    %61 = vector.shape_cast %58 : vector<1x4xf32> to vector<1x1x4xf32>
    tpu.vector_store %arg17[%c0_44, %c0_45, %c0_46], %61 {strides = array<i32>} : memref<1x2x4xf32, #tpu.memory_space<vmem>>, vector<1x1x4xf32>,
    %62 = arith.mulf %53, %53 : vector<64x4xf32>
    %cst_47 = arith.constant dense<0.000000e+00> : vector<4xf32>
    %63 = vector.multi_reduction <add>, %62, %cst_47 [0] : vector<64x4xf32> to vector<4xf32>
    %64 = vector.shape_cast %63 : vector<4xf32> to vector<1x4xf32>
    %c0_48 = arith.constant 0 : index
    %c1 = arith.constant 1 : index
    %c0_49 = arith.constant 0 : index
    %65 = vector.load %arg17[%c0_48, %c1, %c0_49] : memref<1x2x4xf32, #tpu.memory_space<vmem>>, vector<1x1x4xf32>
    %66 = vector.shape_cast %65 : vector<1x1x4xf32> to vector<1x4xf32>
    %67 = vector.shape_cast %64 : vector<1x4xf32> to vector<1x1x4xf32>
    tpu.vector_store %arg17[%c0_48, %c1, %c0_49], %67 {strides = array<i32>} : memref<1x2x4xf32, #tpu.memory_space<vmem>>, vector<1x1x4xf32>,
    return
  }
  func.func @transform_0(%arg0: i32) -> (i32, i32, i32) {
    %c0_i32 = arith.constant 0 : i32
    %c0_i32_0 = arith.constant 0 : i32
    %c0_i32_1 = arith.constant 0 : i32
    return %arg0, %c0_i32, %c0_i32_0 : i32, i32, i32
  }
  func.func @transform_1(%arg0: i32) -> (i32, i32) {
    %c0_i32 = arith.constant 0 : i32
    %c0_i32_0 = arith.constant 0 : i32
    %c0_i32_1 = arith.constant 0 : i32
    return %c0_i32, %c0_i32_0 : i32, i32
  }
  func.func @transform_2(%arg0: i32) -> (i32, i32) {
    %c0_i32 = arith.constant 0 : i32
    %c0_i32_0 = arith.constant 0 : i32
    %c0_i32_1 = arith.constant 0 : i32
    return %c0_i32, %c0_i32_0 : i32, i32
  }
  func.func @transform_3(%arg0: i32) -> (i32, i32) {
    %c0_i32 = arith.constant 0 : i32
    %c0_i32_0 = arith.constant 0 : i32
    %c0_i32_1 = arith.constant 0 : i32
    return %c0_i32, %c0_i32_0 : i32, i32
  }
  func.func @transform_4(%arg0: i32) -> (i32, i32) {
    %c0_i32 = arith.constant 0 : i32
    %c0_i32_0 = arith.constant 0 : i32
    %c0_i32_1 = arith.constant 0 : i32
    return %c0_i32, %c0_i32_0 : i32, i32
  }
  func.func @transform_5(%arg0: i32) -> (i32, i32) {
    %c0_i32 = arith.constant 0 : i32
    %c0_i32_0 = arith.constant 0 : i32
    %c0_i32_1 = arith.constant 0 : i32
    return %c0_i32, %c0_i32_0 : i32, i32
  }
  func.func @transform_6(%arg0: i32) -> (i32, i32) {
    %c0_i32 = arith.constant 0 : i32
    %c0_i32_0 = arith.constant 0 : i32
    %c0_i32_1 = arith.constant 0 : i32
    return %c0_i32, %c0_i32_0 : i32, i32
  }
  func.func @transform_7(%arg0: i32) -> (i32, i32) {
    %c0_i32 = arith.constant 0 : i32
    %c0_i32_0 = arith.constant 0 : i32
    %c0_i32_1 = arith.constant 0 : i32
    return %c0_i32, %c0_i32_0 : i32, i32
  }
  func.func @transform_8(%arg0: i32) -> (i32, i32) {
    %c0_i32 = arith.constant 0 : i32
    %c0_i32_0 = arith.constant 0 : i32
    %c0_i32_1 = arith.constant 0 : i32
    return %c0_i32, %c0_i32_0 : i32, i32
  }
  func.func @transform_9(%arg0: i32) -> (i32, i32) {
    %c0_i32 = arith.constant 0 : i32
    %c0_i32_0 = arith.constant 0 : i32
    %c0_i32_1 = arith.constant 0 : i32
    return %c0_i32, %c0_i32_0 : i32, i32
  }
  func.func @transform_10(%arg0: i32) -> (i32, i32) {
    %c0_i32 = arith.constant 0 : i32
    %c0_i32_0 = arith.constant 0 : i32
    %c0_i32_1 = arith.constant 0 : i32
    return %c0_i32, %c0_i32_0 : i32, i32
  }
  func.func @transform_11(%arg0: i32) -> (i32, i32) {
    %c0_i32 = arith.constant 0 : i32
    %c0_i32_0 = arith.constant 0 : i32
    %c0_i32_1 = arith.constant 0 : i32
    return %c0_i32, %c0_i32_0 : i32, i32
  }
  func.func @transform_12(%arg0: i32) -> (i32, i32) {
    %c0_i32 = arith.constant 0 : i32
    %c0_i32_0 = arith.constant 0 : i32
    %c0_i32_1 = arith.constant 0 : i32
    return %c0_i32, %c0_i32_0 : i32, i32
  }
  func.func @transform_13(%arg0: i32) -> (i32, i32) {
    %c0_i32 = arith.constant 0 : i32
    %c0_i32_0 = arith.constant 0 : i32
    %c0_i32_1 = arith.constant 0 : i32
    return %c0_i32, %c0_i32_0 : i32, i32
  }
  func.func @transform_14(%arg0: i32) -> (i32, i32) {
    %c0_i32 = arith.constant 0 : i32
    %c0_i32_0 = arith.constant 0 : i32
    %c0_i32_1 = arith.constant 0 : i32
    return %c0_i32, %c0_i32_0 : i32, i32
  }
  func.func @transform_15(%arg0: i32) -> (i32, i32, i32) {
    %c0_i32 = arith.constant 0 : i32
    %c0_i32_0 = arith.constant 0 : i32
    %c0_i32_1 = arith.constant 0 : i32
    return %arg0, %c0_i32, %c0_i32_0 : i32, i32, i32
  }
  func.func @transform_16(%arg0: i32) -> (i32, i32, i32) {
    %c0_i32 = arith.constant 0 : i32
    %c0_i32_0 = arith.constant 0 : i32
    %c0_i32_1 = arith.constant 0 : i32
    return %arg0, %c0_i32, %c0_i32_0 : i32, i32, i32
  }
}

</mosaic_0001>

<llo_original>
// kernel: mynet_forward.6
$region0: #{mynet_forward.6}
  #allocation0 [shape = 'u32[]', space=smem, size = 0x4, offset = 0x4, fixed_abs, tag = 'smem constant byte address 0x4 - core index']
  #allocation1 [shape = 'u32[144,128]{1,0:T(1,128)}', space=vmem, size = 0x12000, scoped, tag = 'internal scratch']
  %s0 = inlined_call_operand.vmem [shape: f32[128,12], index: 0, kind: input, shape index: {}]
  %s1 = inlined_call_operand.vmem [shape: bf16[12,4], index: 1, kind: input, shape index: {}]
  %s2 = inlined_call_operand.hbm [shape: f32[1,4], index: 2, kind: input, shape index: {}]
  %s3 = inlined_call_operand.vmem [shape: f32[128,4], index: 3, kind: output, shape index: {}]
  %s4 = sld [smem:[#allocation0]]
  $region26: #{mynet_forward.6} parent=0
    _
  %s6 = ssub.s32 1, %s4
  %s7 = scalar_select 0, %s6, %s4
  $region1: #{mynet_forward.6} parent=0
    #allocation2 [shape = 'u8[512]{0}', space=vmem, size = 0x400, scoped, tag = 'input window, operand 2, single buffered']
    #allocation3 [shape = 's32[1]{0}', space=sflag, size = 0x4, scoped, tag = 'scoped memory for mynet_forward.6']
    %8 = vsyncpa [#allocation3], 0
    // Predicated region
    $region2: #{mynet_forward.6} parent=1 // pred_check
      _
    $region3: #{mynet_forward.6} parent=1 // pred_check_branch
      %10 = sbr.rel (0) target = $region5
    $region4: #{mynet_forward.6} parent=1 // pred_region
      _
    $region5: #{mynet_forward.6} parent=1 // pred_fallthru
      _
    // Predicated region
    $region6: #{mynet_forward.6} parent=1 // pred_check
      _
    $region7: #{mynet_forward.6} parent=1 // pred_check_branch
      %12 = sbr.rel (0) target = $region9
    $region8: #{mynet_forward.6} parent=1 // pred_region
      _
    $region9: #{mynet_forward.6} parent=1 // pred_fallthru
      _
    // Predicated region
    $region10: #{mynet_forward.6} parent=1 // pred_check
      _
    $region11: #{mynet_forward.6} parent=1 // pred_check_branch
      %14 = sbr.rel (0) target = $region13
    $region12: #{mynet_forward.6} parent=1 // pred_region
      %s16 = ssub.s32 16, 16
      %17 = vsyncadd [#allocation3], %s16
      %s19 = sshll.u32 [#allocation2], 4
      %s20 = int_to_ptr.vmem [resolvable:$true] %s19
      %22 = dma.hbm_to_vmem [thread:$0]  %s2, 16, %s20, [#allocation3]
    $region13: #{mynet_forward.6} parent=1 // pred_fallthru
      _
    // Predicated region
    $region14: #{mynet_forward.6} parent=1 // pred_check
      _
    $region15: #{mynet_forward.6} parent=1 // pred_check_branch
      %24 = sbr.rel (0) target = $region17
    $region16: #{mynet_forward.6} parent=1 // pred_region
      %25 = dma.done [#allocation3], 16
    $region17: #{mynet_forward.6} parent=1 // pred_fallthru
      _
    %v27 = vld [vmem:[%s0] sm:$0xff]
    %v28 = vld [vmem:[%s0 + $0x8] sm:$0xff]
    %v29 = vld [vmem:[%s0 + $0x10] sm:$0xff]
    %v30 = vld [vmem:[%s0 + $0x18] sm:$0xff]
    %v31 = vld [vmem:[%s0 + $0x20] sm:$0xff]
    %v32 = vld [vmem:[%s0 + $0x28] sm:$0xff]
    %v33 = vld [vmem:[%s0 + $0x30] sm:$0xff]
    %v34 = vld [vmem:[%s0 + $0x38] sm:$0xff]
    %v35 = vld [vmem:[%s0 + $0x40] sm:$0xff]
    %v36 = vld [vmem:[%s0 + $0x48] sm:$0xff]
    %v37 = vld [vmem:[%s0 + $0x50] sm:$0xff]
    %v38 = vld [vmem:[%s0 + $0x58] sm:$0xff]
    %v39 = vld [vmem:[%s0 + $0x60] sm:$0xff]
    %v40 = vld [vmem:[%s0 + $0x68] sm:$0xff]
    %v41 = vld [vmem:[%s0 + $0x70] sm:$0xff]
    %v42 = vld [vmem:[%s0 + $0x78] sm:$0xff]
    %v43 = vpack.c.bf16 %v28, %v27
    %v44 = vpack.c.bf16 %v30, %v29
    %v45 = vpack.c.bf16 %v32, %v31
    %v46 = vpack.c.bf16 %v34, %v33
    %v47 = vpack.c.bf16 %v36, %v35
    %v48 = vpack.c.bf16 %v38, %v37
    %v49 = vpack.c.bf16 %v40, %v39
    %v50 = vpack.c.bf16 %v42, %v41
    %v51 = vld [vmem:[%s1] sm:$0xf]
    %v52 = vld [vmem:[%s1 + $0x4] sm:$0x3]
    %v53 = vld [vmem:[#allocation2] sm:$0x1]
    %v55 = vlaneseq
    %v56 = vshrl.u32 %v55, 7
    %v57 = vsub.s32 0, %v56
    %v58 = vrot.slane %v53, %v57
    %v62 = vunpack.c.l.b16 %v51
    %v63 = vunpack.c.l.b16 %v52
    %v64 = vpack.c.b16 %v63, %v62
    %vm65 = vcmask 97280
    %v67 = vsel %vm65, %v43, 0
    %v70 = vsel %vm65, %v44, 0
    %v73 = vsel %vm65, %v45, 0
    %v76 = vsel %vm65, %v46, 0
    %v79 = vsel %vm65, %v47, 0
    %v82 = vsel %vm65, %v48, 0
    %v85 = vsel %vm65, %v49, 0
    %v88 = vsel %vm65, %v50, 0
    %vm90 = vcmask 1045504
    %v92 = vsel %vm90, %v64, 0
    %94 = vmatprep.subr.bf16.mxu0 0
    %95 = vmatpush1.bf16.msra.mxu0 0
    %96 = vmatprep.subr.bf16.mxu0 0
    %97 = vmatpush1.bf16.msra.mxu0 0
    %98 = vmatprep.subr.bf16.mxu0 0
    %99 = vmatpush1.bf16.msra.mxu0 0
    %100 = vmatprep.subr.bf16.mxu0 0
    %101 = vmatpush1.bf16.msra.mxu0 0
    %102 = vmatprep.subr.bf16.mxu0 0
    %103 = vmatpush1.bf16.msra.mxu0 0
    %104 = vmatprep.subr.bf16.mxu0 0
    %105 = vmatpush1.bf16.msra.mxu0 0
    %106 = vmatprep.subr.bf16.mxu0 0
    %107 = vmatpush1.bf16.msra.mxu0 0
    %108 = vmatprep.subr.bf16.mxu0 0
    %109 = vmatpush1.bf16.msra.mxu0 %v92
    %110 = vmatprep.subr.bf16.mxu0 0
    %111 = vmatpush2.bf16.msra.mxu0 0
    %112 = vmatprep.subr.bf16.mxu0 0
    %113 = vmatpush2.bf16.msra.mxu0 0
    %114 = vmatprep.subr.bf16.mxu0 0
    %115 = vmatpush2.bf16.msra.mxu0 0
    %116 = vmatprep.subr.bf16.mxu0 0
    %117 = vmatpush2.bf16.msra.mxu0 0
    %118 = vmatprep.subr.bf16.mxu0 0
    %119 = vmatpush2.bf16.msra.mxu0 0
    %120 = vmatprep.subr.bf16.mxu0 0
    %121 = vmatpush2.bf16.msra.mxu0 0
    %122 = vmatprep.subr.bf16.mxu0 0
    %123 = vmatpush2.bf16.msra.mxu0 0
    %124 = vmatprep.subr.bf16.mxu0 0
    %125 = vmatpush2.bf16.msra.mxu0 0
    %126 = vmatprep.mubr.bf16.mxu0 0
    %127 = vmatmul.mubr.bf16.gmra.mxu0 %v67
    %v128 = vpop.f32.mrf.mxu0
    %v129 = vadd.f32 %v58, %v128
    %v130 = vpop.f32.mrf.mxu0
    %v131 = vpop.f32.mrf.mxu0
    %v132 = vadd.f32 %v58, %v131
    %v133 = vpop.f32.mrf.mxu0
    %134 = vmatprep.mubr.bf16.mxu0 0
    %135 = vmatmul.mubr.bf16.gmra.mxu0 %v70
    %v136 = vpop.f32.mrf.mxu0
    %v137 = vadd.f32 %v58, %v136
    %v138 = vpop.f32.mrf.mxu0
    %v139 = vpop.f32.mrf.mxu0
    %v140 = vadd.f32 %v58, %v139
    %v141 = vpop.f32.mrf.mxu0
    %142 = vmatprep.mubr.bf16.mxu0 0
    %143 = vmatmul.mubr.bf16.gmra.mxu0 %v73
    %v144 = vpop.f32.mrf.mxu0
    %v145 = vadd.f32 %v58, %v144
    %v146 = vpop.f32.mrf.mxu0
    %v147 = vpop.f32.mrf.mxu0
    %v148 = vadd.f32 %v58, %v147
    %v149 = vpop.f32.mrf.mxu0
    %150 = vmatprep.mubr.bf16.mxu0 0
    %151 = vmatmul.mubr.bf16.gmra.mxu0 %v76
    %v152 = vpop.f32.mrf.mxu0
    %v153 = vadd.f32 %v58, %v152
    %v154 = vpop.f32.mrf.mxu0
    %v155 = vpop.f32.mrf.mxu0
    %v156 = vadd.f32 %v58, %v155
    %v157 = vpop.f32.mrf.mxu0
    %158 = vmatprep.mubr.bf16.mxu0 0
    %159 = vmatmul.mubr.bf16.gmra.mxu0 %v79
    %v160 = vpop.f32.mrf.mxu0
    %v161 = vadd.f32 %v58, %v160
    %v162 = vpop.f32.mrf.mxu0
    %v163 = vpop.f32.mrf.mxu0
    %v164 = vadd.f32 %v58, %v163
    %v165 = vpop.f32.mrf.mxu0
    %166 = vmatprep.mubr.bf16.mxu0 0
    %167 = vmatmul.mubr.bf16.gmra.mxu0 %v82
    %v168 = vpop.f32.mrf.mxu0
    %v169 = vadd.f32 %v58, %v168
    %v170 = vpop.f32.mrf.mxu0
    %v171 = vpop.f32.mrf.mxu0
    %v172 = vadd.f32 %v58, %v171
    %v173 = vpop.f32.mrf.mxu0
    %174 = vmatprep.mubr.bf16.mxu0 0
    %175 = vmatmul.mubr.bf16.gmra.mxu0 %v85
    %v176 = vpop.f32.mrf.mxu0
    %v177 = vadd.f32 %v58, %v176
    %v178 = vpop.f32.mrf.mxu0
    %v179 = vpop.f32.mrf.mxu0
    %v180 = vadd.f32 %v58, %v179
    %v181 = vpop.f32.mrf.mxu0
    %182 = vmatprep.mubr.bf16.mxu0 0
    %183 = vmatmul.mubr.bf16.gmra.mxu0 %v88
    %v184 = vpop.f32.mrf.mxu0
    %v185 = vadd.f32 %v58, %v184
    %v186 = vpop.f32.mrf.mxu0
    %v187 = vpop.f32.mrf.mxu0
    %v188 = vadd.f32 %v58, %v187
    %v189 = vpop.f32.mrf.mxu0
    %190 = vdwg.mxu0
    %vm191 = vcmask 31744
    %192 = vst.msk [vmem:[%s3] sm:$0xff] %vm191, %v129
    %193 = vst.msk [vmem:[%s3 + $0x8] sm:$0xff] %vm191, %v132
    %194 = vst.msk [vmem:[%s3 + $0x10] sm:$0xff] %vm191, %v137
    %195 = vst.msk [vmem:[%s3 + $0x18] sm:$0xff] %vm191, %v140
    %196 = vst.msk [vmem:[%s3 + $0x20] sm:$0xff] %vm191, %v145
    %197 = vst.msk [vmem:[%s3 + $0x28] sm:$0xff] %vm191, %v148
    %198 = vst.msk [vmem:[%s3 + $0x30] sm:$0xff] %vm191, %v153
    %199 = vst.msk [vmem:[%s3 + $0x38] sm:$0xff] %vm191, %v156
    %200 = vst.msk [vmem:[%s3 + $0x40] sm:$0xff] %vm191, %v161
    %201 = vst.msk [vmem:[%s3 + $0x48] sm:$0xff] %vm191, %v164
    %202 = vst.msk [vmem:[%s3 + $0x50] sm:$0xff] %vm191, %v169
    %203 = vst.msk [vmem:[%s3 + $0x58] sm:$0xff] %vm191, %v172
    %204 = vst.msk [vmem:[%s3 + $0x60] sm:$0xff] %vm191, %v177
    %205 = vst.msk [vmem:[%s3 + $0x68] sm:$0xff] %vm191, %v180
    %206 = vst.msk [vmem:[%s3 + $0x70] sm:$0xff] %vm191, %v185
    %207 = vst.msk [vmem:[%s3 + $0x78] sm:$0xff] %vm191, %v188
    // Predicated region
    $region18: #{mynet_forward.6} parent=1 // pred_check
      _
    $region19: #{mynet_forward.6} parent=1 // pred_check_branch
      %209 = sbr.rel (0) target = $region21
    $region20: #{mynet_forward.6} parent=1 // pred_region
      _
    $region21: #{mynet_forward.6} parent=1 // pred_fallthru
      _
    // Predicated region
    $region22: #{mynet_forward.6} parent=1 // pred_check
      _
    $region23: #{mynet_forward.6} parent=1 // pred_check_branch
      %211 = sbr.rel (0) target = $region25
    $region24: #{mynet_forward.6} parent=1 // pred_region
      _
    $region25: #{mynet_forward.6} parent=1 // pred_fallthru
      _
    %212 = vsyncpa [#allocation3], 1

// kernel: mynet_forward.11
$region0: #{mynet_forward.11}
  #allocation0 [shape = 'u32[]', space=smem, size = 0x4, offset = 0x4, fixed_abs, tag = 'smem constant byte address 0x4 - core index']
  #allocation1 [shape = 'u32[144,128]{1,0:T(1,128)}', space=vmem, size = 0x12000, scoped, tag = 'internal scratch']
  #allocation2 [shape = 'f32[1,1]{1,0:T(1,128)S(1)}', space=vmem, size = 0x200, scoped, tag = 'scoped memory for mynet_forward.11']
  %s0 = inlined_call_operand.vmem [shape: f32[128,4], index: 0, kind: input, shape index: {}]
  %s1 = inlined_call_operand.vmem [shape: f32[1,4], index: 1, kind: input, shape index: {}]
  %s2 = inlined_call_operand.vmem [shape: f32[1,4], index: 2, kind: input, shape index: {}]
  %s3 = inlined_call_operand.vmem [shape: bf16[4,128], index: 3, kind: input, shape index: {}]
  %s4 = inlined_call_operand.vmem [shape: f32[1,128], index: 4, kind: input, shape index: {}]
  %s5 = inlined_call_operand.vmem [shape: bf16[128,1], index: 5, kind: input, shape index: {}]
  %s6 = inlined_call_operand.<no memory space> [shape: f32[1,1], index: 6, kind: input, shape index: {}]
  %s7 = inlined_call_operand.vmem [shape: f32[128,1], index: 7, kind: output, shape index: {}]
  %s8 = sld [smem:[#allocation0]]
  $region38: #{mynet_forward.11} parent=0
    _
  %s10 = ssub.s32 1, %s8
  %s11 = scalar_select 0, %s10, %s8
  %v12 = vstv %s6
  %13 = vst [vmem:[#allocation2] sm:$0x1] %v12
  // Predicated region
  $region2: #{mynet_forward.11} parent=0 // pred_check
    _
  $region3: #{mynet_forward.11} parent=0 // pred_check_branch
    %15 = sbr.rel (0) target = $region5
  $region4: #{mynet_forward.11} parent=0 // pred_region
    _
  $region5: #{mynet_forward.11} parent=0 // pred_fallthru
    _
  // Predicated region
  $region6: #{mynet_forward.11} parent=0 // pred_check
    _
  $region7: #{mynet_forward.11} parent=0 // pred_check_branch
    %17 = sbr.rel (0) target = $region9
  $region8: #{mynet_forward.11} parent=0 // pred_region
    _
  $region9: #{mynet_forward.11} parent=0 // pred_fallthru
    _
  // Predicated region
  $region10: #{mynet_forward.11} parent=0 // pred_check
    _
  $region11: #{mynet_forward.11} parent=0 // pred_check_branch
    %19 = sbr.rel (0) target = $region13
  $region12: #{mynet_forward.11} parent=0 // pred_region
    _
  $region13: #{mynet_forward.11} parent=0 // pred_fallthru
    _
  // Predicated region
  $region14: #{mynet_forward.11} parent=0 // pred_check
    _
  $region15: #{mynet_forward.11} parent=0 // pred_check_branch
    %21 = sbr.rel (0) target = $region17
  $region16: #{mynet_forward.11} parent=0 // pred_region
    _
  $region17: #{mynet_forward.11} parent=0 // pred_fallthru
    _
  // Predicated region
  $region18: #{mynet_forward.11} parent=0 // pred_check
    _
  $region19: #{mynet_forward.11} parent=0 // pred_check_branch
    %23 = sbr.rel (0) target = $region21
  $region20: #{mynet_forward.11} parent=0 // pred_region
    _
  $region21: #{mynet_forward.11} parent=0 // pred_fallthru
    _
  // Predicated region
  $region22: #{mynet_forward.11} parent=0 // pred_check
    _
  $region23: #{mynet_forward.11} parent=0 // pred_check_branch
    %25 = sbr.rel (0) target = $region25
  $region24: #{mynet_forward.11} parent=0 // pred_region
    _
  $region25: #{mynet_forward.11} parent=0 // pred_fallthru
    _
  // Predicated region
  $region26: #{mynet_forward.11} parent=0 // pred_check
    _
  $region27: #{mynet_forward.11} parent=0 // pred_check_branch
    %27 = sbr.rel (0) target = $region29
  $region28: #{mynet_forward.11} parent=0 // pred_region
    _
  $region29: #{mynet_forward.11} parent=0 // pred_fallthru
    _
  %v29 = vld [vmem:[%s0] sm:$0xff]
  %v30 = vld [vmem:[%s0 + $0x8] sm:$0xff]
  %v31 = vld [vmem:[%s0 + $0x10] sm:$0xff]
  %v32 = vld [vmem:[%s0 + $0x18] sm:$0xff]
  %v33 = vld [vmem:[%s0 + $0x20] sm:$0xff]
  %v34 = vld [vmem:[%s0 + $0x28] sm:$0xff]
  %v35 = vld [vmem:[%s0 + $0x30] sm:$0xff]
  %v36 = vld [vmem:[%s0 + $0x38] sm:$0xff]
  %v37 = vld [vmem:[%s0 + $0x40] sm:$0xff]
  %v38 = vld [vmem:[%s0 + $0x48] sm:$0xff]
  %v39 = vld [vmem:[%s0 + $0x50] sm:$0xff]
  %v40 = vld [vmem:[%s0 + $0x58] sm:$0xff]
  %v41 = vld [vmem:[%s0 + $0x60] sm:$0xff]
  %v42 = vld [vmem:[%s0 + $0x68] sm:$0xff]
  %v43 = vld [vmem:[%s0 + $0x70] sm:$0xff]
  %v44 = vld [vmem:[%s0 + $0x78] sm:$0xff]
  %v45 = vld [vmem:[%s1] sm:$0x1]
  %v47 = vlaneseq
  %v48 = vshrl.u32 %v47, 7
  %v49 = vsub.s32 0, %v48
  %v50 = vrot.slane %v45, %v49
  %v52 = vmul.f32 %v29, %v50
  %v53 = vmul.f32 %v30, %v50
  %v54 = vmul.f32 %v31, %v50
  %v55 = vmul.f32 %v32, %v50
  %v56 = vmul.f32 %v33, %v50
  %v57 = vmul.f32 %v34, %v50
  %v58 = vmul.f32 %v35, %v50
  %v59 = vmul.f32 %v36, %v50
  %v60 = vmul.f32 %v37, %v50
  %v61 = vmul.f32 %v38, %v50
  %v62 = vmul.f32 %v39, %v50
  %v63 = vmul.f32 %v40, %v50
  %v64 = vmul.f32 %v41, %v50
  %v65 = vmul.f32 %v42, %v50
  %v66 = vmul.f32 %v43, %v50
  %v67 = vmul.f32 %v44, %v50
  %v68 = vld [vmem:[%s2] sm:$0x1]
  %v70 = vlaneseq
  %v71 = vshrl.u32 %v70, 7
  %v72 = vsub.s32 0, %v71
  %v73 = vrot.slane %v68, %v72
  %v75 = vadd.f32 %v52, %v73
  %v76 = vadd.f32 %v53, %v73
  %v77 = vadd.f32 %v54, %v73
  %v78 = vadd.f32 %v55, %v73
  %v79 = vadd.f32 %v56, %v73
  %v80 = vadd.f32 %v57, %v73
  %v81 = vadd.f32 %v58, %v73
  %v82 = vadd.f32 %v59, %v73
  %v83 = vadd.f32 %v60, %v73
  %v84 = vadd.f32 %v61, %v73
  %v85 = vadd.f32 %v62, %v73
  %v86 = vadd.f32 %v63, %v73
  %v87 = vadd.f32 %v64, %v73
  %v88 = vadd.f32 %v65, %v73
  %v89 = vadd.f32 %v66, %v73
  %v90 = vadd.f32 %v67, %v73
  %v91 = vpack.c.bf16 %v76, %v75
  %v92 = vpack.c.bf16 %v78, %v77
  %v93 = vpack.c.bf16 %v80, %v79
  %v94 = vpack.c.bf16 %v82, %v81
  %v95 = vpack.c.bf16 %v84, %v83
  %v96 = vpack.c.bf16 %v86, %v85
  %v97 = vpack.c.bf16 %v88, %v87
  %v98 = vpack.c.bf16 %v90, %v89
  %v99 = vld [vmem:[%s3] sm:$0x3]
  %v100 = vld [vmem:[%s4] sm:$0x1]
  %v102 = vlaneseq
  %v103 = vshrl.u32 %v102, 7
  %v104 = vsub.s32 0, %v103
  %v105 = vrot.slane %v100, %v104
  %vm107 = vcmask 31744
  %v109 = vsel %vm107, %v91, 0
  %v112 = vsel %vm107, %v92, 0
  %v115 = vsel %vm107, %v93, 0
  %v118 = vsel %vm107, %v94, 0
  %v121 = vsel %vm107, %v95, 0
  %v124 = vsel %vm107, %v96, 0
  %v127 = vsel %vm107, %v97, 0
  %v130 = vsel %vm107, %v98, 0
  %vm132 = vcmask 1041408
  %v134 = vsel %vm132, %v99, 0
  %136 = vmatprep.subr.bf16.mxu0 0
  %137 = vmatpush1.bf16.msra.mxu0 0
  %138 = vmatprep.subr.bf16.mxu0 0
  %139 = vmatpush1.bf16.msra.mxu0 0
  %140 = vmatprep.subr.bf16.mxu0 0
  %141 = vmatpush1.bf16.msra.mxu0 0
  %142 = vmatprep.subr.bf16.mxu0 0
  %143 = vmatpush1.bf16.msra.mxu0 0
  %144 = vmatprep.subr.bf16.mxu0 0
  %145 = vmatpush1.bf16.msra.mxu0 0
  %146 = vmatprep.subr.bf16.mxu0 0
  %147 = vmatpush1.bf16.msra.mxu0 0
  %148 = vmatprep.subr.bf16.mxu0 0
  %149 = vmatpush1.bf16.msra.mxu0 0
  %150 = vmatprep.subr.bf16.mxu0 0
  %151 = vmatpush1.bf16.msra.mxu0 %v134
  %152 = vmatprep.subr.bf16.mxu0 0
  %153 = vmatpush2.bf16.msra.mxu0 0
  %154 = vmatprep.subr.bf16.mxu0 0
  %155 = vmatpush2.bf16.msra.mxu0 0
  %156 = vmatprep.subr.bf16.mxu0 0
  %157 = vmatpush2.bf16.msra.mxu0 0
  %158 = vmatprep.subr.bf16.mxu0 0
  %159 = vmatpush2.bf16.msra.mxu0 0
  %160 = vmatprep.subr.bf16.mxu0 0
  %161 = vmatpush2.bf16.msra.mxu0 0
  %162 = vmatprep.subr.bf16.mxu0 0
  %163 = vmatpush2.bf16.msra.mxu0 0
  %164 = vmatprep.subr.bf16.mxu0 0
  %165 = vmatpush2.bf16.msra.mxu0 0
  %166 = vmatprep.subr.bf16.mxu0 0
  %167 = vmatpush2.bf16.msra.mxu0 0
  %168 = vmatprep.mubr.bf16.mxu0 0
  %169 = vmatmul.mubr.bf16.gmra.mxu0 %v109
  %v170 = vpop.f32.mrf.mxu0
  %v171 = vadd.f32 %v105, %v170
  %v172 = vpop.f32.mrf.mxu0
  %v173 = vpop.f32.mrf.mxu0
  %v174 = vadd.f32 %v105, %v173
  %v175 = vpop.f32.mrf.mxu0
  %176 = vmatprep.mubr.bf16.mxu0 0
  %177 = vmatmul.mubr.bf16.gmra.mxu0 %v112
  %v178 = vpop.f32.mrf.mxu0
  %v179 = vadd.f32 %v105, %v178
  %v180 = vpop.f32.mrf.mxu0
  %v181 = vpop.f32.mrf.mxu0
  %v182 = vadd.f32 %v105, %v181
  %v183 = vpop.f32.mrf.mxu0
  %184 = vmatprep.mubr.bf16.mxu0 0
  %185 = vmatmul.mubr.bf16.gmra.mxu0 %v115
  %v186 = vpop.f32.mrf.mxu0
  %v187 = vadd.f32 %v105, %v186
  %v188 = vpop.f32.mrf.mxu0
  %v189 = vpop.f32.mrf.mxu0
  %v190 = vadd.f32 %v105, %v189
  %v191 = vpop.f32.mrf.mxu0
  %192 = vmatprep.mubr.bf16.mxu0 0
  %193 = vmatmul.mubr.bf16.gmra.mxu0 %v118
  %v194 = vpop.f32.mrf.mxu0
  %v195 = vadd.f32 %v105, %v194
  %v196 = vpop.f32.mrf.mxu0
  %v197 = vpop.f32.mrf.mxu0
  %v198 = vadd.f32 %v105, %v197
  %v199 = vpop.f32.mrf.mxu0
  %200 = vmatprep.mubr.bf16.mxu0 0
  %201 = vmatmul.mubr.bf16.gmra.mxu0 %v121
  %v202 = vpop.f32.mrf.mxu0
  %v203 = vadd.f32 %v105, %v202
  %v204 = vpop.f32.mrf.mxu0
  %v205 = vpop.f32.mrf.mxu0
  %v206 = vadd.f32 %v105, %v205
  %v207 = vpop.f32.mrf.mxu0
  %208 = vmatprep.mubr.bf16.mxu0 0
  %209 = vmatmul.mubr.bf16.gmra.mxu0 %v124
  %v210 = vpop.f32.mrf.mxu0
  %v211 = vadd.f32 %v105, %v210
  %v212 = vpop.f32.mrf.mxu0
  %v213 = vpop.f32.mrf.mxu0
  %v214 = vadd.f32 %v105, %v213
  %v215 = vpop.f32.mrf.mxu0
  %216 = vmatprep.mubr.bf16.mxu0 0
  %217 = vmatmul.mubr.bf16.gmra.mxu0 %v127
  %v218 = vpop.f32.mrf.mxu0
  %v219 = vadd.f32 %v105, %v218
  %v220 = vpop.f32.mrf.mxu0
  %v221 = vpop.f32.mrf.mxu0
  %v222 = vadd.f32 %v105, %v221
  %v223 = vpop.f32.mrf.mxu0
  %224 = vmatprep.mubr.bf16.mxu0 0
  %225 = vmatmul.mubr.bf16.gmra.mxu0 %v130
  %v226 = vpop.f32.mrf.mxu0
  %v227 = vadd.f32 %v105, %v226
  %v228 = vpop.f32.mrf.mxu0
  %v229 = vpop.f32.mrf.mxu0
  %v230 = vadd.f32 %v105, %v229
  %v231 = vpop.f32.mrf.mxu0
  %232 = vdwg.mxu0
  %v233 = vmax.f32 %v171, 0.0
  %v234 = vmax.f32 %v174, 0.0
  %v235 = vmax.f32 %v179, 0.0
  %v236 = vmax.f32 %v182, 0.0
  %v237 = vmax.f32 %v187, 0.0
  %v238 = vmax.f32 %v190, 0.0
  %v239 = vmax.f32 %v195, 0.0
  %v240 = vmax.f32 %v198, 0.0
  %v241 = vmax.f32 %v203, 0.0
  %v242 = vmax.f32 %v206, 0.0
  %v243 = vmax.f32 %v211, 0.0
  %v244 = vmax.f32 %v214, 0.0
  %v245 = vmax.f32 %v219, 0.0
  %v246 = vmax.f32 %v222, 0.0
  %v247 = vmax.f32 %v227, 0.0
  %v248 = vmax.f32 %v230, 0.0
  %v249 = vpack.c.bf16 %v234, %v233
  %v250 = vpack.c.bf16 %v236, %v235
  %v251 = vpack.c.bf16 %v238, %v237
  %v252 = vpack.c.bf16 %v240, %v239
  %v253 = vpack.c.bf16 %v242, %v241
  %v254 = vpack.c.bf16 %v244, %v243
  %v255 = vpack.c.bf16 %v246, %v245
  %v256 = vpack.c.bf16 %v248, %v247
  %v257 = vld [vmem:[%s5] sm:$0xf]
  %v258 = vld [vmem:[%s5 + $0x4] sm:$0xf]
  %v259 = vld [vmem:[%s5 + $0x8] sm:$0xf]
  %v260 = vld [vmem:[%s5 + $0xc] sm:$0xf]
  %v261 = vld [vmem:[%s5 + $0x10] sm:$0xf]
  %v262 = vld [vmem:[%s5 + $0x14] sm:$0xf]
  %v263 = vld [vmem:[%s5 + $0x18] sm:$0xf]
  %v264 = vld [vmem:[%s5 + $0x1c] sm:$0xf]
  %v265 = vld [vmem:[%s5 + $0x20] sm:$0xf]
  %v266 = vld [vmem:[%s5 + $0x24] sm:$0xf]
  %v267 = vld [vmem:[%s5 + $0x28] sm:$0xf]
  %v268 = vld [vmem:[%s5 + $0x2c] sm:$0xf]
  %v269 = vld [vmem:[%s5 + $0x30] sm:$0xf]
  %v270 = vld [vmem:[%s5 + $0x34] sm:$0xf]
  %v271 = vld [vmem:[%s5 + $0x38] sm:$0xf]
  %v272 = vld [vmem:[%s5 + $0x3c] sm:$0xf]
  %v273 = vld [vmem:[#allocation2] sm:$0x1]
  %v275 = vlaneseq
  %v276 = vshrl.u32 %v275, 7
  %v277 = vsub.s32 0, %v276
  %v278 = vrot.slane %v273, %v277
  %v296 = vunpack.c.l.b16 %v257
  %v297 = vunpack.c.l.b16 %v258
  %v298 = vunpack.c.l.b16 %v259
  %v299 = vunpack.c.l.b16 %v260
  %v300 = vunpack.c.l.b16 %v261
  %v301 = vunpack.c.l.b16 %v262
  %v302 = vunpack.c.l.b16 %v263
  %v303 = vunpack.c.l.b16 %v264
  %v304 = vunpack.c.l.b16 %v265
  %v305 = vunpack.c.l.b16 %v266
  %v306 = vunpack.c.l.b16 %v267
  %v307 = vunpack.c.l.b16 %v268
  %v308 = vunpack.c.l.b16 %v269
  %v309 = vunpack.c.l.b16 %v270
  %v310 = vunpack.c.l.b16 %v271
  %v311 = vunpack.c.l.b16 %v272
  %v312 = vpack.c.b16 %v297, %v296
  %v313 = vpack.c.b16 %v299, %v298
  %v314 = vpack.c.b16 %v301, %v300
  %v315 = vpack.c.b16 %v303, %v302
  %v316 = vpack.c.b16 %v305, %v304
  %v317 = vpack.c.b16 %v307, %v306
  %v318 = vpack.c.b16 %v309, %v308
  %v319 = vpack.c.b16 %v311, %v310
  %328 = vmatprep.subr.bf16.mxu0 0
  %329 = vmatpush1.bf16.msra.mxu0 %v319
  %330 = vmatprep.subr.bf16.mxu0 0
  %331 = vmatpush1.bf16.msra.mxu0 %v318
  %332 = vmatprep.subr.bf16.mxu0 0
  %333 = vmatpush1.bf16.msra.mxu0 %v317
  %334 = vmatprep.subr.bf16.mxu0 0
  %335 = vmatpush1.bf16.msra.mxu0 %v316
  %336 = vmatprep.subr.bf16.mxu0 0
  %337 = vmatpush1.bf16.msra.mxu0 %v315
  %338 = vmatprep.subr.bf16.mxu0 0
  %339 = vmatpush1.bf16.msra.mxu0 %v314
  %340 = vmatprep.subr.bf16.mxu0 0
  %341 = vmatpush1.bf16.msra.mxu0 %v313
  %342 = vmatprep.subr.bf16.mxu0 0
  %343 = vmatpush1.bf16.msra.mxu0 %v312
  %344 = vmatprep.subr.bf16.mxu0 0
  %345 = vmatpush2.bf16.msra.mxu0 0
  %346 = vmatprep.subr.bf16.mxu0 0
  %347 = vmatpush2.bf16.msra.mxu0 0
  %348 = vmatprep.subr.bf16.mxu0 0
  %349 = vmatpush2.bf16.msra.mxu0 0
  %350 = vmatprep.subr.bf16.mxu0 0
  %351 = vmatpush2.bf16.msra.mxu0 0
  %352 = vmatprep.subr.bf16.mxu0 0
  %353 = vmatpush2.bf16.msra.mxu0 0
  %354 = vmatprep.subr.bf16.mxu0 0
  %355 = vmatpush2.bf16.msra.mxu0 0
  %356 = vmatprep.subr.bf16.mxu0 0
  %357 = vmatpush2.bf16.msra.mxu0 0
  %358 = vmatprep.subr.bf16.mxu0 0
  %359 = vmatpush2.bf16.msra.mxu0 0
  %360 = vmatprep.mubr.bf16.mxu0 0
  %361 = vmatmul.mubr.bf16.gmra.mxu0 %v249
  %v362 = vpop.f32.mrf.mxu0
  %v363 = vadd.f32 %v278, %v362
  %v364 = vpop.f32.mrf.mxu0
  %v365 = vpop.f32.mrf.mxu0
  %v366 = vadd.f32 %v278, %v365
  %v367 = vpop.f32.mrf.mxu0
  %368 = vmatprep.mubr.bf16.mxu0 0
  %369 = vmatmul.mubr.bf16.gmra.mxu0 %v250
  %v370 = vpop.f32.mrf.mxu0
  %v371 = vadd.f32 %v278, %v370
  %v372 = vpop.f32.mrf.mxu0
  %v373 = vpop.f32.mrf.mxu0
  %v374 = vadd.f32 %v278, %v373
  %v375 = vpop.f32.mrf.mxu0
  %376 = vmatprep.mubr.bf16.mxu0 0
  %377 = vmatmul.mubr.bf16.gmra.mxu0 %v251
  %v378 = vpop.f32.mrf.mxu0
  %v379 = vadd.f32 %v278, %v378
  %v380 = vpop.f32.mrf.mxu0
  %v381 = vpop.f32.mrf.mxu0
  %v382 = vadd.f32 %v278, %v381
  %v383 = vpop.f32.mrf.mxu0
  %384 = vmatprep.mubr.bf16.mxu0 0
  %385 = vmatmul.mubr.bf16.gmra.mxu0 %v252
  %v386 = vpop.f32.mrf.mxu0
  %v387 = vadd.f32 %v278, %v386
  %v388 = vpop.f32.mrf.mxu0
  %v389 = vpop.f32.mrf.mxu0
  %v390 = vadd.f32 %v278, %v389
  %v391 = vpop.f32.mrf.mxu0
  %392 = vmatprep.mubr.bf16.mxu0 0
  %393 = vmatmul.mubr.bf16.gmra.mxu0 %v253
  %v394 = vpop.f32.mrf.mxu0
  %v395 = vadd.f32 %v278, %v394
  %v396 = vpop.f32.mrf.mxu0
  %v397 = vpop.f32.mrf.mxu0
  %v398 = vadd.f32 %v278, %v397
  %v399 = vpop.f32.mrf.mxu0
  %400 = vmatprep.mubr.bf16.mxu0 0
  %401 = vmatmul.mubr.bf16.gmra.mxu0 %v254
  %v402 = vpop.f32.mrf.mxu0
  %v403 = vadd.f32 %v278, %v402
  %v404 = vpop.f32.mrf.mxu0
  %v405 = vpop.f32.mrf.mxu0
  %v406 = vadd.f32 %v278, %v405
  %v407 = vpop.f32.mrf.mxu0
  %408 = vmatprep.mubr.bf16.mxu0 0
  %409 = vmatmul.mubr.bf16.gmra.mxu0 %v255
  %v410 = vpop.f32.mrf.mxu0
  %v411 = vadd.f32 %v278, %v410
  %v412 = vpop.f32.mrf.mxu0
  %v413 = vpop.f32.mrf.mxu0
  %v414 = vadd.f32 %v278, %v413
  %v415 = vpop.f32.mrf.mxu0
  %416 = vmatprep.mubr.bf16.mxu0 0
  %417 = vmatmul.mubr.bf16.gmra.mxu0 %v256
  %v418 = vpop.f32.mrf.mxu0
  %v419 = vadd.f32 %v278, %v418
  %v420 = vpop.f32.mrf.mxu0
  %v421 = vpop.f32.mrf.mxu0
  %v422 = vadd.f32 %v278, %v421
  %v423 = vpop.f32.mrf.mxu0
  %424 = vdwg.mxu0
  %vm425 = vcmask 7168
  %426 = vst.msk [vmem:[%s7] sm:$0xff] %vm425, %v363
  %427 = vst.msk [vmem:[%s7 + $0x8] sm:$0xff] %vm425, %v366
  %428 = vst.msk [vmem:[%s7 + $0x10] sm:$0xff] %vm425, %v371
  %429 = vst.msk [vmem:[%s7 + $0x18] sm:$0xff] %vm425, %v374
  %430 = vst.msk [vmem:[%s7 + $0x20] sm:$0xff] %vm425, %v379
  %431 = vst.msk [vmem:[%s7 + $0x28] sm:$0xff] %vm425, %v382
  %432 = vst.msk [vmem:[%s7 + $0x30] sm:$0xff] %vm425, %v387
  %433 = vst.msk [vmem:[%s7 + $0x38] sm:$0xff] %vm425, %v390
  %434 = vst.msk [vmem:[%s7 + $0x40] sm:$0xff] %vm425, %v395
  %435 = vst.msk [vmem:[%s7 + $0x48] sm:$0xff] %vm425, %v398
  %436 = vst.msk [vmem:[%s7 + $0x50] sm:$0xff] %vm425, %v403
  %437 = vst.msk [vmem:[%s7 + $0x58] sm:$0xff] %vm425, %v406
  %438 = vst.msk [vmem:[%s7 + $0x60] sm:$0xff] %vm425, %v411
  %439 = vst.msk [vmem:[%s7 + $0x68] sm:$0xff] %vm425, %v414
  %440 = vst.msk [vmem:[%s7 + $0x70] sm:$0xff] %vm425, %v419
  %441 = vst.msk [vmem:[%s7 + $0x78] sm:$0xff] %vm425, %v422
  // Predicated region
  $region30: #{mynet_forward.11} parent=0 // pred_check
    _
  $region31: #{mynet_forward.11} parent=0 // pred_check_branch
    %443 = sbr.rel (0) target = $region33
  $region32: #{mynet_forward.11} parent=0 // pred_region
    _
  $region33: #{mynet_forward.11} parent=0 // pred_fallthru
    _
  // Predicated region
  $region34: #{mynet_forward.11} parent=0 // pred_check
    _
  $region35: #{mynet_forward.11} parent=0 // pred_check_branch
    %445 = sbr.rel (0) target = $region37
  $region36: #{mynet_forward.11} parent=0 // pred_region
    _
  $region37: #{mynet_forward.11} parent=0 // pred_fallthru
    _

// kernel: mynet_forward.8
$region0: #{mynet_forward.8}
  #allocation0 [shape = 'u32[]', space=smem, size = 0x4, offset = 0x4, fixed_abs, tag = 'smem constant byte address 0x4 - core index']
  #allocation1 [shape = 'u32[144,128]{1,0:T(1,128)}', space=vmem, size = 0x12000, scoped, tag = 'internal scratch']
  %s0 = inlined_call_operand.vmem [shape: f32[2,64,4], index: 0, kind: input, shape index: {}]
  %s1 = inlined_call_operand.vmem [shape: f32[1,4], index: 1, kind: input, shape index: {}]
  %s2 = inlined_call_operand.vmem [shape: f32[1,4], index: 2, kind: input, shape index: {}]
  %s3 = inlined_call_operand.vmem [shape: bf16[4,32], index: 3, kind: input, shape index: {}]
  %s4 = inlined_call_operand.vmem [shape: f32[1,32], index: 4, kind: input, shape index: {}]
  %s5 = inlined_call_operand.vmem [shape: bf16[32,32], index: 5, kind: input, shape index: {}]
  %s6 = inlined_call_operand.vmem [shape: f32[1,32], index: 6, kind: input, shape index: {}]
  %s7 = inlined_call_operand.vmem [shape: bf16[4,32], index: 7, kind: input, shape index: {}]
  %s8 = inlined_call_operand.vmem [shape: f32[1,32], index: 8, kind: input, shape index: {}]
  %s9 = inlined_call_operand.vmem [shape: bf16[32,32], index: 9, kind: input, shape index: {}]
  %s10 = inlined_call_operand.vmem [shape: f32[1,32], index: 10, kind: input, shape index: {}]
  %s11 = inlined_call_operand.vmem [shape: bf16[4,4], index: 11, kind: input, shape index: {}]
  %s12 = inlined_call_operand.vmem [shape: f32[1,4], index: 12, kind: input, shape index: {}]
  %s13 = inlined_call_operand.vmem [shape: f32[4,32], index: 13, kind: input, shape index: {}]
  %s14 = inlined_call_operand.vmem [shape: bf16[32,4], index: 14, kind: input, shape index: {}]
  %s15 = inlined_call_operand.vmem [shape: f32[2,64,4], index: 15, kind: output, shape index: {0}]
  %s16 = inlined_call_operand.vmem [shape: f32[2,2,4], index: 16, kind: output, shape index: {1}]
  %17 = xla_tuple %s15, %s16
  %s18 = sld [smem:[#allocation0]]
  $region101: #{mynet_forward.8} parent=0
    _
  %s20 = ssub.s32 1, %s18
  %s21 = scalar_select 0, %s20, %s18
  loop: start=0, step=1, limit=4
  $region2: #{mynet_forward.8} parent=0 // loop_pre_header
    _
  $region3: #{mynet_forward.8} parent=0 // loop_header
    %s23 = sphi 0, %s27
    %p24 = scmp.ge.s32.totalorder %s23, 4
    %s33 = sphi 0, %s35
    %s36 = sphi 0, %s33
    %s37 = sphi 0, %s36
    %s53 = sphi 0, %s37
    %s57 = sphi 0, %s57
    %s59 = sphi 0, %s57
    %s60 = sphi 0, %s59
    %s74 = sphi 0, %s60
    %s78 = sphi 0, %s78
    %s80 = sphi 0, %s78
    %s81 = sphi 0, %s80
    %s95 = sphi 0, %s81
    %s99 = sphi 0, %s99
    %s101 = sphi 0, %s99
    %s102 = sphi 0, %s101
    %s116 = sphi 0, %s102
    %s120 = sphi 0, %s120
    %s122 = sphi 0, %s120
    %s123 = sphi 0, %s122
    %s137 = sphi 0, %s123
    %s141 = sphi 0, %s141
    %s143 = sphi 0, %s141
    %s144 = sphi 0, %s143
    %s158 = sphi 0, %s144
    %s162 = sphi 0, %s162
    %s164 = sphi 0, %s162
    %s165 = sphi 0, %s164
    %s179 = sphi 0, %s165
    %s183 = sphi 0, %s183
    %s185 = sphi 0, %s183
    %s186 = sphi 0, %s185
    %s200 = sphi 0, %s186
    %s204 = sphi 0, %s204
    %s206 = sphi 0, %s204
    %s207 = sphi 0, %s206
    %s221 = sphi 0, %s207
    %s225 = sphi 0, %s225
    %s227 = sphi 0, %s225
    %s228 = sphi 0, %s227
    %s242 = sphi 0, %s228
    %s246 = sphi 0, %s246
    %s248 = sphi 0, %s246
    %s249 = sphi 0, %s248
    %s263 = sphi 0, %s249
    %s267 = sphi 0, %s267
    %s269 = sphi 0, %s267
    %s270 = sphi 0, %s269
    %s284 = sphi 0, %s270
    %s288 = sphi 0, %s288
    %s290 = sphi 0, %s288
    %s291 = sphi 0, %s290
    %s305 = sphi 0, %s291
    %s309 = sphi 0, %s309
    %s311 = sphi 0, %s309
    %s312 = sphi 0, %s311
    %s326 = sphi 0, %s312
    %s330 = sphi 0, %s330
    %s332 = sphi 0, %s330
    %s333 = sphi 0, %s332
    %s347 = sphi 0, %s333
    %s353 = sphi 0, %s355
    %s356 = sphi 0, %s353
    %s357 = sphi 0, %s356
    %s373 = sphi 0, %s357
    %s379 = sphi 0, %s381
    %s382 = sphi 0, %s379
    %s383 = sphi 0, %s382
    %s399 = sphi 0, %s383
  $region4: #{mynet_forward.8} parent=0 // loop_header_branch
    %26 = sbr.rel (%p24) target = $region8
  $region5: #{mynet_forward.8} parent=0 // loop_body
    %s28 = ssub.s32 %s23, 1
    %s29 = ssub.s32 %s23, 2
    %s30 = sadd.s32 %s23, 1
    %s31 = ssub.s32 %s23, %s30
    %p32 = scmp.eq.s32.totalorder %s31, 0
    %s34 = sadd.s32 %s33, 1
    %s35 = scalar_select %p32, %s33, %s34
    %p38 = pneg %p32
    %p39 = scmp.eq.s32.totalorder %s23, 1
    %p40 = por %p38, %p39
    %p41 = scmp.ne.s32.totalorder %s33, %s36
    %p42 = scmp.eq.s32.totalorder %s23, 0
    %p43 = por %p41, %p42
    %p44 = scmp.ne.s32.totalorder %s33, %s36
    %p45 = scmp.eq.s32.totalorder %s28, 1
    %p46 = por %p44, %p45
    %p47 = scmp.ne.s32.totalorder %s36, %s37
    %p48 = scmp.eq.s32.totalorder %s28, 0
    %p49 = por %p47, %p48
    %p50 = scmp.ne.s32.totalorder %s36, %s37
    %p51 = scmp.eq.s32.totalorder %s29, 1
    %p52 = por %p50, %p51
    %p54 = scmp.ne.s32.totalorder %s37, %s53
    %p55 = scmp.eq.s32.totalorder %s29, 0
    %p56 = por %p54, %p55
    %s58 = sadd.s32 %s57, 1
    %p61 = scmp.eq.s32.totalorder %s23, 1
    %p62 = scmp.ne.s32.totalorder %s57, %s59
    %p63 = scmp.eq.s32.totalorder %s23, 0
    %p64 = por %p62, %p63
    %p65 = scmp.ne.s32.totalorder %s57, %s59
    %p66 = scmp.eq.s32.totalorder %s28, 1
    %p67 = por %p65, %p66
    %p68 = scmp.ne.s32.totalorder %s59, %s60
    %p69 = scmp.eq.s32.totalorder %s28, 0
    %p70 = por %p68, %p69
    %p71 = scmp.ne.s32.totalorder %s59, %s60
    %p72 = scmp.eq.s32.totalorder %s29, 1
    %p73 = por %p71, %p72
    %p75 = scmp.ne.s32.totalorder %s60, %s74
    %p76 = scmp.eq.s32.totalorder %s29, 0
    %p77 = por %p75, %p76
    %s79 = sadd.s32 %s78, 1
    %p82 = scmp.eq.s32.totalorder %s23, 1
    %p83 = scmp.ne.s32.totalorder %s78, %s80
    %p84 = scmp.eq.s32.totalorder %s23, 0
    %p85 = por %p83, %p84
    %p86 = scmp.ne.s32.totalorder %s78, %s80
    %p87 = scmp.eq.s32.totalorder %s28, 1
    %p88 = por %p86, %p87
    %p89 = scmp.ne.s32.totalorder %s80, %s81
    %p90 = scmp.eq.s32.totalorder %s28, 0
    %p91 = por %p89, %p90
    %p92 = scmp.ne.s32.totalorder %s80, %s81
    %p93 = scmp.eq.s32.totalorder %s29, 1
    %p94 = por %p92, %p93
    %p96 = scmp.ne.s32.totalorder %s81, %s95
    %p97 = scmp.eq.s32.totalorder %s29, 0
    %p98 = por %p96, %p97
    %s100 = sadd.s32 %s99, 1
    %p103 = scmp.eq.s32.totalorder %s23, 1
    %p104 = scmp.ne.s32.totalorder %s99, %s101
    %p105 = scmp.eq.s32.totalorder %s23, 0
    %p106 = por %p104, %p105
    %p107 = scmp.ne.s32.totalorder %s99, %s101
    %p108 = scmp.eq.s32.totalorder %s28, 1
    %p109 = por %p107, %p108
    %p110 = scmp.ne.s32.totalorder %s101, %s102
    %p111 = scmp.eq.s32.totalorder %s28, 0
    %p112 = por %p110, %p111
    %p113 = scmp.ne.s32.totalorder %s101, %s102
    %p114 = scmp.eq.s32.totalorder %s29, 1
    %p115 = por %p113, %p114
    %p117 = scmp.ne.s32.totalorder %s102, %s116
    %p118 = scmp.eq.s32.totalorder %s29, 0
    %p119 = por %p117, %p118
    %s121 = sadd.s32 %s120, 1
    %p124 = scmp.eq.s32.totalorder %s23, 1
    %p125 = scmp.ne.s32.totalorder %s120, %s122
    %p126 = scmp.eq.s32.totalorder %s23, 0
    %p127 = por %p125, %p126
    %p128 = scmp.ne.s32.totalorder %s120, %s122
    %p129 = scmp.eq.s32.totalorder %s28, 1
    %p130 = por %p128, %p129
    %p131 = scmp.ne.s32.totalorder %s122, %s123
    %p132 = scmp.eq.s32.totalorder %s28, 0
    %p133 = por %p131, %p132
    %p134 = scmp.ne.s32.totalorder %s122, %s123
    %p135 = scmp.eq.s32.totalorder %s29, 1
    %p136 = por %p134, %p135
    %p138 = scmp.ne.s32.totalorder %s123, %s137
    %p139 = scmp.eq.s32.totalorder %s29, 0
    %p140 = por %p138, %p139
    %s142 = sadd.s32 %s141, 1
    %p145 = scmp.eq.s32.totalorder %s23, 1
    %p146 = scmp.ne.s32.totalorder %s141, %s143
    %p147 = scmp.eq.s32.totalorder %s23, 0
    %p148 = por %p146, %p147
    %p149 = scmp.ne.s32.totalorder %s141, %s143
    %p150 = scmp.eq.s32.totalorder %s28, 1
    %p151 = por %p149, %p150
    %p152 = scmp.ne.s32.totalorder %s143, %s144
    %p153 = scmp.eq.s32.totalorder %s28, 0
    %p154 = por %p152, %p153
    %p155 = scmp.ne.s32.totalorder %s143, %s144
    %p156 = scmp.eq.s32.totalorder %s29, 1
    %p157 = por %p155, %p156
    %p159 = scmp.ne.s32.totalorder %s144, %s158
    %p160 = scmp.eq.s32.totalorder %s29, 0
    %p161 = por %p159, %p160
    %s163 = sadd.s32 %s162, 1
    %p166 = scmp.eq.s32.totalorder %s23, 1
    %p167 = scmp.ne.s32.totalorder %s162, %s164
    %p168 = scmp.eq.s32.totalorder %s23, 0
    %p169 = por %p167, %p168
    %p170 = scmp.ne.s32.totalorder %s162, %s164
    %p171 = scmp.eq.s32.totalorder %s28, 1
    %p172 = por %p170, %p171
    %p173 = scmp.ne.s32.totalorder %s164, %s165
    %p174 = scmp.eq.s32.totalorder %s28, 0
    %p175 = por %p173, %p174
    %p176 = scmp.ne.s32.totalorder %s164, %s165
    %p177 = scmp.eq.s32.totalorder %s29, 1
    %p178 = por %p176, %p177
    %p180 = scmp.ne.s32.totalorder %s165, %s179
    %p181 = scmp.eq.s32.totalorder %s29, 0
    %p182 = por %p180, %p181
    %s184 = sadd.s32 %s183, 1
    %p187 = scmp.eq.s32.totalorder %s23, 1
    %p188 = scmp.ne.s32.totalorder %s183, %s185
    %p189 = scmp.eq.s32.totalorder %s23, 0
    %p190 = por %p188, %p189
    %p191 = scmp.ne.s32.totalorder %s183, %s185
    %p192 = scmp.eq.s32.totalorder %s28, 1
    %p193 = por %p191, %p192
    %p194 = scmp.ne.s32.totalorder %s185, %s186
    %p195 = scmp.eq.s32.totalorder %s28, 0
    %p196 = por %p194, %p195
    %p197 = scmp.ne.s32.totalorder %s185, %s186
    %p198 = scmp.eq.s32.totalorder %s29, 1
    %p199 = por %p197, %p198
    %p201 = scmp.ne.s32.totalorder %s186, %s200
    %p202 = scmp.eq.s32.totalorder %s29, 0
    %p203 = por %p201, %p202
    %s205 = sadd.s32 %s204, 1
    %p208 = scmp.eq.s32.totalorder %s23, 1
    %p209 = scmp.ne.s32.totalorder %s204, %s206
    %p210 = scmp.eq.s32.totalorder %s23, 0
    %p211 = por %p209, %p210
    %p212 = scmp.ne.s32.totalorder %s204, %s206
    %p213 = scmp.eq.s32.totalorder %s28, 1
    %p214 = por %p212, %p213
    %p215 = scmp.ne.s32.totalorder %s206, %s207
    %p216 = scmp.eq.s32.totalorder %s28, 0
    %p217 = por %p215, %p216
    %p218 = scmp.ne.s32.totalorder %s206, %s207
    %p219 = scmp.eq.s32.totalorder %s29, 1
    %p220 = por %p218, %p219
    %p222 = scmp.ne.s32.totalorder %s207, %s221
    %p223 = scmp.eq.s32.totalorder %s29, 0
    %p224 = por %p222, %p223
    %s226 = sadd.s32 %s225, 1
    %p229 = scmp.eq.s32.totalorder %s23, 1
    %p230 = scmp.ne.s32.totalorder %s225, %s227
    %p231 = scmp.eq.s32.totalorder %s23, 0
    %p232 = por %p230, %p231
    %p233 = scmp.ne.s32.totalorder %s225, %s227
    %p234 = scmp.eq.s32.totalorder %s28, 1
    %p235 = por %p233, %p234
    %p236 = scmp.ne.s32.totalorder %s227, %s228
    %p237 = scmp.eq.s32.totalorder %s28, 0
    %p238 = por %p236, %p237
    %p239 = scmp.ne.s32.totalorder %s227, %s228
    %p240 = scmp.eq.s32.totalorder %s29, 1
    %p241 = por %p239, %p240
    %p243 = scmp.ne.s32.totalorder %s228, %s242
    %p244 = scmp.eq.s32.totalorder %s29, 0
    %p245 = por %p243, %p244
    %s247 = sadd.s32 %s246, 1
    %p250 = scmp.eq.s32.totalorder %s23, 1
    %p251 = scmp.ne.s32.totalorder %s246, %s248
    %p252 = scmp.eq.s32.totalorder %s23, 0
    %p253 = por %p251, %p252
    %p254 = scmp.ne.s32.totalorder %s246, %s248
    %p255 = scmp.eq.s32.totalorder %s28, 1
    %p256 = por %p254, %p255
    %p257 = scmp.ne.s32.totalorder %s248, %s249
    %p258 = scmp.eq.s32.totalorder %s28, 0
    %p259 = por %p257, %p258
    %p260 = scmp.ne.s32.totalorder %s248, %s249
    %p261 = scmp.eq.s32.totalorder %s29, 1
    %p262 = por %p260, %p261
    %p264 = scmp.ne.s32.totalorder %s249, %s263
    %p265 = scmp.eq.s32.totalorder %s29, 0
    %p266 = por %p264, %p265
    %s268 = sadd.s32 %s267, 1
    %p271 = scmp.eq.s32.totalorder %s23, 1
    %p272 = scmp.ne.s32.totalorder %s267, %s269
    %p273 = scmp.eq.s32.totalorder %s23, 0
    %p274 = por %p272, %p273
    %p275 = scmp.ne.s32.totalorder %s267, %s269
    %p276 = scmp.eq.s32.totalorder %s28, 1
    %p277 = por %p275, %p276
    %p278 = scmp.ne.s32.totalorder %s269, %s270
    %p279 = scmp.eq.s32.totalorder %s28, 0
    %p280 = por %p278, %p279
    %p281 = scmp.ne.s32.totalorder %s269, %s270
    %p282 = scmp.eq.s32.totalorder %s29, 1
    %p283 = por %p281, %p282
    %p285 = scmp.ne.s32.totalorder %s270, %s284
    %p286 = scmp.eq.s32.totalorder %s29, 0
    %p287 = por %p285, %p286
    %s289 = sadd.s32 %s288, 1
    %p292 = scmp.eq.s32.totalorder %s23, 1
    %p293 = scmp.ne.s32.totalorder %s288, %s290
    %p294 = scmp.eq.s32.totalorder %s23, 0
    %p295 = por %p293, %p294
    %p296 = scmp.ne.s32.totalorder %s288, %s290
    %p297 = scmp.eq.s32.totalorder %s28, 1
    %p298 = por %p296, %p297
    %p299 = scmp.ne.s32.totalorder %s290, %s291
    %p300 = scmp.eq.s32.totalorder %s28, 0
    %p301 = por %p299, %p300
    %p302 = scmp.ne.s32.totalorder %s290, %s291
    %p303 = scmp.eq.s32.totalorder %s29, 1
    %p304 = por %p302, %p303
    %p306 = scmp.ne.s32.totalorder %s291, %s305
    %p307 = scmp.eq.s32.totalorder %s29, 0
    %p308 = por %p306, %p307
    %s310 = sadd.s32 %s309, 1
    %p313 = scmp.eq.s32.totalorder %s23, 1
    %p314 = scmp.ne.s32.totalorder %s309, %s311
    %p315 = scmp.eq.s32.totalorder %s23, 0
    %p316 = por %p314, %p315
    %p317 = scmp.ne.s32.totalorder %s309, %s311
    %p318 = scmp.eq.s32.totalorder %s28, 1
    %p319 = por %p317, %p318
    %p320 = scmp.ne.s32.totalorder %s311, %s312
    %p321 = scmp.eq.s32.totalorder %s28, 0
    %p322 = por %p320, %p321
    %p323 = scmp.ne.s32.totalorder %s311, %s312
    %p324 = scmp.eq.s32.totalorder %s29, 1
    %p325 = por %p323, %p324
    %p327 = scmp.ne.s32.totalorder %s312, %s326
    %p328 = scmp.eq.s32.totalorder %s29, 0
    %p329 = por %p327, %p328
    %s331 = sadd.s32 %s330, 1
    %p334 = scmp.eq.s32.totalorder %s23, 1
    %p335 = scmp.ne.s32.totalorder %s330, %s332
    %p336 = scmp.eq.s32.totalorder %s23, 0
    %p337 = por %p335, %p336
    %p338 = scmp.ne.s32.totalorder %s330, %s332
    %p339 = scmp.eq.s32.totalorder %s28, 1
    %p340 = por %p338, %p339
    %p341 = scmp.ne.s32.totalorder %s332, %s333
    %p342 = scmp.eq.s32.totalorder %s28, 0
    %p343 = por %p341, %p342
    %p344 = scmp.ne.s32.totalorder %s332, %s333
    %p345 = scmp.eq.s32.totalorder %s29, 1
    %p346 = por %p344, %p345
    %p348 = scmp.ne.s32.totalorder %s333, %s347
    %p349 = scmp.eq.s32.totalorder %s29, 0
    %p350 = por %p348, %p349
    %s351 = ssub.s32 %s23, %s30
    %p352 = scmp.eq.s32.totalorder %s351, 0
    %s354 = sadd.s32 %s353, 1
    %s355 = scalar_select %p352, %s353, %s354
    %p358 = pneg %p352
    %p359 = scmp.eq.s32.totalorder %s23, 1
    %p360 = por %p358, %p359
    %p361 = scmp.ne.s32.totalorder %s353, %s356
    %p362 = scmp.eq.s32.totalorder %s23, 0
    %p363 = por %p361, %p362
    %p364 = scmp.ne.s32.totalorder %s353, %s356
    %p365 = scmp.eq.s32.totalorder %s28, 1
    %p366 = por %p364, %p365
    %p367 = scmp.ne.s32.totalorder %s356, %s357
    %p368 = scmp.eq.s32.totalorder %s28, 0
    %p369 = por %p367, %p368
    %p370 = scmp.ne.s32.totalorder %s356, %s357
    %p371 = scmp.eq.s32.totalorder %s29, 1
    %p372 = por %p370, %p371
    %p374 = scmp.ne.s32.totalorder %s357, %s373
    %p375 = scmp.eq.s32.totalorder %s29, 0
    %p376 = por %p374, %p375
    %s377 = ssub.s32 %s23, %s30
    %p378 = scmp.eq.s32.totalorder %s377, 0
    %s380 = sadd.s32 %s379, 1
    %s381 = scalar_select %p378, %s379, %s380
    %p384 = pneg %p378
    %p385 = scmp.eq.s32.totalorder %s23, 1
    %p386 = por %p384, %p385
    %p387 = scmp.ne.s32.totalorder %s379, %s382
    %p388 = scmp.eq.s32.totalorder %s23, 0
    %p389 = por %p387, %p388
    %p390 = scmp.ne.s32.totalorder %s379, %s382
    %p391 = scmp.eq.s32.totalorder %s28, 1
    %p392 = por %p390, %p391
    %p393 = scmp.ne.s32.totalorder %s382, %s383
    %p394 = scmp.eq.s32.totalorder %s28, 0
    %p395 = por %p393, %p394
    %p396 = scmp.ne.s32.totalorder %s382, %s383
    %p397 = scmp.eq.s32.totalorder %s29, 1
    %p398 = por %p396, %p397
    %p400 = scmp.ne.s32.totalorder %s383, %s399
    %p401 = scmp.eq.s32.totalorder %s29, 0
    %p402 = por %p400, %p401
    %p403 = scmp.le.s32.totalorder 1, %s23
    %p404 = scmp.lt.s32.totalorder %s23, 3
    %p405 = pnand %p403, %p404
    %p406 = pneg %p405
    // Predicated region
    $region9: #{mynet_forward.8} parent=5 // pred_check
      _
    $region10: #{mynet_forward.8} parent=5 // pred_check_branch
      %408 = sbr.rel (%p405) target = $region12
    $region11: #{mynet_forward.8} parent=5 // pred_region
      %s409 = ssub.s32 %s23, 1
      // Predicated region
      $region13: #{mynet_forward.8} parent=11 // pred_check
        %p410 = pneg %p70
      $region14: #{mynet_forward.8} parent=11 // pred_check_branch
        %412 = sbr.rel (%p410) target = $region16
      $region15: #{mynet_forward.8} parent=11 // pred_region
        _
      $region16: #{mynet_forward.8} parent=11 // pred_fallthru
        _
      // Predicated region
      $region17: #{mynet_forward.8} parent=11 // pred_check
        %p413 = pneg %p91
      $region18: #{mynet_forward.8} parent=11 // pred_check_branch
        %415 = sbr.rel (%p413) target = $region20
      $region19: #{mynet_forward.8} parent=11 // pred_region
        _
      $region20: #{mynet_forward.8} parent=11 // pred_fallthru
        _
      // Predicated region
      $region21: #{mynet_forward.8} parent=11 // pred_check
        %p416 = pneg %p112
      $region22: #{mynet_forward.8} parent=11 // pred_check_branch
        %418 = sbr.rel (%p416) target = $region24
      $region23: #{mynet_forward.8} parent=11 // pred_region
        _
      $region24: #{mynet_forward.8} parent=11 // pred_fallthru
        _
      // Predicated region
      $region25: #{mynet_forward.8} parent=11 // pred_check
        %p419 = pneg %p133
      $region26: #{mynet_forward.8} parent=11 // pred_check_branch
        %421 = sbr.rel (%p419) target = $region28
      $region27: #{mynet_forward.8} parent=11 // pred_region
        _
      $region28: #{mynet_forward.8} parent=11 // pred_fallthru
        _
      // Predicated region
      $region29: #{mynet_forward.8} parent=11 // pred_check
        %p422 = pneg %p154
      $region30: #{mynet_forward.8} parent=11 // pred_check_branch
        %424 = sbr.rel (%p422) target = $region32
      $region31: #{mynet_forward.8} parent=11 // pred_region
        _
      $region32: #{mynet_forward.8} parent=11 // pred_fallthru
        _
      // Predicated region
      $region33: #{mynet_forward.8} parent=11 // pred_check
        %p425 = pneg %p175
      $region34: #{mynet_forward.8} parent=11 // pred_check_branch
        %427 = sbr.rel (%p425) target = $region36
      $region35: #{mynet_forward.8} parent=11 // pred_region
        _
      $region36: #{mynet_forward.8} parent=11 // pred_fallthru
        _
      // Predicated region
      $region37: #{mynet_forward.8} parent=11 // pred_check
        %p428 = pneg %p196
      $region38: #{mynet_forward.8} parent=11 // pred_check_branch
        %430 = sbr.rel (%p428) target = $region40
      $region39: #{mynet_forward.8} parent=11 // pred_region
        _
      $region40: #{mynet_forward.8} parent=11 // pred_fallthru
        _
      // Predicated region
      $region41: #{mynet_forward.8} parent=11 // pred_check
        %p431 = pneg %p217
      $region42: #{mynet_forward.8} parent=11 // pred_check_branch
        %433 = sbr.rel (%p431) target = $region44
      $region43: #{mynet_forward.8} parent=11 // pred_region
        _
      $region44: #{mynet_forward.8} parent=11 // pred_fallthru
        _
      // Predicated region
      $region45: #{mynet_forward.8} parent=11 // pred_check
        %p434 = pneg %p238
      $region46: #{mynet_forward.8} parent=11 // pred_check_branch
        %436 = sbr.rel (%p434) target = $region48
      $region47: #{mynet_forward.8} parent=11 // pred_region
        _
      $region48: #{mynet_forward.8} parent=11 // pred_fallthru
        _
      // Predicated region
      $region49: #{mynet_forward.8} parent=11 // pred_check
        %p437 = pneg %p259
      $region50: #{mynet_forward.8} parent=11 // pred_check_branch
        %439 = sbr.rel (%p437) target = $region52
      $region51: #{mynet_forward.8} parent=11 // pred_region
        _
      $region52: #{mynet_forward.8} parent=11 // pred_fallthru
        _
      // Predicated region
      $region53: #{mynet_forward.8} parent=11 // pred_check
        %p440 = pneg %p280
      $region54: #{mynet_forward.8} parent=11 // pred_check_branch
        %442 = sbr.rel (%p440) target = $region56
      $region55: #{mynet_forward.8} parent=11 // pred_region
        _
      $region56: #{mynet_forward.8} parent=11 // pred_fallthru
        _
      // Predicated region
      $region57: #{mynet_forward.8} parent=11 // pred_check
        %p443 = pneg %p301
      $region58: #{mynet_forward.8} parent=11 // pred_check_branch
        %445 = sbr.rel (%p443) target = $region60
      $region59: #{mynet_forward.8} parent=11 // pred_region
        _
      $region60: #{mynet_forward.8} parent=11 // pred_fallthru
        _
      // Predicated region
      $region61: #{mynet_forward.8} parent=11 // pred_check
        %p446 = pneg %p322
      $region62: #{mynet_forward.8} parent=11 // pred_check_branch
        %448 = sbr.rel (%p446) target = $region64
      $region63: #{mynet_forward.8} parent=11 // pred_region
        _
      $region64: #{mynet_forward.8} parent=11 // pred_fallthru
        _
      // Predicated region
      $region65: #{mynet_forward.8} parent=11 // pred_check
        %p449 = pneg %p343
      $region66: #{mynet_forward.8} parent=11 // pred_check_branch
        %451 = sbr.rel (%p449) target = $region68
      $region67: #{mynet_forward.8} parent=11 // pred_region
        _
      $region68: #{mynet_forward.8} parent=11 // pred_fallthru
        _
    $region12: #{mynet_forward.8} parent=5 // pred_fallthru
      _
    %p452 = scmp.lt.s32.totalorder %s23, 2
    // Predicated region
    $region69: #{mynet_forward.8} parent=5 // pred_check
      %p453 = pneg %p452
    $region70: #{mynet_forward.8} parent=5 // pred_check_branch
      %455 = sbr.rel (%p453) target = $region72
    $region71: #{mynet_forward.8} parent=5 // pred_region
      // Predicated region
      $region73: #{mynet_forward.8} parent=71 // pred_check
        %p456 = pneg %p43
      $region74: #{mynet_forward.8} parent=71 // pred_check_branch
        %458 = sbr.rel (%p456) target = $region76
      $region75: #{mynet_forward.8} parent=71 // pred_region
        %p459 = scmp.lt.s32.totalorder %s23, 1
        %s460 = scalar_select %p459, %s23, 1
        %s461 = smul.addr %s460, 8
        %s462 = smul.addr %s461, 8
        %s463 = scalar_lea.vmem %s0, %s462
      $region76: #{mynet_forward.8} parent=71 // pred_fallthru
        _
    $region72: #{mynet_forward.8} parent=5 // pred_fallthru
      _
    %p464 = scmp.le.s32.totalorder 1, %s23
    %p465 = scmp.lt.s32.totalorder %s23, 3
    %p466 = pnand %p464, %p465
    %p467 = pneg %p466
    // Predicated region
    $region77: #{mynet_forward.8} parent=5 // pred_check
      _
    $region78: #{mynet_forward.8} parent=5 // pred_check_branch
      %469 = sbr.rel (%p466) target = $region80
    $region79: #{mynet_forward.8} parent=5 // pred_region
      %s470 = ssub.s32 %s23, 1
      %p471 = scmp.lt.s32.totalorder %s28, 1
      %s472 = scalar_select %p471, %s28, 1
      %s473 = smul.addr %s472, 8
      %s474 = smul.addr %s473, 8
      %s475 = scalar_lea.vmem %s0, %s474
      %p476 = pneg %p49
      %p477 = pneg %p46
      %p478 = pneg %p70
      %p479 = pneg %p67
      %p480 = pneg %p91
      %p481 = pneg %p88
      %p482 = pneg %p112
      %p483 = pneg %p109
      %p484 = pneg %p133
      %p485 = pneg %p130
      %p486 = pneg %p154
      %p487 = pneg %p151
      %p488 = pneg %p175
      %p489 = pneg %p172
      %p490 = pneg %p196
      %p491 = pneg %p193
      %p492 = pneg %p217
      %p493 = pneg %p214
      %p494 = pneg %p238
      %p495 = pneg %p235
      %p496 = pneg %p259
      %p497 = pneg %p256
      %p498 = pneg %p280
      %p499 = pneg %p277
      %p500 = pneg %p301
      %p501 = pneg %p298
      %p502 = pneg %p322
      %p503 = pneg %p319
      %p504 = pneg %p343
      %p505 = pneg %p340
      %p506 = pneg %p369
      %p507 = pneg %p366
      %p508 = scmp.lt.s32.totalorder %s28, 1
      %s509 = scalar_select %p508, %s28, 1
      %s510 = smul.addr %s509, 8
      %s511 = smul.addr %s510, 8
      %s512 = scalar_lea.vmem %s15, %s511
      %p513 = pneg %p395
      %p514 = pneg %p392
      %p515 = scmp.lt.s32.totalorder %s28, 1
      %s516 = scalar_select %p515, %s28, 1
      %s517 = smul.addr %s516, 2
      %s518 = scalar_lea.vmem %s16, %s517
      %p519 = scmp.lt.s32.totalorder %s28, 1
      %s520 = scalar_select %p519, %s28, 1
      %s521 = smul.addr %s520, 8
      %s522 = smul.addr %s521, 8
      %s523 = scalar_lea.vmem %s0, %s522
      %p524 = scmp.lt.s32.totalorder %s28, 1
      %s525 = scalar_select %p524, %s28, 1
      %s526 = smul.addr %s525, 8
      %s527 = smul.addr %s526, 8
      %s528 = scalar_lea.vmem %s15, %s527
      %p529 = scmp.lt.s32.totalorder %s28, 1
      %s530 = scalar_select %p529, %s28, 1
      %s531 = smul.addr %s530, 2
      %s532 = scalar_lea.vmem %s16, %s531
      %v534 = vld [vmem:[%s523] sm:$0xff]
      %v535 = vld [vmem:[%s523 + $0x8] sm:$0xff]
      %v536 = vld [vmem:[%s523 + $0x10] sm:$0xff]
      %v537 = vld [vmem:[%s523 + $0x18] sm:$0xff]
      %v538 = vld [vmem:[%s523 + $0x20] sm:$0xff]
      %v539 = vld [vmem:[%s523 + $0x28] sm:$0xff]
      %v540 = vld [vmem:[%s523 + $0x30] sm:$0xff]
      %v541 = vld [vmem:[%s523 + $0x38] sm:$0xff]
      %v542 = vld [vmem:[%s1] sm:$0x1]
      %v544 = vlaneseq
      %v545 = vshrl.u32 %v544, 7
      %v546 = vsub.s32 0, %v545
      %v547 = vrot.slane %v542, %v546
      %v549 = vmul.f32 %v534, %v547
      %v550 = vmul.f32 %v535, %v547
      %v551 = vmul.f32 %v536, %v547
      %v552 = vmul.f32 %v537, %v547
      %v553 = vmul.f32 %v538, %v547
      %v554 = vmul.f32 %v539, %v547
      %v555 = vmul.f32 %v540, %v547
      %v556 = vmul.f32 %v541, %v547
      %v557 = vld [vmem:[%s2] sm:$0x1]
      %v559 = vlaneseq
      %v560 = vshrl.u32 %v559, 7
      %v561 = vsub.s32 0, %v560
      %v562 = vrot.slane %v557, %v561
      %v564 = vadd.f32 %v549, %v562
      %v565 = vadd.f32 %v550, %v562
      %v566 = vadd.f32 %v551, %v562
      %v567 = vadd.f32 %v552, %v562
      %v568 = vadd.f32 %v553, %v562
      %v569 = vadd.f32 %v554, %v562
      %v570 = vadd.f32 %v555, %v562
      %v571 = vadd.f32 %v556, %v562
      %v572 = vmax.f32 %v564, 0.0
      %v573 = vmax.f32 %v565, 0.0
      %v574 = vmax.f32 %v566, 0.0
      %v575 = vmax.f32 %v567, 0.0
      %v576 = vmax.f32 %v568, 0.0
      %v577 = vmax.f32 %v569, 0.0
      %v578 = vmax.f32 %v570, 0.0
      %v579 = vmax.f32 %v571, 0.0
      %v580 = vpack.c.bf16 %v573, %v572
      %v581 = vpack.c.bf16 %v575, %v574
      %v582 = vpack.c.bf16 %v577, %v576
      %v583 = vpack.c.bf16 %v579, %v578
      %v584 = vld [vmem:[%s3] sm:$0x3]
      %v585 = vld [vmem:[%s4] sm:$0x1]
      %v587 = vlaneseq
      %v588 = vshrl.u32 %v587, 7
      %v589 = vsub.s32 0, %v588
      %v590 = vrot.slane %v585, %v589
      %vm592 = vcmask 31744
      %v594 = vsel %vm592, %v580, 0
      %v597 = vsel %vm592, %v581, 0
      %v600 = vsel %vm592, %v582, 0
      %v603 = vsel %vm592, %v583, 0
      %vm605 = vcmask 1041408
      %v607 = vsel %vm605, %v584, 0
      %609 = vmatprep.subr.bf16.mxu0 0
      %610 = vmatpush1.bf16.msra.mxu0 0
      %611 = vmatprep.subr.bf16.mxu0 0
      %612 = vmatpush1.bf16.msra.mxu0 0
      %613 = vmatprep.subr.bf16.mxu0 0
      %614 = vmatpush1.bf16.msra.mxu0 0
      %615 = vmatprep.subr.bf16.mxu0 0
      %616 = vmatpush1.bf16.msra.mxu0 0
      %617 = vmatprep.subr.bf16.mxu0 0
      %618 = vmatpush1.bf16.msra.mxu0 0
      %619 = vmatprep.subr.bf16.mxu0 0
      %620 = vmatpush1.bf16.msra.mxu0 0
      %621 = vmatprep.subr.bf16.mxu0 0
      %622 = vmatpush1.bf16.msra.mxu0 0
      %623 = vmatprep.subr.bf16.mxu0 0
      %624 = vmatpush1.bf16.msra.mxu0 %v607
      %625 = vmatprep.subr.bf16.mxu0 0
      %626 = vmatpush2.bf16.msra.mxu0 0
      %627 = vmatprep.subr.bf16.mxu0 0
      %628 = vmatpush2.bf16.msra.mxu0 0
      %629 = vmatprep.subr.bf16.mxu0 0
      %630 = vmatpush2.bf16.msra.mxu0 0
      %631 = vmatprep.subr.bf16.mxu0 0
      %632 = vmatpush2.bf16.msra.mxu0 0
      %633 = vmatprep.subr.bf16.mxu0 0
      %634 = vmatpush2.bf16.msra.mxu0 0
      %635 = vmatprep.subr.bf16.mxu0 0
      %636 = vmatpush2.bf16.msra.mxu0 0
      %637 = vmatprep.subr.bf16.mxu0 0
      %638 = vmatpush2.bf16.msra.mxu0 0
      %639 = vmatprep.subr.bf16.mxu0 0
      %640 = vmatpush2.bf16.msra.mxu0 0
      %641 = vmatprep.mubr.bf16.mxu0 0
      %642 = vmatmul.mubr.bf16.gmra.mxu0 %v594
      %v643 = vpop.f32.mrf.mxu0
      %v644 = vadd.f32 %v590, %v643
      %v645 = vpop.f32.mrf.mxu0
      %v646 = vpop.f32.mrf.mxu0
      %v647 = vadd.f32 %v590, %v646
      %v648 = vpop.f32.mrf.mxu0
      %649 = vmatprep.mubr.bf16.mxu0 0
      %650 = vmatmul.mubr.bf16.gmra.mxu0 %v597
      %v651 = vpop.f32.mrf.mxu0
      %v652 = vadd.f32 %v590, %v651
      %v653 = vpop.f32.mrf.mxu0
      %v654 = vpop.f32.mrf.mxu0
      %v655 = vadd.f32 %v590, %v654
      %v656 = vpop.f32.mrf.mxu0
      %657 = vmatprep.mubr.bf16.mxu0 0
      %658 = vmatmul.mubr.bf16.gmra.mxu0 %v600
      %v659 = vpop.f32.mrf.mxu0
      %v660 = vadd.f32 %v590, %v659
      %v661 = vpop.f32.mrf.mxu0
      %v662 = vpop.f32.mrf.mxu0
      %v663 = vadd.f32 %v590, %v662
      %v664 = vpop.f32.mrf.mxu0
      %665 = vmatprep.mubr.bf16.mxu0 0
      %666 = vmatmul.mubr.bf16.gmra.mxu0 %v603
      %v667 = vpop.f32.mrf.mxu0
      %v668 = vadd.f32 %v590, %v667
      %v669 = vpop.f32.mrf.mxu0
      %v670 = vpop.f32.mrf.mxu0
      %v671 = vadd.f32 %v590, %v670
      %v672 = vpop.f32.mrf.mxu0
      %673 = vdwg.mxu0
      %v674 = vmax.f32 %v644, 0.0
      %v675 = vmax.f32 %v647, 0.0
      %v676 = vmax.f32 %v652, 0.0
      %v677 = vmax.f32 %v655, 0.0
      %v678 = vmax.f32 %v660, 0.0
      %v679 = vmax.f32 %v663, 0.0
      %v680 = vmax.f32 %v668, 0.0
      %v681 = vmax.f32 %v671, 0.0
      %v682 = vpack.c.bf16 %v675, %v674
      %v683 = vpack.c.bf16 %v677, %v676
      %v684 = vpack.c.bf16 %v679, %v678
      %v685 = vpack.c.bf16 %v681, %v680
      %v686 = vld [vmem:[%s5] sm:$0xf]
      %v687 = vld [vmem:[%s5 + $0x4] sm:$0xf]
      %v688 = vld [vmem:[%s5 + $0x8] sm:$0xf]
      %v689 = vld [vmem:[%s5 + $0xc] sm:$0xf]
      %v690 = vld [vmem:[%s6] sm:$0x1]
      %v692 = vlaneseq
      %v693 = vshrl.u32 %v692, 7
      %v694 = vsub.s32 0, %v693
      %v695 = vrot.slane %v690, %v694
      %v701 = vunpack.c.l.b16 %v686
      %v702 = vunpack.c.l.b16 %v687
      %v703 = vunpack.c.l.b16 %v688
      %v704 = vunpack.c.l.b16 %v689
      %v705 = vpack.c.b16 %v702, %v701
      %v706 = vpack.c.b16 %v704, %v703
      %vm709 = vcmask 261120
      %v711 = vsel %vm709, %v682, 0
      %v714 = vsel %vm709, %v683, 0
      %v717 = vsel %vm709, %v684, 0
      %v720 = vsel %vm709, %v685, 0
      %722 = vmatprep.subr.bf16.mxu0 0
      %723 = vmatpush1.bf16.msra.mxu0 0
      %724 = vmatprep.subr.bf16.mxu0 0
      %725 = vmatpush1.bf16.msra.mxu0 0
      %726 = vmatprep.subr.bf16.mxu0 0
      %727 = vmatpush1.bf16.msra.mxu0 0
      %728 = vmatprep.subr.bf16.mxu0 0
      %729 = vmatpush1.bf16.msra.mxu0 0
      %730 = vmatprep.subr.bf16.mxu0 0
      %731 = vmatpush1.bf16.msra.mxu0 0
      %732 = vmatprep.subr.bf16.mxu0 0
      %733 = vmatpush1.bf16.msra.mxu0 0
      %734 = vmatprep.subr.bf16.mxu0 0
      %735 = vmatpush1.bf16.msra.mxu0 %v706
      %736 = vmatprep.subr.bf16.mxu0 0
      %737 = vmatpush1.bf16.msra.mxu0 %v705
      %738 = vmatprep.subr.bf16.mxu0 0
      %739 = vmatpush2.bf16.msra.mxu0 0
      %740 = vmatprep.subr.bf16.mxu0 0
      %741 = vmatpush2.bf16.msra.mxu0 0
      %742 = vmatprep.subr.bf16.mxu0 0
      %743 = vmatpush2.bf16.msra.mxu0 0
      %744 = vmatprep.subr.bf16.mxu0 0
      %745 = vmatpush2.bf16.msra.mxu0 0
      %746 = vmatprep.subr.bf16.mxu0 0
      %747 = vmatpush2.bf16.msra.mxu0 0
      %748 = vmatprep.subr.bf16.mxu0 0
      %749 = vmatpush2.bf16.msra.mxu0 0
      %750 = vmatprep.subr.bf16.mxu0 0
      %751 = vmatpush2.bf16.msra.mxu0 0
      %752 = vmatprep.subr.bf16.mxu0 0
      %753 = vmatpush2.bf16.msra.mxu0 0
      %754 = vmatprep.mubr.bf16.mxu0 0
      %755 = vmatmul.mubr.bf16.gmra.mxu0 %v711
      %v756 = vpop.f32.mrf.mxu0
      %v757 = vadd.f32 %v695, %v756
      %v758 = vpop.f32.mrf.mxu0
      %v759 = vpop.f32.mrf.mxu0
      %v760 = vadd.f32 %v695, %v759
      %v761 = vpop.f32.mrf.mxu0
      %762 = vmatprep.mubr.bf16.mxu0 0
      %763 = vmatmul.mubr.bf16.gmra.mxu0 %v714
      %v764 = vpop.f32.mrf.mxu0
      %v765 = vadd.f32 %v695, %v764
      %v766 = vpop.f32.mrf.mxu0
      %v767 = vpop.f32.mrf.mxu0
      %v768 = vadd.f32 %v695, %v767
      %v769 = vpop.f32.mrf.mxu0
      %770 = vmatprep.mubr.bf16.mxu0 0
      %771 = vmatmul.mubr.bf16.gmra.mxu0 %v717
      %v772 = vpop.f32.mrf.mxu0
      %v773 = vadd.f32 %v695, %v772
      %v774 = vpop.f32.mrf.mxu0
      %v775 = vpop.f32.mrf.mxu0
      %v776 = vadd.f32 %v695, %v775
      %v777 = vpop.f32.mrf.mxu0
      %778 = vmatprep.mubr.bf16.mxu0 0
      %779 = vmatmul.mubr.bf16.gmra.mxu0 %v720
      %v780 = vpop.f32.mrf.mxu0
      %v781 = vadd.f32 %v695, %v780
      %v782 = vpop.f32.mrf.mxu0
      %v783 = vpop.f32.mrf.mxu0
      %v784 = vadd.f32 %v695, %v783
      %v785 = vpop.f32.mrf.mxu0
      %786 = vdwg.mxu0
      %v787 = vld [vmem:[%s7] sm:$0x3]
      %v788 = vld [vmem:[%s8] sm:$0x1]
      %v790 = vlaneseq
      %v791 = vshrl.u32 %v790, 7
      %v792 = vsub.s32 0, %v791
      %v793 = vrot.slane %v788, %v792
      %v796 = vsel %vm605, %v787, 0
      %798 = vmatprep.subr.bf16.mxu0 0
      %799 = vmatpush1.bf16.msra.mxu0 0
      %800 = vmatprep.subr.bf16.mxu0 0
      %801 = vmatpush1.bf16.msra.mxu0 0
      %802 = vmatprep.subr.bf16.mxu0 0
      %803 = vmatpush1.bf16.msra.mxu0 0
      %804 = vmatprep.subr.bf16.mxu0 0
      %805 = vmatpush1.bf16.msra.mxu0 0
      %806 = vmatprep.subr.bf16.mxu0 0
      %807 = vmatpush1.bf16.msra.mxu0 0
      %808 = vmatprep.subr.bf16.mxu0 0
      %809 = vmatpush1.bf16.msra.mxu0 0
      %810 = vmatprep.subr.bf16.mxu0 0
      %811 = vmatpush1.bf16.msra.mxu0 0
      %812 = vmatprep.subr.bf16.mxu0 0
      %813 = vmatpush1.bf16.msra.mxu0 %v796
      %814 = vmatprep.subr.bf16.mxu0 0
      %815 = vmatpush2.bf16.msra.mxu0 0
      %816 = vmatprep.subr.bf16.mxu0 0
      %817 = vmatpush2.bf16.msra.mxu0 0
      %818 = vmatprep.subr.bf16.mxu0 0
      %819 = vmatpush2.bf16.msra.mxu0 0
      %820 = vmatprep.subr.bf16.mxu0 0
      %821 = vmatpush2.bf16.msra.mxu0 0
      %822 = vmatprep.subr.bf16.mxu0 0
      %823 = vmatpush2.bf16.msra.mxu0 0
      %824 = vmatprep.subr.bf16.mxu0 0
      %825 = vmatpush2.bf16.msra.mxu0 0
      %826 = vmatprep.subr.bf16.mxu0 0
      %827 = vmatpush2.bf16.msra.mxu0 0
      %828 = vmatprep.subr.bf16.mxu0 0
      %829 = vmatpush2.bf16.msra.mxu0 0
      %830 = vmatprep.mubr.bf16.mxu0 0
      %831 = vmatmul.mubr.bf16.gmra.mxu0 %v594
      %v832 = vpop.f32.mrf.mxu0
      %v833 = vadd.f32 %v793, %v832
      %v834 = vpop.f32.mrf.mxu0
      %v835 = vpop.f32.mrf.mxu0
      %v836 = vadd.f32 %v793, %v835
      %v837 = vpop.f32.mrf.mxu0
      %838 = vmatprep.mubr.bf16.mxu0 0
      %839 = vmatmul.mubr.bf16.gmra.mxu0 %v597
      %v840 = vpop.f32.mrf.mxu0
      %v841 = vadd.f32 %v793, %v840
      %v842 = vpop.f32.mrf.mxu0
      %v843 = vpop.f32.mrf.mxu0
      %v844 = vadd.f32 %v793, %v843
      %v845 = vpop.f32.mrf.mxu0
      %846 = vmatprep.mubr.bf16.mxu0 0
      %847 = vmatmul.mubr.bf16.gmra.mxu0 %v600
      %v848 = vpop.f32.mrf.mxu0
      %v849 = vadd.f32 %v793, %v848
      %v850 = vpop.f32.mrf.mxu0
      %v851 = vpop.f32.mrf.mxu0
      %v852 = vadd.f32 %v793, %v851
      %v853 = vpop.f32.mrf.mxu0
      %854 = vmatprep.mubr.bf16.mxu0 0
      %855 = vmatmul.mubr.bf16.gmra.mxu0 %v603
      %v856 = vpop.f32.mrf.mxu0
      %v857 = vadd.f32 %v793, %v856
      %v858 = vpop.f32.mrf.mxu0
      %v859 = vpop.f32.mrf.mxu0
      %v860 = vadd.f32 %v793, %v859
      %v861 = vpop.f32.mrf.mxu0
      %862 = vdwg.mxu0
      %v863 = vmax.f32 %v833, 0.0
      %v864 = vmax.f32 %v836, 0.0
      %v865 = vmax.f32 %v841, 0.0
      %v866 = vmax.f32 %v844, 0.0
      %v867 = vmax.f32 %v849, 0.0
      %v868 = vmax.f32 %v852, 0.0
      %v869 = vmax.f32 %v857, 0.0
      %v870 = vmax.f32 %v860, 0.0
      %v871 = vpack.c.bf16 %v864, %v863
      %v872 = vpack.c.bf16 %v866, %v865
      %v873 = vpack.c.bf16 %v868, %v867
      %v874 = vpack.c.bf16 %v870, %v869
      %v875 = vld [vmem:[%s9] sm:$0xf]
      %v876 = vld [vmem:[%s9 + $0x4] sm:$0xf]
      %v877 = vld [vmem:[%s9 + $0x8] sm:$0xf]
      %v878 = vld [vmem:[%s9 + $0xc] sm:$0xf]
      %v879 = vld [vmem:[%s10] sm:$0x1]
      %v881 = vlaneseq
      %v882 = vshrl.u32 %v881, 7
      %v883 = vsub.s32 0, %v882
      %v884 = vrot.slane %v879, %v883
      %v890 = vunpack.c.l.b16 %v875
      %v891 = vunpack.c.l.b16 %v876
      %v892 = vunpack.c.l.b16 %v877
      %v893 = vunpack.c.l.b16 %v878
      %v894 = vpack.c.b16 %v891, %v890
      %v895 = vpack.c.b16 %v893, %v892
      %v899 = vsel %vm709, %v871, 0
      %v902 = vsel %vm709, %v872, 0
      %v905 = vsel %vm709, %v873, 0
      %v908 = vsel %vm709, %v874, 0
      %910 = vmatprep.subr.bf16.mxu0 0
      %911 = vmatpush1.bf16.msra.mxu0 0
      %912 = vmatprep.subr.bf16.mxu0 0
      %913 = vmatpush1.bf16.msra.mxu0 0
      %914 = vmatprep.subr.bf16.mxu0 0
      %915 = vmatpush1.bf16.msra.mxu0 0
      %916 = vmatprep.subr.bf16.mxu0 0
      %917 = vmatpush1.bf16.msra.mxu0 0
      %918 = vmatprep.subr.bf16.mxu0 0
      %919 = vmatpush1.bf16.msra.mxu0 0
      %920 = vmatprep.subr.bf16.mxu0 0
      %921 = vmatpush1.bf16.msra.mxu0 0
      %922 = vmatprep.subr.bf16.mxu0 0
      %923 = vmatpush1.bf16.msra.mxu0 %v895
      %924 = vmatprep.subr.bf16.mxu0 0
      %925 = vmatpush1.bf16.msra.mxu0 %v894
      %926 = vmatprep.subr.bf16.mxu0 0
      %927 = vmatpush2.bf16.msra.mxu0 0
      %928 = vmatprep.subr.bf16.mxu0 0
      %929 = vmatpush2.bf16.msra.mxu0 0
      %930 = vmatprep.subr.bf16.mxu0 0
      %931 = vmatpush2.bf16.msra.mxu0 0
      %932 = vmatprep.subr.bf16.mxu0 0
      %933 = vmatpush2.bf16.msra.mxu0 0
      %934 = vmatprep.subr.bf16.mxu0 0
      %935 = vmatpush2.bf16.msra.mxu0 0
      %936 = vmatprep.subr.bf16.mxu0 0
      %937 = vmatpush2.bf16.msra.mxu0 0
      %938 = vmatprep.subr.bf16.mxu0 0
      %939 = vmatpush2.bf16.msra.mxu0 0
      %940 = vmatprep.subr.bf16.mxu0 0
      %941 = vmatpush2.bf16.msra.mxu0 0
      %942 = vmatprep.mubr.bf16.mxu0 0
      %943 = vmatmul.mubr.bf16.gmra.mxu0 %v899
      %v944 = vpop.f32.mrf.mxu0
      %v945 = vadd.f32 %v884, %v944
      %v946 = vpop.f32.mrf.mxu0
      %v947 = vpop.f32.mrf.mxu0
      %v948 = vadd.f32 %v884, %v947
      %v949 = vpop.f32.mrf.mxu0
      %950 = vmatprep.mubr.bf16.mxu0 0
      %951 = vmatmul.mubr.bf16.gmra.mxu0 %v902
      %v952 = vpop.f32.mrf.mxu0
      %v953 = vadd.f32 %v884, %v952
      %v954 = vpop.f32.mrf.mxu0
      %v955 = vpop.f32.mrf.mxu0
      %v956 = vadd.f32 %v884, %v955
      %v957 = vpop.f32.mrf.mxu0
      %958 = vmatprep.mubr.bf16.mxu0 0
      %959 = vmatmul.mubr.bf16.gmra.mxu0 %v905
      %v960 = vpop.f32.mrf.mxu0
      %v961 = vadd.f32 %v884, %v960
      %v962 = vpop.f32.mrf.mxu0
      %v963 = vpop.f32.mrf.mxu0
      %v964 = vadd.f32 %v884, %v963
      %v965 = vpop.f32.mrf.mxu0
      %966 = vmatprep.mubr.bf16.mxu0 0
      %967 = vmatmul.mubr.bf16.gmra.mxu0 %v908
      %v968 = vpop.f32.mrf.mxu0
      %v969 = vadd.f32 %v884, %v968
      %v970 = vpop.f32.mrf.mxu0
      %v971 = vpop.f32.mrf.mxu0
      %v972 = vadd.f32 %v884, %v971
      %v973 = vpop.f32.mrf.mxu0
      %974 = vdwg.mxu0
      %v975 = vpack.c.bf16 %v948, %v945
      %v976 = vpack.c.bf16 %v956, %v953
      %v977 = vpack.c.bf16 %v964, %v961
      %v978 = vpack.c.bf16 %v972, %v969
      %979 = vxpose.xlu0.c.b16.start [1/8] %v580, 128
      %980 = vxpose.xlu0.c.b16.cont [2/8] %v581, 128
      %981 = vxpose.xlu0.c.b16.cont [3/8] %v582, 128
      %982 = vxpose.xlu0.c.b16.cont [4/8] %v583, 128
      %983 = vxpose.xlu0.c.b16.cont [5/8] 0, 128
      %984 = vxpose.xlu0.c.b16.cont [6/8] 0, 128
      %985 = vxpose.xlu0.c.b16.cont [7/8] 0, 128
      %986 = vxpose.xlu0.c.b16.end [8/8] 0, 128
      %v987 = vpop.trf.xlu0
      %v988 = vpop.trf.xlu0
      %v989 = vpop.trf.xlu0
      %v990 = vpop.trf.xlu0
      %v991 = vpop.trf.xlu0
      %v992 = vpop.trf.xlu0
      %v993 = vpop.trf.xlu0
      %v994 = vpop.trf.xlu0
      %vm995 = vcmask 523264
      %v997 = vsel %vm995, %v987, 0
      %999 = vmatprep.subr.bf16.mxu0 0
      %1000 = vmatpush1.bf16.msra.mxu0 0
      %1001 = vmatprep.subr.bf16.mxu0 0
      %1002 = vmatpush1.bf16.msra.mxu0 0
      %1003 = vmatprep.subr.bf16.mxu0 0
      %1004 = vmatpush1.bf16.msra.mxu0 0
      %1005 = vmatprep.subr.bf16.mxu0 0
      %1006 = vmatpush1.bf16.msra.mxu0 0
      %1007 = vmatprep.subr.bf16.mxu0 0
      %1008 = vmatpush1.bf16.msra.mxu0 %v978
      %1009 = vmatprep.subr.bf16.mxu0 0
      %1010 = vmatpush1.bf16.msra.mxu0 %v977
      %1011 = vmatprep.subr.bf16.mxu0 0
      %1012 = vmatpush1.bf16.msra.mxu0 %v976
      %1013 = vmatprep.subr.bf16.mxu0 0
      %1014 = vmatpush1.bf16.msra.mxu0 %v975
      %1015 = vmatprep.subr.bf16.mxu0 0
      %1016 = vmatpush2.bf16.msra.mxu0 0
      %1017 = vmatprep.subr.bf16.mxu0 0
      %1018 = vmatpush2.bf16.msra.mxu0 0
      %1019 = vmatprep.subr.bf16.mxu0 0
      %1020 = vmatpush2.bf16.msra.mxu0 0
      %1021 = vmatprep.subr.bf16.mxu0 0
      %1022 = vmatpush2.bf16.msra.mxu0 0
      %1023 = vmatprep.subr.bf16.mxu0 0
      %1024 = vmatpush2.bf16.msra.mxu0 0
      %1025 = vmatprep.subr.bf16.mxu0 0
      %1026 = vmatpush2.bf16.msra.mxu0 0
      %1027 = vmatprep.subr.bf16.mxu0 0
      %1028 = vmatpush2.bf16.msra.mxu0 0
      %1029 = vmatprep.subr.bf16.mxu0 0
      %1030 = vmatpush2.bf16.msra.mxu0 0
      %1031 = vmatprep.mubr.bf16.mxu0 0
      %1032 = vmatmul.mubr.bf16.gmra.mxu0 %v997
      %v1033 = vpop.f32.mrf.mxu0
      %v1034 = vadd.f32 0.0, %v1033
      %v1035 = vpop.f32.mrf.mxu0
      %v1036 = vpop.f32.mrf.mxu0
      %v1037 = vpop.f32.mrf.mxu0
      %1038 = vdwg.mxu0
      %v1039 = vld [vmem:[%s13] sm:$0xf]
      %v1040 = vmul.f32 %v1034, %v1039
      %vm1041 = vcmask 257024
      %v1042 = vsel %vm1041, %v1040, 0.0
      %v1043 = vrot.slane %v1042, 4
      %v1044 = vadd.f32 %v1042, %v1043
      %v1045 = vrot.slane %v1044, 2
      %v1046 = vadd.f32 %v1044, %v1045
      %v1047 = vrot.slane %v1046, 1
      %v1048 = vadd.f32 %v1046, %v1047
      %v1049 = vmul.f32 %v757, %v1048
      %v1050 = vmul.f32 %v760, %v1048
      %v1051 = vmul.f32 %v765, %v1048
      %v1052 = vmul.f32 %v768, %v1048
      %v1053 = vmul.f32 %v773, %v1048
      %v1054 = vmul.f32 %v776, %v1048
      %v1055 = vmul.f32 %v781, %v1048
      %v1056 = vmul.f32 %v784, %v1048
      %v1057 = vpack.c.bf16 %v1050, %v1049
      %v1058 = vpack.c.bf16 %v1052, %v1051
      %v1059 = vpack.c.bf16 %v1054, %v1053
      %v1060 = vpack.c.bf16 %v1056, %v1055
      %v1061 = vld [vmem:[%s14] sm:$0xf]
      %v1062 = vld [vmem:[%s14 + $0x4] sm:$0xf]
      %v1063 = vld [vmem:[%s14 + $0x8] sm:$0xf]
      %v1064 = vld [vmem:[%s14 + $0xc] sm:$0xf]
      %v1065 = vld [vmem:[%s11] sm:$0x3]
      %v1066 = vld [vmem:[%s12] sm:$0x1]
      %v1068 = vlaneseq
      %v1069 = vshrl.u32 %v1068, 7
      %v1070 = vsub.s32 0, %v1069
      %v1071 = vrot.slane %v1066, %v1070
      %v1074 = vsel %vm605, %v1065, 0
      %1076 = vmatprep.subr.bf16.mxu0 0
      %1077 = vmatpush1.bf16.msra.mxu0 0
      %1078 = vmatprep.subr.bf16.mxu0 0
      %1079 = vmatpush1.bf16.msra.mxu0 0
      %1080 = vmatprep.subr.bf16.mxu0 0
      %1081 = vmatpush1.bf16.msra.mxu0 0
      %1082 = vmatprep.subr.bf16.mxu0 0
      %1083 = vmatpush1.bf16.msra.mxu0 0
      %1084 = vmatprep.subr.bf16.mxu0 0
      %1085 = vmatpush1.bf16.msra.mxu0 0
      %1086 = vmatprep.subr.bf16.mxu0 0
      %1087 = vmatpush1.bf16.msra.mxu0 0
      %1088 = vmatprep.subr.bf16.mxu0 0
      %1089 = vmatpush1.bf16.msra.mxu0 0
      %1090 = vmatprep.subr.bf16.mxu0 0
      %1091 = vmatpush1.bf16.msra.mxu0 %v1074
      %1092 = vmatprep.subr.bf16.mxu0 0
      %1093 = vmatpush2.bf16.msra.mxu0 0
      %1094 = vmatprep.subr.bf16.mxu0 0
      %1095 = vmatpush2.bf16.msra.mxu0 0
      %1096 = vmatprep.subr.bf16.mxu0 0
      %1097 = vmatpush2.bf16.msra.mxu0 0
      %1098 = vmatprep.subr.bf16.mxu0 0
      %1099 = vmatpush2.bf16.msra.mxu0 0
      %1100 = vmatprep.subr.bf16.mxu0 0
      %1101 = vmatpush2.bf16.msra.mxu0 0
      %1102 = vmatprep.subr.bf16.mxu0 0
      %1103 = vmatpush2.bf16.msra.mxu0 0
      %1104 = vmatprep.subr.bf16.mxu0 0
      %1105 = vmatpush2.bf16.msra.mxu0 0
      %1106 = vmatprep.subr.bf16.mxu0 0
      %1107 = vmatpush2.bf16.msra.mxu0 0
      %1108 = vmatprep.mubr.bf16.mxu0 0
      %1109 = vmatmul.mubr.bf16.gmra.mxu0 %v594
      %v1110 = vpop.f32.mrf.mxu0
      %v1111 = vadd.f32 %v1071, %v1110
      %v1112 = vpop.f32.mrf.mxu0
      %v1113 = vpop.f32.mrf.mxu0
      %v1114 = vadd.f32 %v1071, %v1113
      %v1115 = vpop.f32.mrf.mxu0
      %1116 = vmatprep.mubr.bf16.mxu0 0
      %1117 = vmatmul.mubr.bf16.gmra.mxu0 %v597
      %v1118 = vpop.f32.mrf.mxu0
      %v1119 = vadd.f32 %v1071, %v1118
      %v1120 = vpop.f32.mrf.mxu0
      %v1121 = vpop.f32.mrf.mxu0
      %v1122 = vadd.f32 %v1071, %v1121
      %v1123 = vpop.f32.mrf.mxu0
      %1124 = vmatprep.mubr.bf16.mxu0 0
      %1125 = vmatmul.mubr.bf16.gmra.mxu0 %v600
      %v1126 = vpop.f32.mrf.mxu0
      %v1127 = vadd.f32 %v1071, %v1126
      %v1128 = vpop.f32.mrf.mxu0
      %v1129 = vpop.f32.mrf.mxu0
      %v1130 = vadd.f32 %v1071, %v1129
      %v1131 = vpop.f32.mrf.mxu0
      %1132 = vmatprep.mubr.bf16.mxu0 0
      %1133 = vmatmul.mubr.bf16.gmra.mxu0 %v603
      %v1134 = vpop.f32.mrf.mxu0
      %v1135 = vadd.f32 %v1071, %v1134
      %v1136 = vpop.f32.mrf.mxu0
      %v1137 = vpop.f32.mrf.mxu0
      %v1138 = vadd.f32 %v1071, %v1137
      %v1139 = vpop.f32.mrf.mxu0
      %1140 = vdwg.mxu0
      %v1145 = vunpack.c.l.b16 %v1061
      %v1146 = vunpack.c.l.b16 %v1062
      %v1147 = vunpack.c.l.b16 %v1063
      %v1148 = vunpack.c.l.b16 %v1064
      %v1149 = vpack.c.b16 %v1146, %v1145
      %v1150 = vpack.c.b16 %v1148, %v1147
      %v1154 = vsel %vm709, %v1057, 0
      %v1157 = vsel %vm709, %v1058, 0
      %v1160 = vsel %vm709, %v1059, 0
      %v1163 = vsel %vm709, %v1060, 0
      %1165 = vmatprep.subr.bf16.mxu0 0
      %1166 = vmatpush1.bf16.msra.mxu0 0
      %1167 = vmatprep.subr.bf16.mxu0 0
      %1168 = vmatpush1.bf16.msra.mxu0 0
      %1169 = vmatprep.subr.bf16.mxu0 0
      %1170 = vmatpush1.bf16.msra.mxu0 0
      %1171 = vmatprep.subr.bf16.mxu0 0
      %1172 = vmatpush1.bf16.msra.mxu0 0
      %1173 = vmatprep.subr.bf16.mxu0 0
      %1174 = vmatpush1.bf16.msra.mxu0 0
      %1175 = vmatprep.subr.bf16.mxu0 0
      %1176 = vmatpush1.bf16.msra.mxu0 0
      %1177 = vmatprep.subr.bf16.mxu0 0
      %1178 = vmatpush1.bf16.msra.mxu0 %v1150
      %1179 = vmatprep.subr.bf16.mxu0 0
      %1180 = vmatpush1.bf16.msra.mxu0 %v1149
      %1181 = vmatprep.subr.bf16.mxu0 0
      %1182 = vmatpush2.bf16.msra.mxu0 0
      %1183 = vmatprep.subr.bf16.mxu0 0
      %1184 = vmatpush2.bf16.msra.mxu0 0
      %1185 = vmatprep.subr.bf16.mxu0 0
      %1186 = vmatpush2.bf16.msra.mxu0 0
      %1187 = vmatprep.subr.bf16.mxu0 0
      %1188 = vmatpush2.bf16.msra.mxu0 0
      %1189 = vmatprep.subr.bf16.mxu0 0
      %1190 = vmatpush2.bf16.msra.mxu0 0
      %1191 = vmatprep.subr.bf16.mxu0 0
      %1192 = vmatpush2.bf16.msra.mxu0 0
      %1193 = vmatprep.subr.bf16.mxu0 0
      %1194 = vmatpush2.bf16.msra.mxu0 0
      %1195 = vmatprep.subr.bf16.mxu0 0
      %1196 = vmatpush2.bf16.msra.mxu0 0
      %1197 = vmatprep.mubr.bf16.mxu0 0
      %1198 = vmatmul.mubr.bf16.gmra.mxu0 %v1154
      %v1199 = vpop.f32.mrf.mxu0
      %v1200 = vadd.f32 %v1111, %v1199
      %v1201 = vpop.f32.mrf.mxu0
      %v1202 = vpop.f32.mrf.mxu0
      %v1203 = vadd.f32 %v1114, %v1202
      %v1204 = vpop.f32.mrf.mxu0
      %1205 = vmatprep.mubr.bf16.mxu0 0
      %1206 = vmatmul.mubr.bf16.gmra.mxu0 %v1157
      %v1207 = vpop.f32.mrf.mxu0
      %v1208 = vadd.f32 %v1119, %v1207
      %v1209 = vpop.f32.mrf.mxu0
      %v1210 = vpop.f32.mrf.mxu0
      %v1211 = vadd.f32 %v1122, %v1210
      %v1212 = vpop.f32.mrf.mxu0
      %1213 = vmatprep.mubr.bf16.mxu0 0
      %1214 = vmatmul.mubr.bf16.gmra.mxu0 %v1160
      %v1215 = vpop.f32.mrf.mxu0
      %v1216 = vadd.f32 %v1127, %v1215
      %v1217 = vpop.f32.mrf.mxu0
      %v1218 = vpop.f32.mrf.mxu0
      %v1219 = vadd.f32 %v1130, %v1218
      %v1220 = vpop.f32.mrf.mxu0
      %1221 = vmatprep.mubr.bf16.mxu0 0
      %1222 = vmatmul.mubr.bf16.gmra.mxu0 %v1163
      %v1223 = vpop.f32.mrf.mxu0
      %v1224 = vadd.f32 %v1135, %v1223
      %v1225 = vpop.f32.mrf.mxu0
      %v1226 = vpop.f32.mrf.mxu0
      %v1227 = vadd.f32 %v1138, %v1226
      %v1228 = vpop.f32.mrf.mxu0
      %1229 = vdwg.mxu0
      %1230 = vst.msk [vmem:[%s528] sm:$0xff] %vm592, %v1200
      %1231 = vst.msk [vmem:[%s528 + $0x8] sm:$0xff] %vm592, %v1203
      %1232 = vst.msk [vmem:[%s528 + $0x10] sm:$0xff] %vm592, %v1208
      %1233 = vst.msk [vmem:[%s528 + $0x18] sm:$0xff] %vm592, %v1211
      %1234 = vst.msk [vmem:[%s528 + $0x20] sm:$0xff] %vm592, %v1216
      %1235 = vst.msk [vmem:[%s528 + $0x28] sm:$0xff] %vm592, %v1219
      %1236 = vst.msk [vmem:[%s528 + $0x30] sm:$0xff] %vm592, %v1224
      %1237 = vst.msk [vmem:[%s528 + $0x38] sm:$0xff] %vm592, %v1227
      %v1238 = vsel %vm592, %v1200, 0.0
      %v1239 = vsel %vm592, %v1203, 0.0
      %v1240 = vadd.f32 %v1238, %v1239
      %v1241 = vsel %vm592, %v1208, 0.0
      %v1242 = vadd.f32 %v1240, %v1241
      %v1243 = vsel %vm592, %v1211, 0.0
      %v1244 = vadd.f32 %v1242, %v1243
      %v1245 = vsel %vm592, %v1216, 0.0
      %v1246 = vadd.f32 %v1244, %v1245
      %v1247 = vsel %vm592, %v1219, 0.0
      %v1248 = vadd.f32 %v1246, %v1247
      %v1249 = vsel %vm592, %v1224, 0.0
      %v1250 = vadd.f32 %v1248, %v1249
      %v1251 = vsel %vm592, %v1227, 0.0
      %v1252 = vadd.f32 %v1250, %v1251
      %v1253 = vrot.slane %v1252, 4
      %v1254 = vadd.f32 %v1252, %v1253
      %v1255 = vrot.slane %v1254, 2
      %v1256 = vadd.f32 %v1254, %v1255
      %v1257 = vrot.slane %v1256, 1
      %v1258 = vadd.f32 %v1256, %v1257
      %vm1259 = vcmask 24576
      %1260 = vst.msk [vmem:[%s532] sm:$0x1] %vm1259, %v1258
      %v1261 = vmul.f32 %v1200, %v1200
      %v1262 = vmul.f32 %v1203, %v1203
      %v1263 = vmul.f32 %v1208, %v1208
      %v1264 = vmul.f32 %v1211, %v1211
      %v1265 = vmul.f32 %v1216, %v1216
      %v1266 = vmul.f32 %v1219, %v1219
      %v1267 = vmul.f32 %v1224, %v1224
      %v1268 = vmul.f32 %v1227, %v1227
      %v1269 = vsel %vm592, %v1261, 0.0
      %v1270 = vsel %vm592, %v1262, 0.0
      %v1271 = vadd.f32 %v1269, %v1270
      %v1272 = vsel %vm592, %v1263, 0.0
      %v1273 = vadd.f32 %v1271, %v1272
      %v1274 = vsel %vm592, %v1264, 0.0
      %v1275 = vadd.f32 %v1273, %v1274
      %v1276 = vsel %vm592, %v1265, 0.0
      %v1277 = vadd.f32 %v1275, %v1276
      %v1278 = vsel %vm592, %v1266, 0.0
      %v1279 = vadd.f32 %v1277, %v1278
      %v1280 = vsel %vm592, %v1267, 0.0
      %v1281 = vadd.f32 %v1279, %v1280
      %v1282 = vsel %vm592, %v1268, 0.0
      %v1283 = vadd.f32 %v1281, %v1282
      %v1284 = vrot.slane %v1283, 4
      %v1285 = vadd.f32 %v1283, %v1284
      %v1286 = vrot.slane %v1285, 2
      %v1287 = vadd.f32 %v1285, %v1286
      %v1288 = vrot.slane %v1287, 1
      %v1289 = vadd.f32 %v1287, %v1288
      %1290 = vst.msk [vmem:[%s532 + $0x1] sm:$0x1] %vm1259, %v1289
      %p1291 = scmp.lt.s32.totalorder %s28, 1
      %s1292 = scalar_select %p1291, %s28, 1
      %s1293 = smul.addr %s1292, 8
      %s1294 = smul.addr %s1293, 8
      %s1295 = scalar_lea.vmem %s15, %s1294
      %p1296 = scmp.lt.s32.totalorder %s28, 1
      %s1297 = scalar_select %p1296, %s28, 1
      %s1298 = smul.addr %s1297, 2
      %s1299 = scalar_lea.vmem %s16, %s1298
      // Predicated region
      $region81: #{mynet_forward.8} parent=79 // pred_check
        %p1300 = pneg %p366
      $region82: #{mynet_forward.8} parent=79 // pred_check_branch
        %1302 = sbr.rel (%p1300) target = $region84
      $region83: #{mynet_forward.8} parent=79 // pred_region
        _
      $region84: #{mynet_forward.8} parent=79 // pred_fallthru
        _
      // Predicated region
      $region85: #{mynet_forward.8} parent=79 // pred_check
        %p1303 = pneg %p392
      $region86: #{mynet_forward.8} parent=79 // pred_check_branch
        %1305 = sbr.rel (%p1303) target = $region88
      $region87: #{mynet_forward.8} parent=79 // pred_region
        _
      $region88: #{mynet_forward.8} parent=79 // pred_fallthru
        _
    $region80: #{mynet_forward.8} parent=5 // pred_fallthru
      _
    %p1306 = scmp.le.s32.totalorder 2, %s23
    // Predicated region
    $region89: #{mynet_forward.8} parent=5 // pred_check
      %p1307 = pneg %p1306
    $region90: #{mynet_forward.8} parent=5 // pred_check_branch
      %1309 = sbr.rel (%p1307) target = $region92
    $region91: #{mynet_forward.8} parent=5 // pred_region
      %s1310 = ssub.s32 %s23, 2
      // Predicated region
      $region93: #{mynet_forward.8} parent=91 // pred_check
        %p1311 = pneg %p372
      $region94: #{mynet_forward.8} parent=91 // pred_check_branch
        %1313 = sbr.rel (%p1311) target = $region96
      $region95: #{mynet_forward.8} parent=91 // pred_region
        %p1314 = scmp.lt.s32.totalorder %s29, 1
        %s1315 = scalar_select %p1314, %s29, 1
        %s1316 = smul.addr %s1315, 8
        %s1317 = smul.addr %s1316, 8
        %s1318 = scalar_lea.vmem %s15, %s1317
      $region96: #{mynet_forward.8} parent=91 // pred_fallthru
        _
      // Predicated region
      $region97: #{mynet_forward.8} parent=91 // pred_check
        %p1319 = pneg %p398
      $region98: #{mynet_forward.8} parent=91 // pred_check_branch
        %1321 = sbr.rel (%p1319) target = $region100
      $region99: #{mynet_forward.8} parent=91 // pred_region
        %p1322 = scmp.lt.s32.totalorder %s29, 1
        %s1323 = scalar_select %p1322, %s29, 1
        %s1324 = smul.addr %s1323, 2
        %s1325 = scalar_lea.vmem %s16, %s1324
      $region100: #{mynet_forward.8} parent=91 // pred_fallthru
        _
    $region92: #{mynet_forward.8} parent=5 // pred_fallthru
      _
  $region6: #{mynet_forward.8} parent=0 // loop_footer
    %s27 = sadd.s32 1, %s23
  $region7: #{mynet_forward.8} parent=0 // loop_footer_branch
    %22 = sbr.rel target = $region3
  $region8: #{mynet_forward.8} parent=0 // loop_exit
    _

// kernel: mynet_forward.7
$region0: #{mynet_forward.7}
  #allocation0 [shape = 'u32[]', space=smem, size = 0x4, offset = 0x4, fixed_abs, tag = 'smem constant byte address 0x4 - core index']
  #allocation1 [shape = 'u32[144,128]{1,0:T(1,128)}', space=vmem, size = 0x12000, scoped, tag = 'internal scratch']
  %s0 = inlined_call_operand.vmem [shape: f32[2,64,4], index: 0, kind: input, shape index: {}]
  %s1 = inlined_call_operand.vmem [shape: f32[1,4], index: 1, kind: input, shape index: {}]
  %s2 = inlined_call_operand.vmem [shape: f32[1,4], index: 2, kind: input, shape index: {}]
  %s3 = inlined_call_operand.vmem [shape: bf16[4,32], index: 3, kind: input, shape index: {}]
  %s4 = inlined_call_operand.vmem [shape: f32[1,32], index: 4, kind: input, shape index: {}]
  %s5 = inlined_call_operand.vmem [shape: bf16[32,32], index: 5, kind: input, shape index: {}]
  %s6 = inlined_call_operand.vmem [shape: f32[1,32], index: 6, kind: input, shape index: {}]
  %s7 = inlined_call_operand.vmem [shape: bf16[4,32], index: 7, kind: input, shape index: {}]
  %s8 = inlined_call_operand.vmem [shape: f32[1,32], index: 8, kind: input, shape index: {}]
  %s9 = inlined_call_operand.vmem [shape: bf16[32,32], index: 9, kind: input, shape index: {}]
  %s10 = inlined_call_operand.vmem [shape: f32[1,32], index: 10, kind: input, shape index: {}]
  %s11 = inlined_call_operand.vmem [shape: bf16[4,4], index: 11, kind: input, shape index: {}]
  %s12 = inlined_call_operand.vmem [shape: f32[1,4], index: 12, kind: input, shape index: {}]
  %s13 = inlined_call_operand.vmem [shape: f32[4,32], index: 13, kind: input, shape index: {}]
  %s14 = inlined_call_operand.vmem [shape: bf16[32,4], index: 14, kind: input, shape index: {}]
  %s15 = inlined_call_operand.vmem [shape: f32[2,64,4], index: 15, kind: output, shape index: {0}]
  %s16 = inlined_call_operand.vmem [shape: f32[2,2,4], index: 16, kind: output, shape index: {1}]
  %17 = xla_tuple %s15, %s16
  %s18 = sld [smem:[#allocation0]]
  $region101: #{mynet_forward.7} parent=0
    _
  %s20 = ssub.s32 1, %s18
  %s21 = scalar_select 0, %s20, %s18
  loop: start=0, step=1, limit=4
  $region2: #{mynet_forward.7} parent=0 // loop_pre_header
    _
  $region3: #{mynet_forward.7} parent=0 // loop_header
    %s23 = sphi 0, %s27
    %p24 = scmp.ge.s32.totalorder %s23, 4
    %s33 = sphi 0, %s35
    %s36 = sphi 0, %s33
    %s37 = sphi 0, %s36
    %s53 = sphi 0, %s37
    %s57 = sphi 0, %s57
    %s59 = sphi 0, %s57
    %s60 = sphi 0, %s59
    %s74 = sphi 0, %s60
    %s78 = sphi 0, %s78
    %s80 = sphi 0, %s78
    %s81 = sphi 0, %s80
    %s95 = sphi 0, %s81
    %s99 = sphi 0, %s99
    %s101 = sphi 0, %s99
    %s102 = sphi 0, %s101
    %s116 = sphi 0, %s102
    %s120 = sphi 0, %s120
    %s122 = sphi 0, %s120
    %s123 = sphi 0, %s122
    %s137 = sphi 0, %s123
    %s141 = sphi 0, %s141
    %s143 = sphi 0, %s141
    %s144 = sphi 0, %s143
    %s158 = sphi 0, %s144
    %s162 = sphi 0, %s162
    %s164 = sphi 0, %s162
    %s165 = sphi 0, %s164
    %s179 = sphi 0, %s165
    %s183 = sphi 0, %s183
    %s185 = sphi 0, %s183
    %s186 = sphi 0, %s185
    %s200 = sphi 0, %s186
    %s204 = sphi 0, %s204
    %s206 = sphi 0, %s204
    %s207 = sphi 0, %s206
    %s221 = sphi 0, %s207
    %s225 = sphi 0, %s225
    %s227 = sphi 0, %s225
    %s228 = sphi 0, %s227
    %s242 = sphi 0, %s228
    %s246 = sphi 0, %s246
    %s248 = sphi 0, %s246
    %s249 = sphi 0, %s248
    %s263 = sphi 0, %s249
    %s267 = sphi 0, %s267
    %s269 = sphi 0, %s267
    %s270 = sphi 0, %s269
    %s284 = sphi 0, %s270
    %s288 = sphi 0, %s288
    %s290 = sphi 0, %s288
    %s291 = sphi 0, %s290
    %s305 = sphi 0, %s291
    %s309 = sphi 0, %s309
    %s311 = sphi 0, %s309
    %s312 = sphi 0, %s311
    %s326 = sphi 0, %s312
    %s330 = sphi 0, %s330
    %s332 = sphi 0, %s330
    %s333 = sphi 0, %s332
    %s347 = sphi 0, %s333
    %s353 = sphi 0, %s355
    %s356 = sphi 0, %s353
    %s357 = sphi 0, %s356
    %s373 = sphi 0, %s357
    %s379 = sphi 0, %s381
    %s382 = sphi 0, %s379
    %s383 = sphi 0, %s382
    %s399 = sphi 0, %s383
  $region4: #{mynet_forward.7} parent=0 // loop_header_branch
    %26 = sbr.rel (%p24) target = $region8
  $region5: #{mynet_forward.7} parent=0 // loop_body
    %s28 = ssub.s32 %s23, 1
    %s29 = ssub.s32 %s23, 2
    %s30 = sadd.s32 %s23, 1
    %s31 = ssub.s32 %s23, %s30
    %p32 = scmp.eq.s32.totalorder %s31, 0
    %s34 = sadd.s32 %s33, 1
    %s35 = scalar_select %p32, %s33, %s34
    %p38 = pneg %p32
    %p39 = scmp.eq.s32.totalorder %s23, 1
    %p40 = por %p38, %p39
    %p41 = scmp.ne.s32.totalorder %s33, %s36
    %p42 = scmp.eq.s32.totalorder %s23, 0
    %p43 = por %p41, %p42
    %p44 = scmp.ne.s32.totalorder %s33, %s36
    %p45 = scmp.eq.s32.totalorder %s28, 1
    %p46 = por %p44, %p45
    %p47 = scmp.ne.s32.totalorder %s36, %s37
    %p48 = scmp.eq.s32.totalorder %s28, 0
    %p49 = por %p47, %p48
    %p50 = scmp.ne.s32.totalorder %s36, %s37
    %p51 = scmp.eq.s32.totalorder %s29, 1
    %p52 = por %p50, %p51
    %p54 = scmp.ne.s32.totalorder %s37, %s53
    %p55 = scmp.eq.s32.totalorder %s29, 0
    %p56 = por %p54, %p55
    %s58 = sadd.s32 %s57, 1
    %p61 = scmp.eq.s32.totalorder %s23, 1
    %p62 = scmp.ne.s32.totalorder %s57, %s59
    %p63 = scmp.eq.s32.totalorder %s23, 0
    %p64 = por %p62, %p63
    %p65 = scmp.ne.s32.totalorder %s57, %s59
    %p66 = scmp.eq.s32.totalorder %s28, 1
    %p67 = por %p65, %p66
    %p68 = scmp.ne.s32.totalorder %s59, %s60
    %p69 = scmp.eq.s32.totalorder %s28, 0
    %p70 = por %p68, %p69
    %p71 = scmp.ne.s32.totalorder %s59, %s60
    %p72 = scmp.eq.s32.totalorder %s29, 1
    %p73 = por %p71, %p72
    %p75 = scmp.ne.s32.totalorder %s60, %s74
    %p76 = scmp.eq.s32.totalorder %s29, 0
    %p77 = por %p75, %p76
    %s79 = sadd.s32 %s78, 1
    %p82 = scmp.eq.s32.totalorder %s23, 1
    %p83 = scmp.ne.s32.totalorder %s78, %s80
    %p84 = scmp.eq.s32.totalorder %s23, 0
    %p85 = por %p83, %p84
    %p86 = scmp.ne.s32.totalorder %s78, %s80
    %p87 = scmp.eq.s32.totalorder %s28, 1
    %p88 = por %p86, %p87
    %p89 = scmp.ne.s32.totalorder %s80, %s81
    %p90 = scmp.eq.s32.totalorder %s28, 0
    %p91 = por %p89, %p90
    %p92 = scmp.ne.s32.totalorder %s80, %s81
    %p93 = scmp.eq.s32.totalorder %s29, 1
    %p94 = por %p92, %p93
    %p96 = scmp.ne.s32.totalorder %s81, %s95
    %p97 = scmp.eq.s32.totalorder %s29, 0
    %p98 = por %p96, %p97
    %s100 = sadd.s32 %s99, 1
    %p103 = scmp.eq.s32.totalorder %s23, 1
    %p104 = scmp.ne.s32.totalorder %s99, %s101
    %p105 = scmp.eq.s32.totalorder %s23, 0
    %p106 = por %p104, %p105
    %p107 = scmp.ne.s32.totalorder %s99, %s101
    %p108 = scmp.eq.s32.totalorder %s28, 1
    %p109 = por %p107, %p108
    %p110 = scmp.ne.s32.totalorder %s101, %s102
    %p111 = scmp.eq.s32.totalorder %s28, 0
    %p112 = por %p110, %p111
    %p113 = scmp.ne.s32.totalorder %s101, %s102
    %p114 = scmp.eq.s32.totalorder %s29, 1
    %p115 = por %p113, %p114
    %p117 = scmp.ne.s32.totalorder %s102, %s116
    %p118 = scmp.eq.s32.totalorder %s29, 0
    %p119 = por %p117, %p118
    %s121 = sadd.s32 %s120, 1
    %p124 = scmp.eq.s32.totalorder %s23, 1
    %p125 = scmp.ne.s32.totalorder %s120, %s122
    %p126 = scmp.eq.s32.totalorder %s23, 0
    %p127 = por %p125, %p126
    %p128 = scmp.ne.s32.totalorder %s120, %s122
    %p129 = scmp.eq.s32.totalorder %s28, 1
    %p130 = por %p128, %p129
    %p131 = scmp.ne.s32.totalorder %s122, %s123
    %p132 = scmp.eq.s32.totalorder %s28, 0
    %p133 = por %p131, %p132
    %p134 = scmp.ne.s32.totalorder %s122, %s123
    %p135 = scmp.eq.s32.totalorder %s29, 1
    %p136 = por %p134, %p135
    %p138 = scmp.ne.s32.totalorder %s123, %s137
    %p139 = scmp.eq.s32.totalorder %s29, 0
    %p140 = por %p138, %p139
    %s142 = sadd.s32 %s141, 1
    %p145 = scmp.eq.s32.totalorder %s23, 1
    %p146 = scmp.ne.s32.totalorder %s141, %s143
    %p147 = scmp.eq.s32.totalorder %s23, 0
    %p148 = por %p146, %p147
    %p149 = scmp.ne.s32.totalorder %s141, %s143
    %p150 = scmp.eq.s32.totalorder %s28, 1
    %p151 = por %p149, %p150
    %p152 = scmp.ne.s32.totalorder %s143, %s144
    %p153 = scmp.eq.s32.totalorder %s28, 0
    %p154 = por %p152, %p153
    %p155 = scmp.ne.s32.totalorder %s143, %s144
    %p156 = scmp.eq.s32.totalorder %s29, 1
    %p157 = por %p155, %p156
    %p159 = scmp.ne.s32.totalorder %s144, %s158
    %p160 = scmp.eq.s32.totalorder %s29, 0
    %p161 = por %p159, %p160
    %s163 = sadd.s32 %s162, 1
    %p166 = scmp.eq.s32.totalorder %s23, 1
    %p167 = scmp.ne.s32.totalorder %s162, %s164
    %p168 = scmp.eq.s32.totalorder %s23, 0
    %p169 = por %p167, %p168
    %p170 = scmp.ne.s32.totalorder %s162, %s164
    %p171 = scmp.eq.s32.totalorder %s28, 1
    %p172 = por %p170, %p171
    %p173 = scmp.ne.s32.totalorder %s164, %s165
    %p174 = scmp.eq.s32.totalorder %s28, 0
    %p175 = por %p173, %p174
    %p176 = scmp.ne.s32.totalorder %s164, %s165
    %p177 = scmp.eq.s32.totalorder %s29, 1
    %p178 = por %p176, %p177
    %p180 = scmp.ne.s32.totalorder %s165, %s179
    %p181 = scmp.eq.s32.totalorder %s29, 0
    %p182 = por %p180, %p181
    %s184 = sadd.s32 %s183, 1
    %p187 = scmp.eq.s32.totalorder %s23, 1
    %p188 = scmp.ne.s32.totalorder %s183, %s185
    %p189 = scmp.eq.s32.totalorder %s23, 0
    %p190 = por %p188, %p189
    %p191 = scmp.ne.s32.totalorder %s183, %s185
    %p192 = scmp.eq.s32.totalorder %s28, 1
    %p193 = por %p191, %p192
    %p194 = scmp.ne.s32.totalorder %s185, %s186
    %p195 = scmp.eq.s32.totalorder %s28, 0
    %p196 = por %p194, %p195
    %p197 = scmp.ne.s32.totalorder %s185, %s186
    %p198 = scmp.eq.s32.totalorder %s29, 1
    %p199 = por %p197, %p198
    %p201 = scmp.ne.s32.totalorder %s186, %s200
    %p202 = scmp.eq.s32.totalorder %s29, 0
    %p203 = por %p201, %p202
    %s205 = sadd.s32 %s204, 1
    %p208 = scmp.eq.s32.totalorder %s23, 1
    %p209 = scmp.ne.s32.totalorder %s204, %s206
    %p210 = scmp.eq.s32.totalorder %s23, 0
    %p211 = por %p209, %p210
    %p212 = scmp.ne.s32.totalorder %s204, %s206
    %p213 = scmp.eq.s32.totalorder %s28, 1
    %p214 = por %p212, %p213
    %p215 = scmp.ne.s32.totalorder %s206, %s207
    %p216 = scmp.eq.s32.totalorder %s28, 0
    %p217 = por %p215, %p216
    %p218 = scmp.ne.s32.totalorder %s206, %s207
    %p219 = scmp.eq.s32.totalorder %s29, 1
    %p220 = por %p218, %p219
    %p222 = scmp.ne.s32.totalorder %s207, %s221
    %p223 = scmp.eq.s32.totalorder %s29, 0
    %p224 = por %p222, %p223
    %s226 = sadd.s32 %s225, 1
    %p229 = scmp.eq.s32.totalorder %s23, 1
    %p230 = scmp.ne.s32.totalorder %s225, %s227
    %p231 = scmp.eq.s32.totalorder %s23, 0
    %p232 = por %p230, %p231
    %p233 = scmp.ne.s32.totalorder %s225, %s227
    %p234 = scmp.eq.s32.totalorder %s28, 1
    %p235 = por %p233, %p234
    %p236 = scmp.ne.s32.totalorder %s227, %s228
    %p237 = scmp.eq.s32.totalorder %s28, 0
    %p238 = por %p236, %p237
    %p239 = scmp.ne.s32.totalorder %s227, %s228
    %p240 = scmp.eq.s32.totalorder %s29, 1
    %p241 = por %p239, %p240
    %p243 = scmp.ne.s32.totalorder %s228, %s242
    %p244 = scmp.eq.s32.totalorder %s29, 0
    %p245 = por %p243, %p244
    %s247 = sadd.s32 %s246, 1
    %p250 = scmp.eq.s32.totalorder %s23, 1
    %p251 = scmp.ne.s32.totalorder %s246, %s248
    %p252 = scmp.eq.s32.totalorder %s23, 0
    %p253 = por %p251, %p252
    %p254 = scmp.ne.s32.totalorder %s246, %s248
    %p255 = scmp.eq.s32.totalorder %s28, 1
    %p256 = por %p254, %p255
    %p257 = scmp.ne.s32.totalorder %s248, %s249
    %p258 = scmp.eq.s32.totalorder %s28, 0
    %p259 = por %p257, %p258
    %p260 = scmp.ne.s32.totalorder %s248, %s249
    %p261 = scmp.eq.s32.totalorder %s29, 1
    %p262 = por %p260, %p261
    %p264 = scmp.ne.s32.totalorder %s249, %s263
    %p265 = scmp.eq.s32.totalorder %s29, 0
    %p266 = por %p264, %p265
    %s268 = sadd.s32 %s267, 1
    %p271 = scmp.eq.s32.totalorder %s23, 1
    %p272 = scmp.ne.s32.totalorder %s267, %s269
    %p273 = scmp.eq.s32.totalorder %s23, 0
    %p274 = por %p272, %p273
    %p275 = scmp.ne.s32.totalorder %s267, %s269
    %p276 = scmp.eq.s32.totalorder %s28, 1
    %p277 = por %p275, %p276
    %p278 = scmp.ne.s32.totalorder %s269, %s270
    %p279 = scmp.eq.s32.totalorder %s28, 0
    %p280 = por %p278, %p279
    %p281 = scmp.ne.s32.totalorder %s269, %s270
    %p282 = scmp.eq.s32.totalorder %s29, 1
    %p283 = por %p281, %p282
    %p285 = scmp.ne.s32.totalorder %s270, %s284
    %p286 = scmp.eq.s32.totalorder %s29, 0
    %p287 = por %p285, %p286
    %s289 = sadd.s32 %s288, 1
    %p292 = scmp.eq.s32.totalorder %s23, 1
    %p293 = scmp.ne.s32.totalorder %s288, %s290
    %p294 = scmp.eq.s32.totalorder %s23, 0
    %p295 = por %p293, %p294
    %p296 = scmp.ne.s32.totalorder %s288, %s290
    %p297 = scmp.eq.s32.totalorder %s28, 1
    %p298 = por %p296, %p297
    %p299 = scmp.ne.s32.totalorder %s290, %s291
    %p300 = scmp.eq.s32.totalorder %s28, 0
    %p301 = por %p299, %p300
    %p302 = scmp.ne.s32.totalorder %s290, %s291
    %p303 = scmp.eq.s32.totalorder %s29, 1
    %p304 = por %p302, %p303
    %p306 = scmp.ne.s32.totalorder %s291, %s305
    %p307 = scmp.eq.s32.totalorder %s29, 0
    %p308 = por %p306, %p307
    %s310 = sadd.s32 %s309, 1
    %p313 = scmp.eq.s32.totalorder %s23, 1
    %p314 = scmp.ne.s32.totalorder %s309, %s311
    %p315 = scmp.eq.s32.totalorder %s23, 0
    %p316 = por %p314, %p315
    %p317 = scmp.ne.s32.totalorder %s309, %s311
    %p318 = scmp.eq.s32.totalorder %s28, 1
    %p319 = por %p317, %p318
    %p320 = scmp.ne.s32.totalorder %s311, %s312
    %p321 = scmp.eq.s32.totalorder %s28, 0
    %p322 = por %p320, %p321
    %p323 = scmp.ne.s32.totalorder %s311, %s312
    %p324 = scmp.eq.s32.totalorder %s29, 1
    %p325 = por %p323, %p324
    %p327 = scmp.ne.s32.totalorder %s312, %s326
    %p328 = scmp.eq.s32.totalorder %s29, 0
    %p329 = por %p327, %p328
    %s331 = sadd.s32 %s330, 1
    %p334 = scmp.eq.s32.totalorder %s23, 1
    %p335 = scmp.ne.s32.totalorder %s330, %s332
    %p336 = scmp.eq.s32.totalorder %s23, 0
    %p337 = por %p335, %p336
    %p338 = scmp.ne.s32.totalorder %s330, %s332
    %p339 = scmp.eq.s32.totalorder %s28, 1
    %p340 = por %p338, %p339
    %p341 = scmp.ne.s32.totalorder %s332, %s333
    %p342 = scmp.eq.s32.totalorder %s28, 0
    %p343 = por %p341, %p342
    %p344 = scmp.ne.s32.totalorder %s332, %s333
    %p345 = scmp.eq.s32.totalorder %s29, 1
    %p346 = por %p344, %p345
    %p348 = scmp.ne.s32.totalorder %s333, %s347
    %p349 = scmp.eq.s32.totalorder %s29, 0
    %p350 = por %p348, %p349
    %s351 = ssub.s32 %s23, %s30
    %p352 = scmp.eq.s32.totalorder %s351, 0
    %s354 = sadd.s32 %s353, 1
    %s355 = scalar_select %p352, %s353, %s354
    %p358 = pneg %p352
    %p359 = scmp.eq.s32.totalorder %s23, 1
    %p360 = por %p358, %p359
    %p361 = scmp.ne.s32.totalorder %s353, %s356
    %p362 = scmp.eq.s32.totalorder %s23, 0
    %p363 = por %p361, %p362
    %p364 = scmp.ne.s32.totalorder %s353, %s356
    %p365 = scmp.eq.s32.totalorder %s28, 1
    %p366 = por %p364, %p365
    %p367 = scmp.ne.s32.totalorder %s356, %s357
    %p368 = scmp.eq.s32.totalorder %s28, 0
    %p369 = por %p367, %p368
    %p370 = scmp.ne.s32.totalorder %s356, %s357
    %p371 = scmp.eq.s32.totalorder %s29, 1
    %p372 = por %p370, %p371
    %p374 = scmp.ne.s32.totalorder %s357, %s373
    %p375 = scmp.eq.s32.totalorder %s29, 0
    %p376 = por %p374, %p375
    %s377 = ssub.s32 %s23, %s30
    %p378 = scmp.eq.s32.totalorder %s377, 0
    %s380 = sadd.s32 %s379, 1
    %s381 = scalar_select %p378, %s379, %s380
    %p384 = pneg %p378
    %p385 = scmp.eq.s32.totalorder %s23, 1
    %p386 = por %p384, %p385
    %p387 = scmp.ne.s32.totalorder %s379, %s382
    %p388 = scmp.eq.s32.totalorder %s23, 0
    %p389 = por %p387, %p388
    %p390 = scmp.ne.s32.totalorder %s379, %s382
    %p391 = scmp.eq.s32.totalorder %s28, 1
    %p392 = por %p390, %p391
    %p393 = scmp.ne.s32.totalorder %s382, %s383
    %p394 = scmp.eq.s32.totalorder %s28, 0
    %p395 = por %p393, %p394
    %p396 = scmp.ne.s32.totalorder %s382, %s383
    %p397 = scmp.eq.s32.totalorder %s29, 1
    %p398 = por %p396, %p397
    %p400 = scmp.ne.s32.totalorder %s383, %s399
    %p401 = scmp.eq.s32.totalorder %s29, 0
    %p402 = por %p400, %p401
    %p403 = scmp.le.s32.totalorder 1, %s23
    %p404 = scmp.lt.s32.totalorder %s23, 3
    %p405 = pnand %p403, %p404
    %p406 = pneg %p405
    // Predicated region
    $region9: #{mynet_forward.7} parent=5 // pred_check
      _
    $region10: #{mynet_forward.7} parent=5 // pred_check_branch
      %408 = sbr.rel (%p405) target = $region12
    $region11: #{mynet_forward.7} parent=5 // pred_region
      %s409 = ssub.s32 %s23, 1
      // Predicated region
      $region13: #{mynet_forward.7} parent=11 // pred_check
        %p410 = pneg %p70
      $region14: #{mynet_forward.7} parent=11 // pred_check_branch
        %412 = sbr.rel (%p410) target = $region16
      $region15: #{mynet_forward.7} parent=11 // pred_region
        _
      $region16: #{mynet_forward.7} parent=11 // pred_fallthru
        _
      // Predicated region
      $region17: #{mynet_forward.7} parent=11 // pred_check
        %p413 = pneg %p91
      $region18: #{mynet_forward.7} parent=11 // pred_check_branch
        %415 = sbr.rel (%p413) target = $region20
      $region19: #{mynet_forward.7} parent=11 // pred_region
        _
      $region20: #{mynet_forward.7} parent=11 // pred_fallthru
        _
      // Predicated region
      $region21: #{mynet_forward.7} parent=11 // pred_check
        %p416 = pneg %p112
      $region22: #{mynet_forward.7} parent=11 // pred_check_branch
        %418 = sbr.rel (%p416) target = $region24
      $region23: #{mynet_forward.7} parent=11 // pred_region
        _
      $region24: #{mynet_forward.7} parent=11 // pred_fallthru
        _
      // Predicated region
      $region25: #{mynet_forward.7} parent=11 // pred_check
        %p419 = pneg %p133
      $region26: #{mynet_forward.7} parent=11 // pred_check_branch
        %421 = sbr.rel (%p419) target = $region28
      $region27: #{mynet_forward.7} parent=11 // pred_region
        _
      $region28: #{mynet_forward.7} parent=11 // pred_fallthru
        _
      // Predicated region
      $region29: #{mynet_forward.7} parent=11 // pred_check
        %p422 = pneg %p154
      $region30: #{mynet_forward.7} parent=11 // pred_check_branch
        %424 = sbr.rel (%p422) target = $region32
      $region31: #{mynet_forward.7} parent=11 // pred_region
        _
      $region32: #{mynet_forward.7} parent=11 // pred_fallthru
        _
      // Predicated region
      $region33: #{mynet_forward.7} parent=11 // pred_check
        %p425 = pneg %p175
      $region34: #{mynet_forward.7} parent=11 // pred_check_branch
        %427 = sbr.rel (%p425) target = $region36
      $region35: #{mynet_forward.7} parent=11 // pred_region
        _
      $region36: #{mynet_forward.7} parent=11 // pred_fallthru
        _
      // Predicated region
      $region37: #{mynet_forward.7} parent=11 // pred_check
        %p428 = pneg %p196
      $region38: #{mynet_forward.7} parent=11 // pred_check_branch
        %430 = sbr.rel (%p428) target = $region40
      $region39: #{mynet_forward.7} parent=11 // pred_region
        _
      $region40: #{mynet_forward.7} parent=11 // pred_fallthru
        _
      // Predicated region
      $region41: #{mynet_forward.7} parent=11 // pred_check
        %p431 = pneg %p217
      $region42: #{mynet_forward.7} parent=11 // pred_check_branch
        %433 = sbr.rel (%p431) target = $region44
      $region43: #{mynet_forward.7} parent=11 // pred_region
        _
      $region44: #{mynet_forward.7} parent=11 // pred_fallthru
        _
      // Predicated region
      $region45: #{mynet_forward.7} parent=11 // pred_check
        %p434 = pneg %p238
      $region46: #{mynet_forward.7} parent=11 // pred_check_branch
        %436 = sbr.rel (%p434) target = $region48
      $region47: #{mynet_forward.7} parent=11 // pred_region
        _
      $region48: #{mynet_forward.7} parent=11 // pred_fallthru
        _
      // Predicated region
      $region49: #{mynet_forward.7} parent=11 // pred_check
        %p437 = pneg %p259
      $region50: #{mynet_forward.7} parent=11 // pred_check_branch
        %439 = sbr.rel (%p437) target = $region52
      $region51: #{mynet_forward.7} parent=11 // pred_region
        _
      $region52: #{mynet_forward.7} parent=11 // pred_fallthru
        _
      // Predicated region
      $region53: #{mynet_forward.7} parent=11 // pred_check
        %p440 = pneg %p280
      $region54: #{mynet_forward.7} parent=11 // pred_check_branch
        %442 = sbr.rel (%p440) target = $region56
      $region55: #{mynet_forward.7} parent=11 // pred_region
        _
      $region56: #{mynet_forward.7} parent=11 // pred_fallthru
        _
      // Predicated region
      $region57: #{mynet_forward.7} parent=11 // pred_check
        %p443 = pneg %p301
      $region58: #{mynet_forward.7} parent=11 // pred_check_branch
        %445 = sbr.rel (%p443) target = $region60
      $region59: #{mynet_forward.7} parent=11 // pred_region
        _
      $region60: #{mynet_forward.7} parent=11 // pred_fallthru
        _
      // Predicated region
      $region61: #{mynet_forward.7} parent=11 // pred_check
        %p446 = pneg %p322
      $region62: #{mynet_forward.7} parent=11 // pred_check_branch
        %448 = sbr.rel (%p446) target = $region64
      $region63: #{mynet_forward.7} parent=11 // pred_region
        _
      $region64: #{mynet_forward.7} parent=11 // pred_fallthru
        _
      // Predicated region
      $region65: #{mynet_forward.7} parent=11 // pred_check
        %p449 = pneg %p343
      $region66: #{mynet_forward.7} parent=11 // pred_check_branch
        %451 = sbr.rel (%p449) target = $region68
      $region67: #{mynet_forward.7} parent=11 // pred_region
        _
      $region68: #{mynet_forward.7} parent=11 // pred_fallthru
        _
    $region12: #{mynet_forward.7} parent=5 // pred_fallthru
      _
    %p452 = scmp.lt.s32.totalorder %s23, 2
    // Predicated region
    $region69: #{mynet_forward.7} parent=5 // pred_check
      %p453 = pneg %p452
    $region70: #{mynet_forward.7} parent=5 // pred_check_branch
      %455 = sbr.rel (%p453) target = $region72
    $region71: #{mynet_forward.7} parent=5 // pred_region
      // Predicated region
      $region73: #{mynet_forward.7} parent=71 // pred_check
        %p456 = pneg %p43
      $region74: #{mynet_forward.7} parent=71 // pred_check_branch
        %458 = sbr.rel (%p456) target = $region76
      $region75: #{mynet_forward.7} parent=71 // pred_region
        %p459 = scmp.lt.s32.totalorder %s23, 1
        %s460 = scalar_select %p459, %s23, 1
        %s461 = smul.addr %s460, 8
        %s462 = smul.addr %s461, 8
        %s463 = scalar_lea.vmem %s0, %s462
      $region76: #{mynet_forward.7} parent=71 // pred_fallthru
        _
    $region72: #{mynet_forward.7} parent=5 // pred_fallthru
      _
    %p464 = scmp.le.s32.totalorder 1, %s23
    %p465 = scmp.lt.s32.totalorder %s23, 3
    %p466 = pnand %p464, %p465
    %p467 = pneg %p466
    // Predicated region
    $region77: #{mynet_forward.7} parent=5 // pred_check
      _
    $region78: #{mynet_forward.7} parent=5 // pred_check_branch
      %469 = sbr.rel (%p466) target = $region80
    $region79: #{mynet_forward.7} parent=5 // pred_region
      %s470 = ssub.s32 %s23, 1
      %p471 = scmp.lt.s32.totalorder %s28, 1
      %s472 = scalar_select %p471, %s28, 1
      %s473 = smul.addr %s472, 8
      %s474 = smul.addr %s473, 8
      %s475 = scalar_lea.vmem %s0, %s474
      %p476 = pneg %p49
      %p477 = pneg %p46
      %p478 = pneg %p70
      %p479 = pneg %p67
      %p480 = pneg %p91
      %p481 = pneg %p88
      %p482 = pneg %p112
      %p483 = pneg %p109
      %p484 = pneg %p133
      %p485 = pneg %p130
      %p486 = pneg %p154
      %p487 = pneg %p151
      %p488 = pneg %p175
      %p489 = pneg %p172
      %p490 = pneg %p196
      %p491 = pneg %p193
      %p492 = pneg %p217
      %p493 = pneg %p214
      %p494 = pneg %p238
      %p495 = pneg %p235
      %p496 = pneg %p259
      %p497 = pneg %p256
      %p498 = pneg %p280
      %p499 = pneg %p277
      %p500 = pneg %p301
      %p501 = pneg %p298
      %p502 = pneg %p322
      %p503 = pneg %p319
      %p504 = pneg %p343
      %p505 = pneg %p340
      %p506 = pneg %p369
      %p507 = pneg %p366
      %p508 = scmp.lt.s32.totalorder %s28, 1
      %s509 = scalar_select %p508, %s28, 1
      %s510 = smul.addr %s509, 8
      %s511 = smul.addr %s510, 8
      %s512 = scalar_lea.vmem %s15, %s511
      %p513 = pneg %p395
      %p514 = pneg %p392
      %p515 = scmp.lt.s32.totalorder %s28, 1
      %s516 = scalar_select %p515, %s28, 1
      %s517 = smul.addr %s516, 2
      %s518 = scalar_lea.vmem %s16, %s517
      %p519 = scmp.lt.s32.totalorder %s28, 1
      %s520 = scalar_select %p519, %s28, 1
      %s521 = smul.addr %s520, 8
      %s522 = smul.addr %s521, 8
      %s523 = scalar_lea.vmem %s0, %s522
      %p524 = scmp.lt.s32.totalorder %s28, 1
      %s525 = scalar_select %p524, %s28, 1
      %s526 = smul.addr %s525, 8
      %s527 = smul.addr %s526, 8
      %s528 = scalar_lea.vmem %s15, %s527
      %p529 = scmp.lt.s32.totalorder %s28, 1
      %s530 = scalar_select %p529, %s28, 1
      %s531 = smul.addr %s530, 2
      %s532 = scalar_lea.vmem %s16, %s531
      %v534 = vld [vmem:[%s523] sm:$0xff]
      %v535 = vld [vmem:[%s523 + $0x8] sm:$0xff]
      %v536 = vld [vmem:[%s523 + $0x10] sm:$0xff]
      %v537 = vld [vmem:[%s523 + $0x18] sm:$0xff]
      %v538 = vld [vmem:[%s523 + $0x20] sm:$0xff]
      %v539 = vld [vmem:[%s523 + $0x28] sm:$0xff]
      %v540 = vld [vmem:[%s523 + $0x30] sm:$0xff]
      %v541 = vld [vmem:[%s523 + $0x38] sm:$0xff]
      %v542 = vld [vmem:[%s1] sm:$0x1]
      %v544 = vlaneseq
      %v545 = vshrl.u32 %v544, 7
      %v546 = vsub.s32 0, %v545
      %v547 = vrot.slane %v542, %v546
      %v549 = vmul.f32 %v534, %v547
      %v550 = vmul.f32 %v535, %v547
      %v551 = vmul.f32 %v536, %v547
      %v552 = vmul.f32 %v537, %v547
      %v553 = vmul.f32 %v538, %v547
      %v554 = vmul.f32 %v539, %v547
      %v555 = vmul.f32 %v540, %v547
      %v556 = vmul.f32 %v541, %v547
      %v557 = vld [vmem:[%s2] sm:$0x1]
      %v559 = vlaneseq
      %v560 = vshrl.u32 %v559, 7
      %v561 = vsub.s32 0, %v560
      %v562 = vrot.slane %v557, %v561
      %v564 = vadd.f32 %v549, %v562
      %v565 = vadd.f32 %v550, %v562
      %v566 = vadd.f32 %v551, %v562
      %v567 = vadd.f32 %v552, %v562
      %v568 = vadd.f32 %v553, %v562
      %v569 = vadd.f32 %v554, %v562
      %v570 = vadd.f32 %v555, %v562
      %v571 = vadd.f32 %v556, %v562
      %v572 = vpack.c.bf16 %v565, %v564
      %v573 = vpack.c.bf16 %v567, %v566
      %v574 = vpack.c.bf16 %v569, %v568
      %v575 = vpack.c.bf16 %v571, %v570
      %v576 = vld [vmem:[%s3] sm:$0x3]
      %v577 = vld [vmem:[%s4] sm:$0x1]
      %v579 = vlaneseq
      %v580 = vshrl.u32 %v579, 7
      %v581 = vsub.s32 0, %v580
      %v582 = vrot.slane %v577, %v581
      %vm584 = vcmask 31744
      %v586 = vsel %vm584, %v572, 0
      %v589 = vsel %vm584, %v573, 0
      %v592 = vsel %vm584, %v574, 0
      %v595 = vsel %vm584, %v575, 0
      %vm597 = vcmask 1041408
      %v599 = vsel %vm597, %v576, 0
      %601 = vmatprep.subr.bf16.mxu0 0
      %602 = vmatpush1.bf16.msra.mxu0 0
      %603 = vmatprep.subr.bf16.mxu0 0
      %604 = vmatpush1.bf16.msra.mxu0 0
      %605 = vmatprep.subr.bf16.mxu0 0
      %606 = vmatpush1.bf16.msra.mxu0 0
      %607 = vmatprep.subr.bf16.mxu0 0
      %608 = vmatpush1.bf16.msra.mxu0 0
      %609 = vmatprep.subr.bf16.mxu0 0
      %610 = vmatpush1.bf16.msra.mxu0 0
      %611 = vmatprep.subr.bf16.mxu0 0
      %612 = vmatpush1.bf16.msra.mxu0 0
      %613 = vmatprep.subr.bf16.mxu0 0
      %614 = vmatpush1.bf16.msra.mxu0 0
      %615 = vmatprep.subr.bf16.mxu0 0
      %616 = vmatpush1.bf16.msra.mxu0 %v599
      %617 = vmatprep.subr.bf16.mxu0 0
      %618 = vmatpush2.bf16.msra.mxu0 0
      %619 = vmatprep.subr.bf16.mxu0 0
      %620 = vmatpush2.bf16.msra.mxu0 0
      %621 = vmatprep.subr.bf16.mxu0 0
      %622 = vmatpush2.bf16.msra.mxu0 0
      %623 = vmatprep.subr.bf16.mxu0 0
      %624 = vmatpush2.bf16.msra.mxu0 0
      %625 = vmatprep.subr.bf16.mxu0 0
      %626 = vmatpush2.bf16.msra.mxu0 0
      %627 = vmatprep.subr.bf16.mxu0 0
      %628 = vmatpush2.bf16.msra.mxu0 0
      %629 = vmatprep.subr.bf16.mxu0 0
      %630 = vmatpush2.bf16.msra.mxu0 0
      %631 = vmatprep.subr.bf16.mxu0 0
      %632 = vmatpush2.bf16.msra.mxu0 0
      %633 = vmatprep.mubr.bf16.mxu0 0
      %634 = vmatmul.mubr.bf16.gmra.mxu0 %v586
      %v635 = vpop.f32.mrf.mxu0
      %v636 = vadd.f32 %v582, %v635
      %v637 = vpop.f32.mrf.mxu0
      %v638 = vpop.f32.mrf.mxu0
      %v639 = vadd.f32 %v582, %v638
      %v640 = vpop.f32.mrf.mxu0
      %641 = vmatprep.mubr.bf16.mxu0 0
      %642 = vmatmul.mubr.bf16.gmra.mxu0 %v589
      %v643 = vpop.f32.mrf.mxu0
      %v644 = vadd.f32 %v582, %v643
      %v645 = vpop.f32.mrf.mxu0
      %v646 = vpop.f32.mrf.mxu0
      %v647 = vadd.f32 %v582, %v646
      %v648 = vpop.f32.mrf.mxu0
      %649 = vmatprep.mubr.bf16.mxu0 0
      %650 = vmatmul.mubr.bf16.gmra.mxu0 %v592
      %v651 = vpop.f32.mrf.mxu0
      %v652 = vadd.f32 %v582, %v651
      %v653 = vpop.f32.mrf.mxu0
      %v654 = vpop.f32.mrf.mxu0
      %v655 = vadd.f32 %v582, %v654
      %v656 = vpop.f32.mrf.mxu0
      %657 = vmatprep.mubr.bf16.mxu0 0
      %658 = vmatmul.mubr.bf16.gmra.mxu0 %v595
      %v659 = vpop.f32.mrf.mxu0
      %v660 = vadd.f32 %v582, %v659
      %v661 = vpop.f32.mrf.mxu0
      %v662 = vpop.f32.mrf.mxu0
      %v663 = vadd.f32 %v582, %v662
      %v664 = vpop.f32.mrf.mxu0
      %665 = vdwg.mxu0
      %v666 = vmax.f32 %v636, 0.0
      %v667 = vmax.f32 %v639, 0.0
      %v668 = vmax.f32 %v644, 0.0
      %v669 = vmax.f32 %v647, 0.0
      %v670 = vmax.f32 %v652, 0.0
      %v671 = vmax.f32 %v655, 0.0
      %v672 = vmax.f32 %v660, 0.0
      %v673 = vmax.f32 %v663, 0.0
      %v674 = vpack.c.bf16 %v667, %v666
      %v675 = vpack.c.bf16 %v669, %v668
      %v676 = vpack.c.bf16 %v671, %v670
      %v677 = vpack.c.bf16 %v673, %v672
      %v678 = vld [vmem:[%s5] sm:$0xf]
      %v679 = vld [vmem:[%s5 + $0x4] sm:$0xf]
      %v680 = vld [vmem:[%s5 + $0x8] sm:$0xf]
      %v681 = vld [vmem:[%s5 + $0xc] sm:$0xf]
      %v682 = vld [vmem:[%s6] sm:$0x1]
      %v684 = vlaneseq
      %v685 = vshrl.u32 %v684, 7
      %v686 = vsub.s32 0, %v685
      %v687 = vrot.slane %v682, %v686
      %v693 = vunpack.c.l.b16 %v678
      %v694 = vunpack.c.l.b16 %v679
      %v695 = vunpack.c.l.b16 %v680
      %v696 = vunpack.c.l.b16 %v681
      %v697 = vpack.c.b16 %v694, %v693
      %v698 = vpack.c.b16 %v696, %v695
      %vm701 = vcmask 261120
      %v703 = vsel %vm701, %v674, 0
      %v706 = vsel %vm701, %v675, 0
      %v709 = vsel %vm701, %v676, 0
      %v712 = vsel %vm701, %v677, 0
      %714 = vmatprep.subr.bf16.mxu0 0
      %715 = vmatpush1.bf16.msra.mxu0 0
      %716 = vmatprep.subr.bf16.mxu0 0
      %717 = vmatpush1.bf16.msra.mxu0 0
      %718 = vmatprep.subr.bf16.mxu0 0
      %719 = vmatpush1.bf16.msra.mxu0 0
      %720 = vmatprep.subr.bf16.mxu0 0
      %721 = vmatpush1.bf16.msra.mxu0 0
      %722 = vmatprep.subr.bf16.mxu0 0
      %723 = vmatpush1.bf16.msra.mxu0 0
      %724 = vmatprep.subr.bf16.mxu0 0
      %725 = vmatpush1.bf16.msra.mxu0 0
      %726 = vmatprep.subr.bf16.mxu0 0
      %727 = vmatpush1.bf16.msra.mxu0 %v698
      %728 = vmatprep.subr.bf16.mxu0 0
      %729 = vmatpush1.bf16.msra.mxu0 %v697
      %730 = vmatprep.subr.bf16.mxu0 0
      %731 = vmatpush2.bf16.msra.mxu0 0
      %732 = vmatprep.subr.bf16.mxu0 0
      %733 = vmatpush2.bf16.msra.mxu0 0
      %734 = vmatprep.subr.bf16.mxu0 0
      %735 = vmatpush2.bf16.msra.mxu0 0
      %736 = vmatprep.subr.bf16.mxu0 0
      %737 = vmatpush2.bf16.msra.mxu0 0
      %738 = vmatprep.subr.bf16.mxu0 0
      %739 = vmatpush2.bf16.msra.mxu0 0
      %740 = vmatprep.subr.bf16.mxu0 0
      %741 = vmatpush2.bf16.msra.mxu0 0
      %742 = vmatprep.subr.bf16.mxu0 0
      %743 = vmatpush2.bf16.msra.mxu0 0
      %744 = vmatprep.subr.bf16.mxu0 0
      %745 = vmatpush2.bf16.msra.mxu0 0
      %746 = vmatprep.mubr.bf16.mxu0 0
      %747 = vmatmul.mubr.bf16.gmra.mxu0 %v703
      %v748 = vpop.f32.mrf.mxu0
      %v749 = vadd.f32 %v687, %v748
      %v750 = vpop.f32.mrf.mxu0
      %v751 = vpop.f32.mrf.mxu0
      %v752 = vadd.f32 %v687, %v751
      %v753 = vpop.f32.mrf.mxu0
      %754 = vmatprep.mubr.bf16.mxu0 0
      %755 = vmatmul.mubr.bf16.gmra.mxu0 %v706
      %v756 = vpop.f32.mrf.mxu0
      %v757 = vadd.f32 %v687, %v756
      %v758 = vpop.f32.mrf.mxu0
      %v759 = vpop.f32.mrf.mxu0
      %v760 = vadd.f32 %v687, %v759
      %v761 = vpop.f32.mrf.mxu0
      %762 = vmatprep.mubr.bf16.mxu0 0
      %763 = vmatmul.mubr.bf16.gmra.mxu0 %v709
      %v764 = vpop.f32.mrf.mxu0
      %v765 = vadd.f32 %v687, %v764
      %v766 = vpop.f32.mrf.mxu0
      %v767 = vpop.f32.mrf.mxu0
      %v768 = vadd.f32 %v687, %v767
      %v769 = vpop.f32.mrf.mxu0
      %770 = vmatprep.mubr.bf16.mxu0 0
      %771 = vmatmul.mubr.bf16.gmra.mxu0 %v712
      %v772 = vpop.f32.mrf.mxu0
      %v773 = vadd.f32 %v687, %v772
      %v774 = vpop.f32.mrf.mxu0
      %v775 = vpop.f32.mrf.mxu0
      %v776 = vadd.f32 %v687, %v775
      %v777 = vpop.f32.mrf.mxu0
      %778 = vdwg.mxu0
      %v779 = vld [vmem:[%s7] sm:$0x3]
      %v780 = vld [vmem:[%s8] sm:$0x1]
      %v782 = vlaneseq
      %v783 = vshrl.u32 %v782, 7
      %v784 = vsub.s32 0, %v783
      %v785 = vrot.slane %v780, %v784
      %v788 = vsel %vm597, %v779, 0
      %790 = vmatprep.subr.bf16.mxu0 0
      %791 = vmatpush1.bf16.msra.mxu0 0
      %792 = vmatprep.subr.bf16.mxu0 0
      %793 = vmatpush1.bf16.msra.mxu0 0
      %794 = vmatprep.subr.bf16.mxu0 0
      %795 = vmatpush1.bf16.msra.mxu0 0
      %796 = vmatprep.subr.bf16.mxu0 0
      %797 = vmatpush1.bf16.msra.mxu0 0
      %798 = vmatprep.subr.bf16.mxu0 0
      %799 = vmatpush1.bf16.msra.mxu0 0
      %800 = vmatprep.subr.bf16.mxu0 0
      %801 = vmatpush1.bf16.msra.mxu0 0
      %802 = vmatprep.subr.bf16.mxu0 0
      %803 = vmatpush1.bf16.msra.mxu0 0
      %804 = vmatprep.subr.bf16.mxu0 0
      %805 = vmatpush1.bf16.msra.mxu0 %v788
      %806 = vmatprep.subr.bf16.mxu0 0
      %807 = vmatpush2.bf16.msra.mxu0 0
      %808 = vmatprep.subr.bf16.mxu0 0
      %809 = vmatpush2.bf16.msra.mxu0 0
      %810 = vmatprep.subr.bf16.mxu0 0
      %811 = vmatpush2.bf16.msra.mxu0 0
      %812 = vmatprep.subr.bf16.mxu0 0
      %813 = vmatpush2.bf16.msra.mxu0 0
      %814 = vmatprep.subr.bf16.mxu0 0
      %815 = vmatpush2.bf16.msra.mxu0 0
      %816 = vmatprep.subr.bf16.mxu0 0
      %817 = vmatpush2.bf16.msra.mxu0 0
      %818 = vmatprep.subr.bf16.mxu0 0
      %819 = vmatpush2.bf16.msra.mxu0 0
      %820 = vmatprep.subr.bf16.mxu0 0
      %821 = vmatpush2.bf16.msra.mxu0 0
      %822 = vmatprep.mubr.bf16.mxu0 0
      %823 = vmatmul.mubr.bf16.gmra.mxu0 %v586
      %v824 = vpop.f32.mrf.mxu0
      %v825 = vadd.f32 %v785, %v824
      %v826 = vpop.f32.mrf.mxu0
      %v827 = vpop.f32.mrf.mxu0
      %v828 = vadd.f32 %v785, %v827
      %v829 = vpop.f32.mrf.mxu0
      %830 = vmatprep.mubr.bf16.mxu0 0
      %831 = vmatmul.mubr.bf16.gmra.mxu0 %v589
      %v832 = vpop.f32.mrf.mxu0
      %v833 = vadd.f32 %v785, %v832
      %v834 = vpop.f32.mrf.mxu0
      %v835 = vpop.f32.mrf.mxu0
      %v836 = vadd.f32 %v785, %v835
      %v837 = vpop.f32.mrf.mxu0
      %838 = vmatprep.mubr.bf16.mxu0 0
      %839 = vmatmul.mubr.bf16.gmra.mxu0 %v592
      %v840 = vpop.f32.mrf.mxu0
      %v841 = vadd.f32 %v785, %v840
      %v842 = vpop.f32.mrf.mxu0
      %v843 = vpop.f32.mrf.mxu0
      %v844 = vadd.f32 %v785, %v843
      %v845 = vpop.f32.mrf.mxu0
      %846 = vmatprep.mubr.bf16.mxu0 0
      %847 = vmatmul.mubr.bf16.gmra.mxu0 %v595
      %v848 = vpop.f32.mrf.mxu0
      %v849 = vadd.f32 %v785, %v848
      %v850 = vpop.f32.mrf.mxu0
      %v851 = vpop.f32.mrf.mxu0
      %v852 = vadd.f32 %v785, %v851
      %v853 = vpop.f32.mrf.mxu0
      %854 = vdwg.mxu0
      %v855 = vmax.f32 %v825, 0.0
      %v856 = vmax.f32 %v828, 0.0
      %v857 = vmax.f32 %v833, 0.0
      %v858 = vmax.f32 %v836, 0.0
      %v859 = vmax.f32 %v841, 0.0
      %v860 = vmax.f32 %v844, 0.0
      %v861 = vmax.f32 %v849, 0.0
      %v862 = vmax.f32 %v852, 0.0
      %v863 = vpack.c.bf16 %v856, %v855
      %v864 = vpack.c.bf16 %v858, %v857
      %v865 = vpack.c.bf16 %v860, %v859
      %v866 = vpack.c.bf16 %v862, %v861
      %v867 = vld [vmem:[%s9] sm:$0xf]
      %v868 = vld [vmem:[%s9 + $0x4] sm:$0xf]
      %v869 = vld [vmem:[%s9 + $0x8] sm:$0xf]
      %v870 = vld [vmem:[%s9 + $0xc] sm:$0xf]
      %v871 = vld [vmem:[%s10] sm:$0x1]
      %v873 = vlaneseq
      %v874 = vshrl.u32 %v873, 7
      %v875 = vsub.s32 0, %v874
      %v876 = vrot.slane %v871, %v875
      %v882 = vunpack.c.l.b16 %v867
      %v883 = vunpack.c.l.b16 %v868
      %v884 = vunpack.c.l.b16 %v869
      %v885 = vunpack.c.l.b16 %v870
      %v886 = vpack.c.b16 %v883, %v882
      %v887 = vpack.c.b16 %v885, %v884
      %v891 = vsel %vm701, %v863, 0
      %v894 = vsel %vm701, %v864, 0
      %v897 = vsel %vm701, %v865, 0
      %v900 = vsel %vm701, %v866, 0
      %902 = vmatprep.subr.bf16.mxu0 0
      %903 = vmatpush1.bf16.msra.mxu0 0
      %904 = vmatprep.subr.bf16.mxu0 0
      %905 = vmatpush1.bf16.msra.mxu0 0
      %906 = vmatprep.subr.bf16.mxu0 0
      %907 = vmatpush1.bf16.msra.mxu0 0
      %908 = vmatprep.subr.bf16.mxu0 0
      %909 = vmatpush1.bf16.msra.mxu0 0
      %910 = vmatprep.subr.bf16.mxu0 0
      %911 = vmatpush1.bf16.msra.mxu0 0
      %912 = vmatprep.subr.bf16.mxu0 0
      %913 = vmatpush1.bf16.msra.mxu0 0
      %914 = vmatprep.subr.bf16.mxu0 0
      %915 = vmatpush1.bf16.msra.mxu0 %v887
      %916 = vmatprep.subr.bf16.mxu0 0
      %917 = vmatpush1.bf16.msra.mxu0 %v886
      %918 = vmatprep.subr.bf16.mxu0 0
      %919 = vmatpush2.bf16.msra.mxu0 0
      %920 = vmatprep.subr.bf16.mxu0 0
      %921 = vmatpush2.bf16.msra.mxu0 0
      %922 = vmatprep.subr.bf16.mxu0 0
      %923 = vmatpush2.bf16.msra.mxu0 0
      %924 = vmatprep.subr.bf16.mxu0 0
      %925 = vmatpush2.bf16.msra.mxu0 0
      %926 = vmatprep.subr.bf16.mxu0 0
      %927 = vmatpush2.bf16.msra.mxu0 0
      %928 = vmatprep.subr.bf16.mxu0 0
      %929 = vmatpush2.bf16.msra.mxu0 0
      %930 = vmatprep.subr.bf16.mxu0 0
      %931 = vmatpush2.bf16.msra.mxu0 0
      %932 = vmatprep.subr.bf16.mxu0 0
      %933 = vmatpush2.bf16.msra.mxu0 0
      %934 = vmatprep.mubr.bf16.mxu0 0
      %935 = vmatmul.mubr.bf16.gmra.mxu0 %v891
      %v936 = vpop.f32.mrf.mxu0
      %v937 = vadd.f32 %v876, %v936
      %v938 = vpop.f32.mrf.mxu0
      %v939 = vpop.f32.mrf.mxu0
      %v940 = vadd.f32 %v876, %v939
      %v941 = vpop.f32.mrf.mxu0
      %942 = vmatprep.mubr.bf16.mxu0 0
      %943 = vmatmul.mubr.bf16.gmra.mxu0 %v894
      %v944 = vpop.f32.mrf.mxu0
      %v945 = vadd.f32 %v876, %v944
      %v946 = vpop.f32.mrf.mxu0
      %v947 = vpop.f32.mrf.mxu0
      %v948 = vadd.f32 %v876, %v947
      %v949 = vpop.f32.mrf.mxu0
      %950 = vmatprep.mubr.bf16.mxu0 0
      %951 = vmatmul.mubr.bf16.gmra.mxu0 %v897
      %v952 = vpop.f32.mrf.mxu0
      %v953 = vadd.f32 %v876, %v952
      %v954 = vpop.f32.mrf.mxu0
      %v955 = vpop.f32.mrf.mxu0
      %v956 = vadd.f32 %v876, %v955
      %v957 = vpop.f32.mrf.mxu0
      %958 = vmatprep.mubr.bf16.mxu0 0
      %959 = vmatmul.mubr.bf16.gmra.mxu0 %v900
      %v960 = vpop.f32.mrf.mxu0
      %v961 = vadd.f32 %v876, %v960
      %v962 = vpop.f32.mrf.mxu0
      %v963 = vpop.f32.mrf.mxu0
      %v964 = vadd.f32 %v876, %v963
      %v965 = vpop.f32.mrf.mxu0
      %966 = vdwg.mxu0
      %v967 = vpack.c.bf16 %v940, %v937
      %v968 = vpack.c.bf16 %v948, %v945
      %v969 = vpack.c.bf16 %v956, %v953
      %v970 = vpack.c.bf16 %v964, %v961
      %971 = vxpose.xlu0.c.b16.start [1/8] %v572, 128
      %972 = vxpose.xlu0.c.b16.cont [2/8] %v573, 128
      %973 = vxpose.xlu0.c.b16.cont [3/8] %v574, 128
      %974 = vxpose.xlu0.c.b16.cont [4/8] %v575, 128
      %975 = vxpose.xlu0.c.b16.cont [5/8] 0, 128
      %976 = vxpose.xlu0.c.b16.cont [6/8] 0, 128
      %977 = vxpose.xlu0.c.b16.cont [7/8] 0, 128
      %978 = vxpose.xlu0.c.b16.end [8/8] 0, 128
      %v979 = vpop.trf.xlu0
      %v980 = vpop.trf.xlu0
      %v981 = vpop.trf.xlu0
      %v982 = vpop.trf.xlu0
      %v983 = vpop.trf.xlu0
      %v984 = vpop.trf.xlu0
      %v985 = vpop.trf.xlu0
      %v986 = vpop.trf.xlu0
      %vm987 = vcmask 523264
      %v989 = vsel %vm987, %v979, 0
      %991 = vmatprep.subr.bf16.mxu0 0
      %992 = vmatpush1.bf16.msra.mxu0 0
      %993 = vmatprep.subr.bf16.mxu0 0
      %994 = vmatpush1.bf16.msra.mxu0 0
      %995 = vmatprep.subr.bf16.mxu0 0
      %996 = vmatpush1.bf16.msra.mxu0 0
      %997 = vmatprep.subr.bf16.mxu0 0
      %998 = vmatpush1.bf16.msra.mxu0 0
      %999 = vmatprep.subr.bf16.mxu0 0
      %1000 = vmatpush1.bf16.msra.mxu0 %v970
      %1001 = vmatprep.subr.bf16.mxu0 0
      %1002 = vmatpush1.bf16.msra.mxu0 %v969
      %1003 = vmatprep.subr.bf16.mxu0 0
      %1004 = vmatpush1.bf16.msra.mxu0 %v968
      %1005 = vmatprep.subr.bf16.mxu0 0
      %1006 = vmatpush1.bf16.msra.mxu0 %v967
      %1007 = vmatprep.subr.bf16.mxu0 0
      %1008 = vmatpush2.bf16.msra.mxu0 0
      %1009 = vmatprep.subr.bf16.mxu0 0
      %1010 = vmatpush2.bf16.msra.mxu0 0
      %1011 = vmatprep.subr.bf16.mxu0 0
      %1012 = vmatpush2.bf16.msra.mxu0 0
      %1013 = vmatprep.subr.bf16.mxu0 0
      %1014 = vmatpush2.bf16.msra.mxu0 0
      %1015 = vmatprep.subr.bf16.mxu0 0
      %1016 = vmatpush2.bf16.msra.mxu0 0
      %1017 = vmatprep.subr.bf16.mxu0 0
      %1018 = vmatpush2.bf16.msra.mxu0 0
      %1019 = vmatprep.subr.bf16.mxu0 0
      %1020 = vmatpush2.bf16.msra.mxu0 0
      %1021 = vmatprep.subr.bf16.mxu0 0
      %1022 = vmatpush2.bf16.msra.mxu0 0
      %1023 = vmatprep.mubr.bf16.mxu0 0
      %1024 = vmatmul.mubr.bf16.gmra.mxu0 %v989
      %v1025 = vpop.f32.mrf.mxu0
      %v1026 = vadd.f32 0.0, %v1025
      %v1027 = vpop.f32.mrf.mxu0
      %v1028 = vpop.f32.mrf.mxu0
      %v1029 = vpop.f32.mrf.mxu0
      %1030 = vdwg.mxu0
      %v1031 = vld [vmem:[%s13] sm:$0xf]
      %v1032 = vmul.f32 %v1026, %v1031
      %vm1033 = vcmask 257024
      %v1034 = vsel %vm1033, %v1032, 0.0
      %v1035 = vrot.slane %v1034, 4
      %v1036 = vadd.f32 %v1034, %v1035
      %v1037 = vrot.slane %v1036, 2
      %v1038 = vadd.f32 %v1036, %v1037
      %v1039 = vrot.slane %v1038, 1
      %v1040 = vadd.f32 %v1038, %v1039
      %v1041 = vmul.f32 %v749, %v1040
      %v1042 = vmul.f32 %v752, %v1040
      %v1043 = vmul.f32 %v757, %v1040
      %v1044 = vmul.f32 %v760, %v1040
      %v1045 = vmul.f32 %v765, %v1040
      %v1046 = vmul.f32 %v768, %v1040
      %v1047 = vmul.f32 %v773, %v1040
      %v1048 = vmul.f32 %v776, %v1040
      %v1049 = vpack.c.bf16 %v1042, %v1041
      %v1050 = vpack.c.bf16 %v1044, %v1043
      %v1051 = vpack.c.bf16 %v1046, %v1045
      %v1052 = vpack.c.bf16 %v1048, %v1047
      %v1053 = vld [vmem:[%s14] sm:$0xf]
      %v1054 = vld [vmem:[%s14 + $0x4] sm:$0xf]
      %v1055 = vld [vmem:[%s14 + $0x8] sm:$0xf]
      %v1056 = vld [vmem:[%s14 + $0xc] sm:$0xf]
      %v1057 = vld [vmem:[%s11] sm:$0x3]
      %v1058 = vld [vmem:[%s12] sm:$0x1]
      %v1060 = vlaneseq
      %v1061 = vshrl.u32 %v1060, 7
      %v1062 = vsub.s32 0, %v1061
      %v1063 = vrot.slane %v1058, %v1062
      %v1066 = vsel %vm597, %v1057, 0
      %1068 = vmatprep.subr.bf16.mxu0 0
      %1069 = vmatpush1.bf16.msra.mxu0 0
      %1070 = vmatprep.subr.bf16.mxu0 0
      %1071 = vmatpush1.bf16.msra.mxu0 0
      %1072 = vmatprep.subr.bf16.mxu0 0
      %1073 = vmatpush1.bf16.msra.mxu0 0
      %1074 = vmatprep.subr.bf16.mxu0 0
      %1075 = vmatpush1.bf16.msra.mxu0 0
      %1076 = vmatprep.subr.bf16.mxu0 0
      %1077 = vmatpush1.bf16.msra.mxu0 0
      %1078 = vmatprep.subr.bf16.mxu0 0
      %1079 = vmatpush1.bf16.msra.mxu0 0
      %1080 = vmatprep.subr.bf16.mxu0 0
      %1081 = vmatpush1.bf16.msra.mxu0 0
      %1082 = vmatprep.subr.bf16.mxu0 0
      %1083 = vmatpush1.bf16.msra.mxu0 %v1066
      %1084 = vmatprep.subr.bf16.mxu0 0
      %1085 = vmatpush2.bf16.msra.mxu0 0
      %1086 = vmatprep.subr.bf16.mxu0 0
      %1087 = vmatpush2.bf16.msra.mxu0 0
      %1088 = vmatprep.subr.bf16.mxu0 0
      %1089 = vmatpush2.bf16.msra.mxu0 0
      %1090 = vmatprep.subr.bf16.mxu0 0
      %1091 = vmatpush2.bf16.msra.mxu0 0
      %1092 = vmatprep.subr.bf16.mxu0 0
      %1093 = vmatpush2.bf16.msra.mxu0 0
      %1094 = vmatprep.subr.bf16.mxu0 0
      %1095 = vmatpush2.bf16.msra.mxu0 0
      %1096 = vmatprep.subr.bf16.mxu0 0
      %1097 = vmatpush2.bf16.msra.mxu0 0
      %1098 = vmatprep.subr.bf16.mxu0 0
      %1099 = vmatpush2.bf16.msra.mxu0 0
      %1100 = vmatprep.mubr.bf16.mxu0 0
      %1101 = vmatmul.mubr.bf16.gmra.mxu0 %v586
      %v1102 = vpop.f32.mrf.mxu0
      %v1103 = vadd.f32 %v1063, %v1102
      %v1104 = vpop.f32.mrf.mxu0
      %v1105 = vpop.f32.mrf.mxu0
      %v1106 = vadd.f32 %v1063, %v1105
      %v1107 = vpop.f32.mrf.mxu0
      %1108 = vmatprep.mubr.bf16.mxu0 0
      %1109 = vmatmul.mubr.bf16.gmra.mxu0 %v589
      %v1110 = vpop.f32.mrf.mxu0
      %v1111 = vadd.f32 %v1063, %v1110
      %v1112 = vpop.f32.mrf.mxu0
      %v1113 = vpop.f32.mrf.mxu0
      %v1114 = vadd.f32 %v1063, %v1113
      %v1115 = vpop.f32.mrf.mxu0
      %1116 = vmatprep.mubr.bf16.mxu0 0
      %1117 = vmatmul.mubr.bf16.gmra.mxu0 %v592
      %v1118 = vpop.f32.mrf.mxu0
      %v1119 = vadd.f32 %v1063, %v1118
      %v1120 = vpop.f32.mrf.mxu0
      %v1121 = vpop.f32.mrf.mxu0
      %v1122 = vadd.f32 %v1063, %v1121
      %v1123 = vpop.f32.mrf.mxu0
      %1124 = vmatprep.mubr.bf16.mxu0 0
      %1125 = vmatmul.mubr.bf16.gmra.mxu0 %v595
      %v1126 = vpop.f32.mrf.mxu0
      %v1127 = vadd.f32 %v1063, %v1126
      %v1128 = vpop.f32.mrf.mxu0
      %v1129 = vpop.f32.mrf.mxu0
      %v1130 = vadd.f32 %v1063, %v1129
      %v1131 = vpop.f32.mrf.mxu0
      %1132 = vdwg.mxu0
      %v1137 = vunpack.c.l.b16 %v1053
      %v1138 = vunpack.c.l.b16 %v1054
      %v1139 = vunpack.c.l.b16 %v1055
      %v1140 = vunpack.c.l.b16 %v1056
      %v1141 = vpack.c.b16 %v1138, %v1137
      %v1142 = vpack.c.b16 %v1140, %v1139
      %v1146 = vsel %vm701, %v1049, 0
      %v1149 = vsel %vm701, %v1050, 0
      %v1152 = vsel %vm701, %v1051, 0
      %v1155 = vsel %vm701, %v1052, 0
      %1157 = vmatprep.subr.bf16.mxu0 0
      %1158 = vmatpush1.bf16.msra.mxu0 0
      %1159 = vmatprep.subr.bf16.mxu0 0
      %1160 = vmatpush1.bf16.msra.mxu0 0
      %1161 = vmatprep.subr.bf16.mxu0 0
      %1162 = vmatpush1.bf16.msra.mxu0 0
      %1163 = vmatprep.subr.bf16.mxu0 0
      %1164 = vmatpush1.bf16.msra.mxu0 0
      %1165 = vmatprep.subr.bf16.mxu0 0
      %1166 = vmatpush1.bf16.msra.mxu0 0
      %1167 = vmatprep.subr.bf16.mxu0 0
      %1168 = vmatpush1.bf16.msra.mxu0 0
      %1169 = vmatprep.subr.bf16.mxu0 0
      %1170 = vmatpush1.bf16.msra.mxu0 %v1142
      %1171 = vmatprep.subr.bf16.mxu0 0
      %1172 = vmatpush1.bf16.msra.mxu0 %v1141
      %1173 = vmatprep.subr.bf16.mxu0 0
      %1174 = vmatpush2.bf16.msra.mxu0 0
      %1175 = vmatprep.subr.bf16.mxu0 0
      %1176 = vmatpush2.bf16.msra.mxu0 0
      %1177 = vmatprep.subr.bf16.mxu0 0
      %1178 = vmatpush2.bf16.msra.mxu0 0
      %1179 = vmatprep.subr.bf16.mxu0 0
      %1180 = vmatpush2.bf16.msra.mxu0 0
      %1181 = vmatprep.subr.bf16.mxu0 0
      %1182 = vmatpush2.bf16.msra.mxu0 0
      %1183 = vmatprep.subr.bf16.mxu0 0
      %1184 = vmatpush2.bf16.msra.mxu0 0
      %1185 = vmatprep.subr.bf16.mxu0 0
      %1186 = vmatpush2.bf16.msra.mxu0 0
      %1187 = vmatprep.subr.bf16.mxu0 0
      %1188 = vmatpush2.bf16.msra.mxu0 0
      %1189 = vmatprep.mubr.bf16.mxu0 0
      %1190 = vmatmul.mubr.bf16.gmra.mxu0 %v1146
      %v1191 = vpop.f32.mrf.mxu0
      %v1192 = vadd.f32 %v1103, %v1191
      %v1193 = vpop.f32.mrf.mxu0
      %v1194 = vpop.f32.mrf.mxu0
      %v1195 = vadd.f32 %v1106, %v1194
      %v1196 = vpop.f32.mrf.mxu0
      %1197 = vmatprep.mubr.bf16.mxu0 0
      %1198 = vmatmul.mubr.bf16.gmra.mxu0 %v1149
      %v1199 = vpop.f32.mrf.mxu0
      %v1200 = vadd.f32 %v1111, %v1199
      %v1201 = vpop.f32.mrf.mxu0
      %v1202 = vpop.f32.mrf.mxu0
      %v1203 = vadd.f32 %v1114, %v1202
      %v1204 = vpop.f32.mrf.mxu0
      %1205 = vmatprep.mubr.bf16.mxu0 0
      %1206 = vmatmul.mubr.bf16.gmra.mxu0 %v1152
      %v1207 = vpop.f32.mrf.mxu0
      %v1208 = vadd.f32 %v1119, %v1207
      %v1209 = vpop.f32.mrf.mxu0
      %v1210 = vpop.f32.mrf.mxu0
      %v1211 = vadd.f32 %v1122, %v1210
      %v1212 = vpop.f32.mrf.mxu0
      %1213 = vmatprep.mubr.bf16.mxu0 0
      %1214 = vmatmul.mubr.bf16.gmra.mxu0 %v1155
      %v1215 = vpop.f32.mrf.mxu0
      %v1216 = vadd.f32 %v1127, %v1215
      %v1217 = vpop.f32.mrf.mxu0
      %v1218 = vpop.f32.mrf.mxu0
      %v1219 = vadd.f32 %v1130, %v1218
      %v1220 = vpop.f32.mrf.mxu0
      %1221 = vdwg.mxu0
      %1222 = vst.msk [vmem:[%s528] sm:$0xff] %vm584, %v1192
      %1223 = vst.msk [vmem:[%s528 + $0x8] sm:$0xff] %vm584, %v1195
      %1224 = vst.msk [vmem:[%s528 + $0x10] sm:$0xff] %vm584, %v1200
      %1225 = vst.msk [vmem:[%s528 + $0x18] sm:$0xff] %vm584, %v1203
      %1226 = vst.msk [vmem:[%s528 + $0x20] sm:$0xff] %vm584, %v1208
      %1227 = vst.msk [vmem:[%s528 + $0x28] sm:$0xff] %vm584, %v1211
      %1228 = vst.msk [vmem:[%s528 + $0x30] sm:$0xff] %vm584, %v1216
      %1229 = vst.msk [vmem:[%s528 + $0x38] sm:$0xff] %vm584, %v1219
      %v1230 = vsel %vm584, %v1192, 0.0
      %v1231 = vsel %vm584, %v1195, 0.0
      %v1232 = vadd.f32 %v1230, %v1231
      %v1233 = vsel %vm584, %v1200, 0.0
      %v1234 = vadd.f32 %v1232, %v1233
      %v1235 = vsel %vm584, %v1203, 0.0
      %v1236 = vadd.f32 %v1234, %v1235
      %v1237 = vsel %vm584, %v1208, 0.0
      %v1238 = vadd.f32 %v1236, %v1237
      %v1239 = vsel %vm584, %v1211, 0.0
      %v1240 = vadd.f32 %v1238, %v1239
      %v1241 = vsel %vm584, %v1216, 0.0
      %v1242 = vadd.f32 %v1240, %v1241
      %v1243 = vsel %vm584, %v1219, 0.0
      %v1244 = vadd.f32 %v1242, %v1243
      %v1245 = vrot.slane %v1244, 4
      %v1246 = vadd.f32 %v1244, %v1245
      %v1247 = vrot.slane %v1246, 2
      %v1248 = vadd.f32 %v1246, %v1247
      %v1249 = vrot.slane %v1248, 1
      %v1250 = vadd.f32 %v1248, %v1249
      %vm1251 = vcmask 24576
      %1252 = vst.msk [vmem:[%s532] sm:$0x1] %vm1251, %v1250
      %v1253 = vmul.f32 %v1192, %v1192
      %v1254 = vmul.f32 %v1195, %v1195
      %v1255 = vmul.f32 %v1200, %v1200
      %v1256 = vmul.f32 %v1203, %v1203
      %v1257 = vmul.f32 %v1208, %v1208
      %v1258 = vmul.f32 %v1211, %v1211
      %v1259 = vmul.f32 %v1216, %v1216
      %v1260 = vmul.f32 %v1219, %v1219
      %v1261 = vsel %vm584, %v1253, 0.0
      %v1262 = vsel %vm584, %v1254, 0.0
      %v1263 = vadd.f32 %v1261, %v1262
      %v1264 = vsel %vm584, %v1255, 0.0
      %v1265 = vadd.f32 %v1263, %v1264
      %v1266 = vsel %vm584, %v1256, 0.0
      %v1267 = vadd.f32 %v1265, %v1266
      %v1268 = vsel %vm584, %v1257, 0.0
      %v1269 = vadd.f32 %v1267, %v1268
      %v1270 = vsel %vm584, %v1258, 0.0
      %v1271 = vadd.f32 %v1269, %v1270
      %v1272 = vsel %vm584, %v1259, 0.0
      %v1273 = vadd.f32 %v1271, %v1272
      %v1274 = vsel %vm584, %v1260, 0.0
      %v1275 = vadd.f32 %v1273, %v1274
      %v1276 = vrot.slane %v1275, 4
      %v1277 = vadd.f32 %v1275, %v1276
      %v1278 = vrot.slane %v1277, 2
      %v1279 = vadd.f32 %v1277, %v1278
      %v1280 = vrot.slane %v1279, 1
      %v1281 = vadd.f32 %v1279, %v1280
      %1282 = vst.msk [vmem:[%s532 + $0x1] sm:$0x1] %vm1251, %v1281
      %p1283 = scmp.lt.s32.totalorder %s28, 1
      %s1284 = scalar_select %p1283, %s28, 1
      %s1285 = smul.addr %s1284, 8
      %s1286 = smul.addr %s1285, 8
      %s1287 = scalar_lea.vmem %s15, %s1286
      %p1288 = scmp.lt.s32.totalorder %s28, 1
      %s1289 = scalar_select %p1288, %s28, 1
      %s1290 = smul.addr %s1289, 2
      %s1291 = scalar_lea.vmem %s16, %s1290
      // Predicated region
      $region81: #{mynet_forward.7} parent=79 // pred_check
        %p1292 = pneg %p366
      $region82: #{mynet_forward.7} parent=79 // pred_check_branch
        %1294 = sbr.rel (%p1292) target = $region84
      $region83: #{mynet_forward.7} parent=79 // pred_region
        _
      $region84: #{mynet_forward.7} parent=79 // pred_fallthru
        _
      // Predicated region
      $region85: #{mynet_forward.7} parent=79 // pred_check
        %p1295 = pneg %p392
      $region86: #{mynet_forward.7} parent=79 // pred_check_branch
        %1297 = sbr.rel (%p1295) target = $region88
      $region87: #{mynet_forward.7} parent=79 // pred_region
        _
      $region88: #{mynet_forward.7} parent=79 // pred_fallthru
        _
    $region80: #{mynet_forward.7} parent=5 // pred_fallthru
      _
    %p1298 = scmp.le.s32.totalorder 2, %s23
    // Predicated region
    $region89: #{mynet_forward.7} parent=5 // pred_check
      %p1299 = pneg %p1298
    $region90: #{mynet_forward.7} parent=5 // pred_check_branch
      %1301 = sbr.rel (%p1299) target = $region92
    $region91: #{mynet_forward.7} parent=5 // pred_region
      %s1302 = ssub.s32 %s23, 2
      // Predicated region
      $region93: #{mynet_forward.7} parent=91 // pred_check
        %p1303 = pneg %p372
      $region94: #{mynet_forward.7} parent=91 // pred_check_branch
        %1305 = sbr.rel (%p1303) target = $region96
      $region95: #{mynet_forward.7} parent=91 // pred_region
        %p1306 = scmp.lt.s32.totalorder %s29, 1
        %s1307 = scalar_select %p1306, %s29, 1
        %s1308 = smul.addr %s1307, 8
        %s1309 = smul.addr %s1308, 8
        %s1310 = scalar_lea.vmem %s15, %s1309
      $region96: #{mynet_forward.7} parent=91 // pred_fallthru
        _
      // Predicated region
      $region97: #{mynet_forward.7} parent=91 // pred_check
        %p1311 = pneg %p398
      $region98: #{mynet_forward.7} parent=91 // pred_check_branch
        %1313 = sbr.rel (%p1311) target = $region100
      $region99: #{mynet_forward.7} parent=91 // pred_region
        %p1314 = scmp.lt.s32.totalorder %s29, 1
        %s1315 = scalar_select %p1314, %s29, 1
        %s1316 = smul.addr %s1315, 2
        %s1317 = scalar_lea.vmem %s16, %s1316
      $region100: #{mynet_forward.7} parent=91 // pred_fallthru
        _
    $region92: #{mynet_forward.7} parent=5 // pred_fallthru
      _
  $region6: #{mynet_forward.7} parent=0 // loop_footer
    %s27 = sadd.s32 1, %s23
  $region7: #{mynet_forward.7} parent=0 // loop_footer_branch
    %22 = sbr.rel target = $region3
  $region8: #{mynet_forward.7} parent=0 // loop_exit
    _

</llo_original>
